<compile_context>
chip_gen: v7x
topology: tpu7x:2x2x1
jax: 0.10.0
libtpu: 0.0.40
codegen_flags: <defaults>
</compile_context>

<pallas_src>
import functools
import math

import jax
import jax.numpy as jnp
from jax.experimental import pallas as pl
from jax.experimental.pallas import tpu as pltpu


# ----------------------------- tiling helpers ---------------------------------

def _pick_sub_tile(n, target=256):
    """Tile for a second-to-last ('sublane') block dim: full dim, or a divisor multiple of 8."""
    if n <= target:
        return n
    for t in range(target, 7, -8):
        if n % t == 0:
            return t
    return n


def _pick_lane_tile(n, target=512):
    """Tile for a last ('lane') block dim: full dim, or a divisor multiple of 128."""
    if n <= target:
        return n
    for t in range(target, 127, -128):
        if n % t == 0:
            return t
    return n


# ----------------------------- in-kernel helpers -------------------------------

def _layer_norm_rows(x, g, b, eps):
    """LayerNorm over the last dim.  Matches torch module: unbiased std (ddof=1), eps added to std."""
    d = x.shape[-1]
    mu = jnp.mean(x, axis=-1, keepdims=True)
    xc = x - mu
    std = jnp.sqrt(jnp.sum(xc * xc, axis=-1, keepdims=True) * (1.0 / (d - 1)))
    inv = 1.0 / (std + eps)            # exact reciprocal on a (rows, 1) column vector (cheap)
    return g * (xc * inv) + b


# ------------------------------- kernels ---------------------------------------

def _ln_head_proj_kernel(x_ref, g_ref, b_ref, w_ref, bias_ref, o_ref, xn_ref,
                         *, apply_ln, eps):
    """(optional LayerNorm) + per-head-slab projection.  Grid = (row_tiles, n_slab)."""
    if apply_ln:
        @pl.when(pl.program_id(1) == 0)
        def _():
            xn_ref[...] = _layer_norm_rows(x_ref[...].astype(jnp.float32),
                                           g_ref[...], b_ref[...], eps)
        xin = xn_ref[...]
    else:
        xin = x_ref[...].astype(jnp.float32)

    o_ref[0] = (jnp.dot(xin, w_ref[0], preferred_element_type=jnp.float32)
                + bias_ref[0]).astype(o_ref.dtype)


def _flash_attention_kernel(q_ref, k_ref, v_ref, mask_ref, o_ref,
                            m_ref, l_ref, acc_ref):
    """Flash-style attention.  Grid = (B, H, q_tiles, k_tiles); k_tiles is the reduction axis."""
    ki = pl.program_id(3)

    @pl.when(ki == 0)
    def _():
        m_ref[...] = jnp.full(m_ref.shape, -jnp.inf, jnp.float32)
        l_ref[...] = jnp.zeros_like(l_ref)
        acc_ref[...] = jnp.zeros_like(acc_ref)

    q = q_ref[0, 0, 0].astype(jnp.float32)           # (tq, dk); 1/sqrt(dk) folded into Wq
    k = k_ref[0, 0, 0].astype(jnp.float32)           # (tk, dk)
    v = v_ref[0, 0, 0].astype(jnp.float32)           # (tk, dk)

    # scores = q @ k.T  (contract the dk lane dim of both operands)
    s = jax.lax.dot_general(q, k, (((1,), (1,)), ((), ())),
                            preferred_element_type=jnp.float32)   # (tq, tk)
    msk = mask_ref[0, 0]                              # (1, tk) or (tq, tk); broadcasts in-kernel
    s = jnp.where(msk == 0, -1e9, s)

    m_prev = m_ref[...]
    m_new = jnp.maximum(m_prev, jnp.max(s, axis=-1, keepdims=True))
    alpha = jnp.exp(m_prev - m_new)
    p = jnp.exp(s - m_new)
    l_ref[...] = alpha * l_ref[...] + jnp.sum(p, axis=-1, keepdims=True)
    acc_ref[...] = alpha * acc_ref[...] + jnp.dot(p, v, preferred_element_type=jnp.float32)
    m_ref[...] = m_new

    @pl.when(ki == pl.num_programs(3) - 1)
    def _():
        inv_l = 1.0 / l_ref[...]                      # exact; (tq, 1) column vector
        o_ref[0, 0] = (acc_ref[...] * inv_l).astype(o_ref.dtype)


def _head_merge_kernel(ctx_ref, w_ref, b_ref, r_ref, o_ref, acc_ref):
    """Output projection: sum over heads of ctx_h @ Wo_h, + bias + residual.
    Grid = (row_tiles, H); heads are the tiled reduction axis with an fp32 accumulator."""
    h = pl.program_id(1)

    @pl.when(h == 0)
    def _():
        acc_ref[...] = jnp.zeros_like(acc_ref)

    acc_ref[...] += jnp.dot(ctx_ref[0].astype(jnp.float32), w_ref[0],
                            preferred_element_type=jnp.float32)

    @pl.when(h == pl.num_programs(1) - 1)
    def _():
        o_ref[...] = (acc_ref[...] + b_ref[...]
                      + r_ref[...].astype(jnp.float32)).astype(o_ref.dtype)


def _ffn_kernel(x_ref, g_ref, b_ref, w1_ref, b1_ref, w2_ref, b2_ref, o_ref,
                xn_ref, acc_ref, *, eps):
    """Fused LN -> W1 -> ReLU -> W2 -> (+bias +residual).  Grid = (row_tiles, dff_tiles)."""
    j = pl.program_id(1)

    @pl.when(j == 0)
    def _():
        xn_ref[...] = _layer_norm_rows(x_ref[...].astype(jnp.float32),
                                       g_ref[...], b_ref[...], eps)
        acc_ref[...] = jnp.zeros_like(acc_ref)

    hid = jnp.dot(xn_ref[...], w1_ref[...], preferred_element_type=jnp.float32) + b1_ref[...]
    hid = jnp.maximum(hid, 0.0)
    acc_ref[...] += jnp.dot(hid, w2_ref[...], preferred_element_type=jnp.float32)

    @pl.when(j == pl.num_programs(1) - 1)
    def _():
        o_ref[...] = (acc_ref[...] + b2_ref[...]
                      + x_ref[...].astype(jnp.float32)).astype(o_ref.dtype)


def _layernorm_kernel(x_ref, g_ref, b_ref, o_ref, *, eps):
    o_ref[...] = _layer_norm_rows(x_ref[...].astype(jnp.float32),
                                  g_ref[...], b_ref[...], eps).astype(o_ref.dtype)


# ------------------------------- wrappers ---------------------------------------

def ln_head_proj(x2, g, b, w_heads, b_heads, apply_ln, eps=1e-6):
    """Optionally LayerNorm rows of x2 (R, D), then project onto per-head slabs.
    w_heads: (n_slab, D, dk); b_heads: (n_slab, 1, dk).  Returns (n_slab, R, dk)."""
    R, D = x2.shape
    n_slab, _, dk = w_heads.shape
    tr = _pick_sub_tile(R, 256)
    return pl.pallas_call(
        functools.partial(_ln_head_proj_kernel, apply_ln=apply_ln, eps=eps),
        out_shape=jax.ShapeDtypeStruct((n_slab, R, dk), x2.dtype),
        grid=(R // tr, n_slab),
        in_specs=[
            pl.BlockSpec((tr, D), lambda i, j: (i, 0)),        # x tile, resident across slabs
            pl.BlockSpec((1, D), lambda i, j: (0, 0)),
            pl.BlockSpec((1, D), lambda i, j: (0, 0)),
            pl.BlockSpec((1, D, dk), lambda i, j: (j, 0, 0)),  # streamed per-slab weight
            pl.BlockSpec((1, 1, dk), lambda i, j: (j, 0, 0)),
        ],
        out_specs=pl.BlockSpec((1, tr, dk), lambda i, j: (j, i, 0)),
        scratch_shapes=[pltpu.VMEM((tr, D), jnp.float32)],
        compiler_params=pltpu.CompilerParams(
            dimension_semantics=("parallel", "arbitrary")),
    )(x2, g, b, w_heads, b_heads)


def flash_attention(q_arr, q_sel, k_arr, k_sel, v_arr, v_sel, mask):
    """q_arr/k_arr/v_arr: (n_sel, H, B, S, dk) arrays; *_sel picks the leading index.
    mask: (B, 1, 1|Sq, Sk).  Returns ctx of shape (H, B, Sq, dk)."""
    _, H, B, Sq, dk = q_arr.shape
    Sk = k_arr.shape[3]
    tq = _pick_sub_tile(Sq, 128)
    tk = _pick_lane_tile(Sk, 256)
    nq, nk = Sq // tq, Sk // tk
    mq = mask.shape[2]

    def qkv_spec(sel, tile, is_q):
        def imap(b, h, qi, ki):
            return (sel, h, b, qi if is_q else ki, 0)
        return pl.BlockSpec((1, 1, 1, tile, dk), imap)

    if mq == 1:
        mask_spec = pl.BlockSpec((1, 1, 1, tk), lambda b, h, qi, ki: (b, 0, 0, ki))
    else:
        mask_spec = pl.BlockSpec((1, 1, tq, tk), lambda b, h, qi, ki: (b, 0, qi, ki))

    return pl.pallas_call(
        _flash_attention_kernel,
        out_shape=jax.ShapeDtypeStruct((H, B, Sq, dk), q_arr.dtype),
        grid=(B, H, nq, nk),
        in_specs=[qkv_spec(q_sel, tq, True),
                  qkv_spec(k_sel, tk, False),
                  qkv_spec(v_sel, tk, False),
                  mask_spec],
        out_specs=pl.BlockSpec((1, 1, tq, dk), lambda b, h, qi, ki: (h, b, qi, 0)),
        scratch_shapes=[pltpu.VMEM((tq, 1), jnp.float32),   # running max
                        pltpu.VMEM((tq, 1), jnp.float32),   # running denom
                        pltpu.VMEM((tq, dk), jnp.float32)], # fp32 accumulator
        compiler_params=pltpu.CompilerParams(
            dimension_semantics=("parallel", "parallel", "parallel", "arbitrary")),
    )(q_arr, k_arr, v_arr, mask)


def head_merge_proj(ctx, w_o_heads, b_o, resid):
    """ctx: (H, R, dk); w_o_heads: (H, dk, D).  Returns (R, D) = sum_h ctx_h @ Wo_h + bo + resid."""
    H, R, dk = ctx.shape
    D = w_o_heads.shape[2]
    tr = _pick_sub_tile(R, 256)
    return pl.pallas_call(
        _head_merge_kernel,
        out_shape=jax.ShapeDtypeStruct((R, D), resid.dtype),
        grid=(R // tr, H),
        in_specs=[
            pl.BlockSpec((1, tr, dk), lambda i, h: (h, i, 0)),
            pl.BlockSpec((1, dk, D), lambda i, h: (h, 0, 0)),
            pl.BlockSpec((1, D), lambda i, h: (0, 0)),
            pl.BlockSpec((tr, D), lambda i, h: (i, 0)),
        ],
        out_specs=pl.BlockSpec((tr, D), lambda i, h: (i, 0)),
        scratch_shapes=[pltpu.VMEM((tr, D), jnp.float32)],
        compiler_params=pltpu.CompilerParams(
            dimension_semantics=("parallel", "arbitrary")),
    )(ctx, w_o_heads, b_o, resid)


def ffn_sublayer(x2, g, b, w1, b1, w2, b2, eps=1e-6):
    """x2: (R, D).  Returns x2 + W2 @ relu(W1 @ LN(x2) + b1) + b2, tiled over d_ff."""
    R, D = x2.shape
    DFF = w1.shape[1]
    tr = _pick_sub_tile(R, 256)
    tf = _pick_lane_tile(DFF, 512)
    return pl.pallas_call(
        functools.partial(_ffn_kernel, eps=eps),
        out_shape=jax.ShapeDtypeStruct((R, D), x2.dtype),
        grid=(R // tr, DFF // tf),
        in_specs=[
            pl.BlockSpec((tr, D), lambda i, j: (i, 0)),     # x (LN input + residual), resident
            pl.BlockSpec((1, D), lambda i, j: (0, 0)),
            pl.BlockSpec((1, D), lambda i, j: (0, 0)),
            pl.BlockSpec((D, tf), lambda i, j: (0, j)),     # W1 column tile
            pl.BlockSpec((1, tf), lambda i, j: (0, j)),
            pl.BlockSpec((tf, D), lambda i, j: (j, 0)),     # W2 row tile
            pl.BlockSpec((1, D), lambda i, j: (0, 0)),
        ],
        out_specs=pl.BlockSpec((tr, D), lambda i, j: (i, 0)),
        scratch_shapes=[pltpu.VMEM((tr, D), jnp.float32),   # LN(x) tile
                        pltpu.VMEM((tr, D), jnp.float32)],  # fp32 accumulator
        compiler_params=pltpu.CompilerParams(
            dimension_semantics=("parallel", "arbitrary")),
    )(x2, g, b, w1, b1, w2, b2)


def layernorm_rows(x2, g, b, eps=1e-6):
    R, D = x2.shape
    tr = _pick_sub_tile(R, 256)
    return pl.pallas_call(
        functools.partial(_layernorm_kernel, eps=eps),
        out_shape=jax.ShapeDtypeStruct((R, D), x2.dtype),
        grid=(R // tr,),
        in_specs=[pl.BlockSpec((tr, D), lambda i: (i, 0)),
                  pl.BlockSpec((1, D), lambda i: (0, 0)),
                  pl.BlockSpec((1, D), lambda i: (0, 0))],
        out_specs=pl.BlockSpec((tr, D), lambda i: (i, 0)),
        compiler_params=pltpu.CompilerParams(dimension_semantics=("parallel",)),
    )(x2, g, b)


# --------------------------- decoder forward ------------------------------------

def decoder_forward(params, x, memory, src_mask, tgt_mask, num_heads):
    B, S, D = x.shape
    Sm = memory.shape[1]
    H = num_heads
    dk = D // H
    x2 = x.reshape(B * S, D)
    m2 = memory.reshape(B * Sm, D)

    for lp in params['layers']:
        # --- sublayer 0: masked self-attention (pre-LN fused into the QKV projection) ---
        qkv = ln_head_proj(x2, lp['ln0_g'], lp['ln0_b'], lp['w_qkv'], lp['b_qkv'], apply_ln=True)
        qkv5 = qkv.reshape(3, H, B, S, dk)                   # free reshape (contiguous splits)
        ctx = flash_attention(qkv5, 0, qkv5, 1, qkv5, 2, tgt_mask)
        x2 = head_merge_proj(ctx.reshape(H, B * S, dk), lp['w_o'], lp['b_o'], x2)

        # --- sublayer 1: attention over memory.  Mirrors the reference forward, which
        #     reuses self_attn here (src_attn is constructed but unused). ---
        q = ln_head_proj(x2, lp['ln1_g'], lp['ln1_b'], lp['w_q'], lp['b_q'], apply_ln=True)
        kv = ln_head_proj(m2, lp['ln1_g'], lp['ln1_b'], lp['w_kv'], lp['b_kv'], apply_ln=False)
        ctx = flash_attention(q.reshape(1, H, B, S, dk), 0,
                              kv.reshape(2, H, B, Sm, dk), 0,
                              kv.reshape(2, H, B, Sm, dk), 1,
                              src_mask)
        x2 = head_merge_proj(ctx.reshape(H, B * S, dk), lp['w_o'], lp['b_o'], x2)

        # --- sublayer 2: fused LN -> W1 -> ReLU -> W2 -> +residual, tiled over d_ff ---
        x2 = ffn_sublayer(x2, lp['ln2_g'], lp['ln2_b'],
                          lp['w1'], lp['b1'], lp['w2'], lp['b2'])

    out = layernorm_rows(x2, params['norm_g'], params['norm_b'])
    return out.reshape(B, S, D)


# --------------------------- parameter construction ------------------------------

def init_raw_params(key, d_model, d_ff, n_layers):
    keys = iter(jax.random.split(key, 64))

    def nxt():
        return next(keys)

    def w(shape, s=0.02):
        return (s * jax.random.normal(nxt(), shape)).astype(jnp.float32)

    def ln():
        return dict(g=(1.0 + 0.05 * jax.random.normal(nxt(), (d_model,))).astype(jnp.float32),
                    b=(0.05 * jax.random.normal(nxt(), (d_model,))).astype(jnp.float32))

    def attn():
        return dict(wq=w((d_model, d_model)), bq=w((d_model,)),
                    wk=w((d_model, d_model)), bk=w((d_model,)),
                    wv=w((d_model, d_model)), bv=w((d_model,)),
                    wo=w((d_model, d_model)), bo=w((d_model,)))

    layers = []
    for _ in range(n_layers):
        layers.append(dict(
            self_attn=attn(),
            src_attn=attn(),   # constructed (as in the torch module) but unused by the mirrored forward
            ff=dict(w1=w((d_model, d_ff)), b1=w((d_ff,)),
                    w2=w((d_ff, d_model)), b2=w((d_model,))),
            ln=[ln() for _ in range(3)],
        ))
    return dict(layers=layers, norm=ln())


def prepare_params(raw, num_heads):
    """Reorganize raw torch-style weights into the kernel layouts (done once, tiny tensors)."""
    H = num_heads
    out_layers = []
    for lp in raw['layers']:
        sa = lp['self_attn']
        D = sa['wq'].shape[0]
        dk = D // H
        scale = 1.0 / math.sqrt(dk)

        def to_heads(w):                                  # (D, D) -> (H, D, dk)
            return w.reshape(D, H, dk).transpose(1, 0, 2)

        w_qkv = jnp.concatenate([to_heads(sa['wq'] * scale),   # fold 1/sqrt(dk) into Wq
                                 to_heads(sa['wk']),
                                 to_heads(sa['wv'])], axis=0)                 # (3H, D, dk)
        b_qkv = jnp.concatenate([(sa['bq'] * scale).reshape(H, 1, dk),
                                 sa['bk'].reshape(H, 1, dk),
                                 sa['bv'].reshape(H, 1, dk)], axis=0)         # (3H, 1, dk)

        out_layers.append(dict(
            w_qkv=w_qkv, b_qkv=b_qkv,
            w_q=w_qkv[:H], b_q=b_qkv[:H],        # cross-attention query projection
            w_kv=w_qkv[H:], b_kv=b_qkv[H:],      # cross-attention key/value projection
            w_o=sa['wo'].reshape(H, dk, D), b_o=sa['bo'].reshape(1, D),
            w1=lp['ff']['w1'], b1=lp['ff']['b1'].reshape(1, -1),
            w2=lp['ff']['w2'], b2=lp['ff']['b2'].reshape(1, -1),
            ln0_g=lp['ln'][0]['g'].reshape(1, -1), ln0_b=lp['ln'][0]['b'].reshape(1, -1),
            ln1_g=lp['ln'][1]['g'].reshape(1, -1), ln1_b=lp['ln'][1]['b'].reshape(1, -1),
            ln2_g=lp['ln'][2]['g'].reshape(1, -1), ln2_b=lp['ln'][2]['b'].reshape(1, -1),
        ))
    return dict(layers=out_layers,
                norm_g=raw['norm']['g'].reshape(1, -1),
                norm_b=raw['norm']['b'].reshape(1, -1))


# ------------------------------ pure-JAX reference --------------------------------

def _ref_layernorm(x, g, b, eps=1e-6):
    mean = jnp.mean(x, -1, keepdims=True)
    std = jnp.std(x, -1, keepdims=True, ddof=1)
    return g * (x - mean) / (std + eps) + b


def _ref_mha(query, key, value, mask, p, h):
    B, Sq, D = query.shape
    dk = D // h

    def proj(x, w, b):
        return (x @ w + b).reshape(B, -1, h, dk).transpose(0, 2, 1, 3)

    q = proj(query, p['wq'], p['bq'])
    k = proj(key, p['wk'], p['bk'])
    v = proj(value, p['wv'], p['bv'])
    s = jnp.einsum('bhqd,bhkd->bhqk', q, k) / math.sqrt(dk)
    s = jnp.where(mask == 0, -1e9, s)
    a = jax.nn.softmax(s, axis=-1)
    ctx = jnp.einsum('bhqk,bhkd->bhqd', a, v).transpose(0, 2, 1, 3).reshape(B, Sq, D)
    return ctx @ p['wo'] + p['bo']


def _ref_forward(raw, x, memory, src_mask, tgt_mask, h):
    for lp in raw['layers']:
        nx = _ref_layernorm(x, lp['ln'][0]['g'], lp['ln'][0]['b'])
        x = x + _ref_mha(nx, nx, nx, tgt_mask, lp['self_attn'], h)
        nx = _ref_layernorm(x, lp['ln'][1]['g'], lp['ln'][1]['b'])
        x = x + _ref_mha(nx, memory, memory, src_mask, lp['self_attn'], h)  # reference reuses self_attn
        nx = _ref_layernorm(x, lp['ln'][2]['g'], lp['ln'][2]['b'])
        x = x + jnp.maximum(nx @ lp['ff']['w1'] + lp['ff']['b1'], 0.0) @ lp['ff']['w2'] + lp['ff']['b2']
    return _ref_layernorm(x, raw['norm']['g'], raw['norm']['b'])


# ------------------------------------ main -----------------------------------------

if __name__ == "__main__":
    B, S, D, H, DFF, NLAYERS = 2, 8, 32, 4, 64, 2
    assert D % H == 0

    key = jax.random.PRNGKey(0)
    kp, kx, km = jax.random.split(key, 3)

    raw = init_raw_params(kp, D, DFF, NLAYERS)
    params = prepare_params(raw, H)

    x = jax.random.normal(kx, (B, S, D), dtype=jnp.float32)
    memory = jax.random.normal(km, (B, S, D), dtype=jnp.float32)
    tgt_mask = jnp.broadcast_to(jnp.tril(jnp.ones((S, S), jnp.float32))[None, None],
                                (B, 1, S, S))
    src_mask = jnp.ones((B, 1, 1, S), jnp.float32)

    fwd = jax.jit(functools.partial(decoder_forward, num_heads=H))
    out = jax.block_until_ready(fwd(params, x, memory, src_mask, tgt_mask))

    ref = _ref_forward(raw, x, memory, src_mask, tgt_mask, H)
    assert out.shape == (B, S, D)
    max_err = float(jnp.max(jnp.abs(out - ref)))
    # fp32 everywhere with exact reciprocals; error is ~1e-5 level.
    assert jnp.allclose(out, ref, atol=2e-3, rtol=2e-3), max_err

    print("KERNEL_OK")
</pallas_src>

<mosaic_0001>
module attributes {stable_mosaic.version = 11 : i64} {
  func.func @_ln_head_proj_kernel(%arg0: i32, %arg1: i32, %arg2: memref<16x32xf32, #tpu.memory_space<vmem>>, %arg3: memref<1x32xf32, #tpu.memory_space<vmem>>, %arg4: memref<1x32xf32, #tpu.memory_space<vmem>>, %arg5: memref<1x32x8xf32, #tpu.memory_space<vmem>>, %arg6: memref<1x1x8xf32, #tpu.memory_space<vmem>>, %arg7: memref<1x16x8xf32, #tpu.memory_space<vmem>>, %arg8: memref<16x32xf32, #tpu.memory_space<vmem>>) attributes {dimension_semantics = [#tpu.dimension_semantics<parallel>, #tpu.dimension_semantics<arbitrary>], iteration_bounds = array<i64: 1, 12>, scalar_prefetch = 0 : i64, scratch_operands = 1 : i64, tpu.core_type = #tpu.core_type<tc>, window_params = [{transform_indices = @transform_0, window_bounds = array<i64: 16, 32>}, {pipeline_mode = #tpu.pipeline_mode<synchronous>, transform_indices = @transform_1, window_bounds = array<i64: 1, 32>}, {pipeline_mode = #tpu.pipeline_mode<synchronous>, transform_indices = @transform_2, window_bounds = array<i64: 1, 32>}, {transform_indices = @transform_3, window_bounds = array<i64: 1, 32, 8>}, {transform_indices = @transform_4, window_bounds = array<i64: 1, 1, 8>}, {transform_indices = @transform_5, window_bounds = array<i64: 1, 16, 8>}]} {
    %c0_i32 = arith.constant 0 : i32
    %0 = arith.cmpi eq, %arg1, %c0_i32 : i32
    %1 = arith.extui %0 : i1 to i32
    %c0_i32_0 = arith.constant 0 : i32
    %2 = arith.cmpi ne, %1, %c0_i32_0 : i32
    scf.if %2 {
      %c0_11 = arith.constant 0 : index
      %c0_12 = arith.constant 0 : index
      %14 = vector.load %arg2[%c0_11, %c0_12] : memref<16x32xf32, #tpu.memory_space<vmem>>, vector<16x32xf32>
      %c0_13 = arith.constant 0 : index
      %c0_14 = arith.constant 0 : index
      %15 = vector.load %arg3[%c0_13, %c0_14] : memref<1x32xf32, #tpu.memory_space<vmem>>, vector<1x32xf32>
      %c0_15 = arith.constant 0 : index
      %c0_16 = arith.constant 0 : index
      %16 = vector.load %arg4[%c0_15, %c0_16] : memref<1x32xf32, #tpu.memory_space<vmem>>, vector<1x32xf32>
      %cst_17 = arith.constant dense<0.000000e+00> : vector<16xf32>
      %17 = vector.multi_reduction <add>, %14, %cst_17 [1] : vector<16x32xf32> to vector<16xf32>
      %18 = vector.shape_cast %17 : vector<16xf32> to vector<16x1xf32>
      %cst_18 = arith.constant 3.200000e+01 : f32
      %19 = vector.broadcast %cst_18 : f32 to vector<16x1xf32>
      %20 = arith.divf %18, %19 : vector<16x1xf32>
      %21 = vector.broadcast %20 : vector<16x1xf32> to vector<16x32xf32>
      %22 = arith.subf %14, %21 : vector<16x32xf32>
      %23 = arith.mulf %22, %22 : vector<16x32xf32>
      %cst_19 = arith.constant dense<0.000000e+00> : vector<16xf32>
      %24 = vector.multi_reduction <add>, %23, %cst_19 [1] : vector<16x32xf32> to vector<16xf32>
      %25 = vector.shape_cast %24 : vector<16xf32> to vector<16x1xf32>
      %cst_20 = arith.constant 0.0322580636 : f32
      %26 = vector.broadcast %cst_20 : f32 to vector<16x1xf32>
      %27 = arith.mulf %25, %26 : vector<16x1xf32>
      %28 = math.sqrt %27 : vector<16x1xf32>
      %cst_21 = arith.constant 9.99999997E-7 : f32
      %29 = vector.broadcast %cst_21 : f32 to vector<16x1xf32>
      %30 = arith.addf %28, %29 : vector<16x1xf32>
      %cst_22 = arith.constant 1.000000e+00 : f32
      %31 = vector.broadcast %cst_22 : f32 to vector<16x1xf32>
      %32 = arith.divf %31, %30 : vector<16x1xf32>
      %33 = vector.broadcast %32 : vector<16x1xf32> to vector<16x32xf32>
      %34 = arith.mulf %22, %33 : vector<16x32xf32>
      %35 = vector.broadcast %15 : vector<1x32xf32> to vector<16x32xf32>
      %36 = arith.mulf %35, %34 : vector<16x32xf32>
      %37 = vector.broadcast %16 : vector<1x32xf32> to vector<16x32xf32>
      %38 = arith.addf %36, %37 : vector<16x32xf32>
      %c0_23 = arith.constant 0 : index
      %c0_24 = arith.constant 0 : index
      %39 = vector.load %arg8[%c0_23, %c0_24] : memref<16x32xf32, #tpu.memory_space<vmem>>, vector<16x32xf32>
      tpu.vector_store %arg8[%c0_23, %c0_24], %38 {strides = array<i32>} : memref<16x32xf32, #tpu.memory_space<vmem>>, vector<16x32xf32>,
    } else {
    }
    %c0 = arith.constant 0 : index
    %c0_1 = arith.constant 0 : index
    %3 = vector.load %arg8[%c0, %c0_1] : memref<16x32xf32, #tpu.memory_space<vmem>>, vector<16x32xf32>
    %c0_2 = arith.constant 0 : index
    %c0_3 = arith.constant 0 : index
    %c0_4 = arith.constant 0 : index
    %4 = vector.load %arg5[%c0_2, %c0_3, %c0_4] : memref<1x32x8xf32, #tpu.memory_space<vmem>>, vector<1x32x8xf32>
    %5 = vector.shape_cast %4 : vector<1x32x8xf32> to vector<32x8xf32>
    %cst = arith.constant dense<0.000000e+00> : vector<16x8xf32>
    %6 = tpu.matmul %3, %5, %cst {dimension_numbers = #tpu.dot_dimension_numbers<[1], [0], [0], [1], [0, 0, 1, 1], [], []>} : vector<16x32xf32>, vector<32x8xf32>, vector<16x8xf32> -> vector<16x8xf32>
    %c0_5 = arith.constant 0 : index
    %c0_6 = arith.constant 0 : index
    %c0_7 = arith.constant 0 : index
    %7 = vector.load %arg6[%c0_5, %c0_6, %c0_7] : memref<1x1x8xf32, #tpu.memory_space<vmem>>, vector<1x1x8xf32>
    %8 = vector.shape_cast %7 : vector<1x1x8xf32> to vector<1x8xf32>
    %9 = vector.broadcast %8 : vector<1x8xf32> to vector<16x8xf32>
    %10 = arith.addf %6, %9 : vector<16x8xf32>
    %c0_8 = arith.constant 0 : index
    %c0_9 = arith.constant 0 : index
    %c0_10 = arith.constant 0 : index
    %11 = vector.load %arg7[%c0_8, %c0_9, %c0_10] : memref<1x16x8xf32, #tpu.memory_space<vmem>>, vector<1x16x8xf32>
    %12 = vector.shape_cast %11 : vector<1x16x8xf32> to vector<16x8xf32>
    %13 = vector.shape_cast %10 : vector<16x8xf32> to vector<1x16x8xf32>
    tpu.vector_store %arg7[%c0_8, %c0_9, %c0_10], %13 {strides = array<i32>} : memref<1x16x8xf32, #tpu.memory_space<vmem>>, vector<1x16x8xf32>,
    return
  }
  func.func @transform_0(%arg0: i32, %arg1: i32) -> (i32, i32) {
    %c0_i32 = arith.constant 0 : i32
    %c0_i32_0 = arith.constant 0 : i32
    return %arg0, %c0_i32 : i32, i32
  }
  func.func @transform_1(%arg0: i32, %arg1: i32) -> (i32, i32) {
    %c0_i32 = arith.constant 0 : i32
    %c0_i32_0 = arith.constant 0 : i32
    %c0_i32_1 = arith.constant 0 : i32
    return %c0_i32, %c0_i32_0 : i32, i32
  }
  func.func @transform_2(%arg0: i32, %arg1: i32) -> (i32, i32) {
    %c0_i32 = arith.constant 0 : i32
    %c0_i32_0 = arith.constant 0 : i32
    %c0_i32_1 = arith.constant 0 : i32
    return %c0_i32, %c0_i32_0 : i32, i32
  }
  func.func @transform_3(%arg0: i32, %arg1: i32) -> (i32, i32, i32) {
    %c0_i32 = arith.constant 0 : i32
    %c0_i32_0 = arith.constant 0 : i32
    %c0_i32_1 = arith.constant 0 : i32
    return %arg1, %c0_i32, %c0_i32_0 : i32, i32, i32
  }
  func.func @transform_4(%arg0: i32, %arg1: i32) -> (i32, i32, i32) {
    %c0_i32 = arith.constant 0 : i32
    %c0_i32_0 = arith.constant 0 : i32
    %c0_i32_1 = arith.constant 0 : i32
    return %arg1, %c0_i32, %c0_i32_0 : i32, i32, i32
  }
  func.func @transform_5(%arg0: i32, %arg1: i32) -> (i32, i32, i32) {
    %c0_i32 = arith.constant 0 : i32
    %c0_i32_0 = arith.constant 0 : i32
    return %arg1, %arg0, %c0_i32 : i32, i32, i32
  }
}

module attributes {stable_mosaic.version = 11 : i64} {
  func.func @_flash_attention_kernel(%arg0: i32, %arg1: i32, %arg2: i32, %arg3: i32, %arg4: memref<1x1x1x8x8xf32, #tpu.memory_space<vmem>>, %arg5: memref<1x1x1x8x8xf32, #tpu.memory_space<vmem>>, %arg6: memref<1x1x1x8x8xf32, #tpu.memory_space<vmem>>, %arg7: memref<1x1x8x8xf32, #tpu.memory_space<vmem>>, %arg8: memref<1x1x8x8xf32, #tpu.memory_space<vmem>>, %arg9: memref<8x1xf32, #tpu.memory_space<vmem>>, %arg10: memref<8x1xf32, #tpu.memory_space<vmem>>, %arg11: memref<8x8xf32, #tpu.memory_space<vmem>>) attributes {dimension_semantics = [#tpu.dimension_semantics<parallel>, #tpu.dimension_semantics<parallel>, #tpu.dimension_semantics<parallel>, #tpu.dimension_semantics<arbitrary>], iteration_bounds = array<i64: 2, 4, 1, 1>, scalar_prefetch = 0 : i64, scratch_operands = 3 : i64, tpu.core_type = #tpu.core_type<tc>, window_params = [{transform_indices = @transform_0, window_bounds = array<i64: 1, 1, 1, 8, 8>}, {transform_indices = @transform_1, window_bounds = array<i64: 1, 1, 1, 8, 8>}, {transform_indices = @transform_2, window_bounds = array<i64: 1, 1, 1, 8, 8>}, {transform_indices = @transform_3, window_bounds = array<i64: 1, 1, 8, 8>}, {transform_indices = @transform_4, window_bounds = array<i64: 1, 1, 8, 8>}]} {
    %c0_i32 = arith.constant 0 : i32
    %0 = arith.cmpi eq, %arg3, %c0_i32 : i32
    %1 = arith.extui %0 : i1 to i32
    %c0_i32_0 = arith.constant 0 : i32
    %2 = arith.cmpi ne, %1, %c0_i32_0 : i32
    scf.if %2 {
      %cst_38 = arith.constant 0xFF800000 : f32
      %41 = vector.broadcast %cst_38 : f32 to vector<8x1xf32>
      %c0_39 = arith.constant 0 : index
      %c0_40 = arith.constant 0 : index
      %42 = vector.load %arg9[%c0_39, %c0_40] : memref<8x1xf32, #tpu.memory_space<vmem>>, vector<8x1xf32>
      tpu.vector_store %arg9[%c0_39, %c0_40], %41 {strides = array<i32>} : memref<8x1xf32, #tpu.memory_space<vmem>>, vector<8x1xf32>,
      %cst_41 = arith.constant 0.000000e+00 : f32
      %43 = vector.broadcast %cst_41 : f32 to vector<8x1xf32>
      %c0_42 = arith.constant 0 : index
      %c0_43 = arith.constant 0 : index
      %44 = vector.load %arg10[%c0_42, %c0_43] : memref<8x1xf32, #tpu.memory_space<vmem>>, vector<8x1xf32>
      tpu.vector_store %arg10[%c0_42, %c0_43], %43 {strides = array<i32>} : memref<8x1xf32, #tpu.memory_space<vmem>>, vector<8x1xf32>,
      %cst_44 = arith.constant 0.000000e+00 : f32
      %45 = vector.broadcast %cst_44 : f32 to vector<8x8xf32>
      %c0_45 = arith.constant 0 : index
      %c0_46 = arith.constant 0 : index
      %46 = vector.load %arg11[%c0_45, %c0_46] : memref<8x8xf32, #tpu.memory_space<vmem>>, vector<8x8xf32>
      tpu.vector_store %arg11[%c0_45, %c0_46], %45 {strides = array<i32>} : memref<8x8xf32, #tpu.memory_space<vmem>>, vector<8x8xf32>,
    } else {
    }
    %c0 = arith.constant 0 : index
    %c0_1 = arith.constant 0 : index
    %c0_2 = arith.constant 0 : index
    %c0_3 = arith.constant 0 : index
    %c0_4 = arith.constant 0 : index
    %3 = vector.load %arg4[%c0, %c0_1, %c0_2, %c0_3, %c0_4] : memref<1x1x1x8x8xf32, #tpu.memory_space<vmem>>, vector<1x1x1x8x8xf32>
    %4 = vector.shape_cast %3 : vector<1x1x1x8x8xf32> to vector<8x8xf32>
    %c0_5 = arith.constant 0 : index
    %c0_6 = arith.constant 0 : index
    %c0_7 = arith.constant 0 : index
    %c0_8 = arith.constant 0 : index
    %c0_9 = arith.constant 0 : index
    %5 = vector.load %arg5[%c0_5, %c0_6, %c0_7, %c0_8, %c0_9] : memref<1x1x1x8x8xf32, #tpu.memory_space<vmem>>, vector<1x1x1x8x8xf32>
    %6 = vector.shape_cast %5 : vector<1x1x1x8x8xf32> to vector<8x8xf32>
    %c0_10 = arith.constant 0 : index
    %c0_11 = arith.constant 0 : index
    %c0_12 = arith.constant 0 : index
    %c0_13 = arith.constant 0 : index
    %c0_14 = arith.constant 0 : index
    %7 = vector.load %arg6[%c0_10, %c0_11, %c0_12, %c0_13, %c0_14] : memref<1x1x1x8x8xf32, #tpu.memory_space<vmem>>, vector<1x1x1x8x8xf32>
    %8 = vector.shape_cast %7 : vector<1x1x1x8x8xf32> to vector<8x8xf32>
    %cst = arith.constant dense<0.000000e+00> : vector<8x8xf32>
    %9 = tpu.matmul %4, %6, %cst {dimension_numbers = #tpu.dot_dimension_numbers<[1], [1], [0], [0], [0, 0, 1, 0], [], []>} : vector<8x8xf32>, vector<8x8xf32>, vector<8x8xf32> -> vector<8x8xf32>
    %c0_15 = arith.constant 0 : index
    %c0_16 = arith.constant 0 : index
    %c0_17 = arith.constant 0 : index
    %c0_18 = arith.constant 0 : index
    %10 = vector.load %arg7[%c0_15, %c0_16, %c0_17, %c0_18] : memref<1x1x8x8xf32, #tpu.memory_space<vmem>>, vector<1x1x8x8xf32>
    %11 = vector.shape_cast %10 : vector<1x1x8x8xf32> to vector<8x8xf32>
    %cst_19 = arith.constant 0.000000e+00 : f32
    %12 = vector.broadcast %cst_19 : f32 to vector<8x8xf32>
    %13 = arith.cmpf oeq, %11, %12 : vector<8x8xf32>
    %cst_20 = arith.constant -1.000000e+09 : f32
    %14 = vector.broadcast %cst_20 : f32 to vector<8x8xf32>
    %15 = arith.select %13, %14, %9 : vector<8x8xi1>, vector<8x8xf32>
    %c0_21 = arith.constant 0 : index
    %c0_22 = arith.constant 0 : index
    %16 = vector.load %arg9[%c0_21, %c0_22] : memref<8x1xf32, #tpu.memory_space<vmem>>, vector<8x1xf32>
    %cst_23 = arith.constant dense<0xFF800000> : vector<8xf32>
    %17 = vector.multi_reduction <maximumf>, %15, %cst_23 [1] : vector<8x8xf32> to vector<8xf32>
    %18 = vector.shape_cast %17 : vector<8xf32> to vector<8x1xf32>
    %19 = arith.maximumf %16, %18 : vector<8x1xf32>
    %20 = arith.subf %16, %19 : vector<8x1xf32>
    %21 = math.exp %20 : vector<8x1xf32>
    %22 = vector.broadcast %19 : vector<8x1xf32> to vector<8x8xf32>
    %23 = arith.subf %15, %22 : vector<8x8xf32>
    %24 = math.exp %23 : vector<8x8xf32>
    %c0_24 = arith.constant 0 : index
    %c0_25 = arith.constant 0 : index
    %25 = vector.load %arg10[%c0_24, %c0_25] : memref<8x1xf32, #tpu.memory_space<vmem>>, vector<8x1xf32>
    %26 = arith.mulf %21, %25 : vector<8x1xf32>
    %cst_26 = arith.constant dense<0.000000e+00> : vector<8xf32>
    %27 = vector.multi_reduction <add>, %24, %cst_26 [1] : vector<8x8xf32> to vector<8xf32>
    %28 = vector.shape_cast %27 : vector<8xf32> to vector<8x1xf32>
    %29 = arith.addf %26, %28 : vector<8x1xf32>
    %c0_27 = arith.constant 0 : index
    %c0_28 = arith.constant 0 : index
    %30 = vector.load %arg10[%c0_27, %c0_28] : memref<8x1xf32, #tpu.memory_space<vmem>>, vector<8x1xf32>
    tpu.vector_store %arg10[%c0_27, %c0_28], %29 {strides = array<i32>} : memref<8x1xf32, #tpu.memory_space<vmem>>, vector<8x1xf32>,
    %c0_29 = arith.constant 0 : index
    %c0_30 = arith.constant 0 : index
    %31 = vector.load %arg11[%c0_29, %c0_30] : memref<8x8xf32, #tpu.memory_space<vmem>>, vector<8x8xf32>
    %32 = vector.broadcast %21 : vector<8x1xf32> to vector<8x8xf32>
    %33 = arith.mulf %32, %31 : vector<8x8xf32>
    %cst_31 = arith.constant dense<0.000000e+00> : vector<8x8xf32>
    %34 = tpu.matmul %24, %8, %cst_31 {dimension_numbers = #tpu.dot_dimension_numbers<[1], [0], [0], [1], [0, 0, 1, 1], [], []>} : vector<8x8xf32>, vector<8x8xf32>, vector<8x8xf32> -> vector<8x8xf32>
    %35 = arith.addf %33, %34 : vector<8x8xf32>
    %c0_32 = arith.constant 0 : index
    %c0_33 = arith.constant 0 : index
    %36 = vector.load %arg11[%c0_32, %c0_33] : memref<8x8xf32, #tpu.memory_space<vmem>>, vector<8x8xf32>
    tpu.vector_store %arg11[%c0_32, %c0_33], %35 {strides = array<i32>} : memref<8x8xf32, #tpu.memory_space<vmem>>, vector<8x8xf32>,
    %c0_34 = arith.constant 0 : index
    %c0_35 = arith.constant 0 : index
    %37 = vector.load %arg9[%c0_34, %c0_35] : memref<8x1xf32, #tpu.memory_space<vmem>>, vector<8x1xf32>
    tpu.vector_store %arg9[%c0_34, %c0_35], %19 {strides = array<i32>} : memref<8x1xf32, #tpu.memory_space<vmem>>, vector<8x1xf32>,
    %c0_i32_36 = arith.constant 0 : i32
    %38 = arith.cmpi eq, %arg3, %c0_i32_36 : i32
    %39 = arith.extui %38 : i1 to i32
    %c0_i32_37 = arith.constant 0 : i32
    %40 = arith.cmpi ne, %39, %c0_i32_37 : i32
    scf.if %40 {
      %c0_38 = arith.constant 0 : index
      %c0_39 = arith.constant 0 : index
      %41 = vector.load %arg10[%c0_38, %c0_39] : memref<8x1xf32, #tpu.memory_space<vmem>>, vector<8x1xf32>
      %cst_40 = arith.constant 1.000000e+00 : f32
      %42 = vector.broadcast %cst_40 : f32 to vector<8x1xf32>
      %43 = arith.divf %42, %41 : vector<8x1xf32>
      %c0_41 = arith.constant 0 : index
      %c0_42 = arith.constant 0 : index
      %44 = vector.load %arg11[%c0_41, %c0_42] : memref<8x8xf32, #tpu.memory_space<vmem>>, vector<8x8xf32>
      %45 = vector.broadcast %43 : vector<8x1xf32> to vector<8x8xf32>
      %46 = arith.mulf %44, %45 : vector<8x8xf32>
      %c0_43 = arith.constant 0 : index
      %c0_44 = arith.constant 0 : index
      %c0_45 = arith.constant 0 : index
      %c0_46 = arith.constant 0 : index
      %47 = vector.load %arg8[%c0_43, %c0_44, %c0_45, %c0_46] : memref<1x1x8x8xf32, #tpu.memory_space<vmem>>, vector<1x1x8x8xf32>
      %48 = vector.shape_cast %47 : vector<1x1x8x8xf32> to vector<8x8xf32>
      %49 = vector.shape_cast %46 : vector<8x8xf32> to vector<1x1x8x8xf32>
      tpu.vector_store %arg8[%c0_43, %c0_44, %c0_45, %c0_46], %49 {strides = array<i32>} : memref<1x1x8x8xf32, #tpu.memory_space<vmem>>, vector<1x1x8x8xf32>,
    } else {
    }
    return
  }
  func.func @transform_0(%arg0: i32, %arg1: i32, %arg2: i32, %arg3: i32) -> (i32, i32, i32, i32, i32) {
    %c0_i32 = arith.constant 0 : i32
    %c0_i32_0 = arith.constant 0 : i32
    %c0_i32_1 = arith.constant 0 : i32
    return %c0_i32, %arg1, %arg0, %arg2, %c0_i32_0 : i32, i32, i32, i32, i32
  }
  func.func @transform_1(%arg0: i32, %arg1: i32, %arg2: i32, %arg3: i32) -> (i32, i32, i32, i32, i32) {
    %c1_i32 = arith.constant 1 : i32
    %c0_i32 = arith.constant 0 : i32
    %c0_i32_0 = arith.constant 0 : i32
    return %c1_i32, %arg1, %arg0, %arg3, %c0_i32 : i32, i32, i32, i32, i32
  }
  func.func @transform_2(%arg0: i32, %arg1: i32, %arg2: i32, %arg3: i32) -> (i32, i32, i32, i32, i32) {
    %c2_i32 = arith.constant 2 : i32
    %c0_i32 = arith.constant 0 : i32
    %c0_i32_0 = arith.constant 0 : i32
    return %c2_i32, %arg1, %arg0, %arg3, %c0_i32 : i32, i32, i32, i32, i32
  }
  func.func @transform_3(%arg0: i32, %arg1: i32, %arg2: i32, %arg3: i32) -> (i32, i32, i32, i32) {
    %c0_i32 = arith.constant 0 : i32
    %c0_i32_0 = arith.constant 0 : i32
    return %arg0, %c0_i32, %arg2, %arg3 : i32, i32, i32, i32
  }
  func.func @transform_4(%arg0: i32, %arg1: i32, %arg2: i32, %arg3: i32) -> (i32, i32, i32, i32) {
    %c0_i32 = arith.constant 0 : i32
    %c0_i32_0 = arith.constant 0 : i32
    return %arg1, %arg0, %arg2, %c0_i32 : i32, i32, i32, i32
  }
}

module attributes {stable_mosaic.version = 11 : i64} {
  func.func @_head_merge_kernel(%arg0: i32, %arg1: i32, %arg2: memref<1x16x8xf32, #tpu.memory_space<vmem>>, %arg3: memref<1x8x32xf32, #tpu.memory_space<vmem>>, %arg4: memref<1x32xf32, #tpu.memory_space<vmem>>, %arg5: memref<16x32xf32, #tpu.memory_space<vmem>>, %arg6: memref<16x32xf32, #tpu.memory_space<vmem>>, %arg7: memref<16x32xf32, #tpu.memory_space<vmem>>) attributes {dimension_semantics = [#tpu.dimension_semantics<parallel>, #tpu.dimension_semantics<arbitrary>], iteration_bounds = array<i64: 1, 4>, scalar_prefetch = 0 : i64, scratch_operands = 1 : i64, tpu.core_type = #tpu.core_type<tc>, window_params = [{transform_indices = @transform_0, window_bounds = array<i64: 1, 16, 8>}, {transform_indices = @transform_1, window_bounds = array<i64: 1, 8, 32>}, {pipeline_mode = #tpu.pipeline_mode<synchronous>, transform_indices = @transform_2, window_bounds = array<i64: 1, 32>}, {transform_indices = @transform_3, window_bounds = array<i64: 16, 32>}, {transform_indices = @transform_4, window_bounds = array<i64: 16, 32>}]} {
    %c0_i32 = arith.constant 0 : i32
    %0 = arith.cmpi eq, %arg1, %c0_i32 : i32
    %1 = arith.extui %0 : i1 to i32
    %c0_i32_0 = arith.constant 0 : i32
    %2 = arith.cmpi ne, %1, %c0_i32_0 : i32
    scf.if %2 {
      %cst_11 = arith.constant 0.000000e+00 : f32
      %14 = vector.broadcast %cst_11 : f32 to vector<16x32xf32>
      %c0_12 = arith.constant 0 : index
      %c0_13 = arith.constant 0 : index
      %15 = vector.load %arg7[%c0_12, %c0_13] : memref<16x32xf32, #tpu.memory_space<vmem>>, vector<16x32xf32>
      tpu.vector_store %arg7[%c0_12, %c0_13], %14 {strides = array<i32>} : memref<16x32xf32, #tpu.memory_space<vmem>>, vector<16x32xf32>,
    } else {
    }
    %c0 = arith.constant 0 : index
    %c0_1 = arith.constant 0 : index
    %3 = vector.load %arg7[%c0, %c0_1] : memref<16x32xf32, #tpu.memory_space<vmem>>, vector<16x32xf32>
    %c0_2 = arith.constant 0 : index
    %c0_3 = arith.constant 0 : index
    %c0_4 = arith.constant 0 : index
    %4 = vector.load %arg2[%c0_2, %c0_3, %c0_4] : memref<1x16x8xf32, #tpu.memory_space<vmem>>, vector<1x16x8xf32>
    %5 = vector.shape_cast %4 : vector<1x16x8xf32> to vector<16x8xf32>
    %c0_5 = arith.constant 0 : index
    %c0_6 = arith.constant 0 : index
    %c0_7 = arith.constant 0 : index
    %6 = vector.load %arg3[%c0_5, %c0_6, %c0_7] : memref<1x8x32xf32, #tpu.memory_space<vmem>>, vector<1x8x32xf32>
    %7 = vector.shape_cast %6 : vector<1x8x32xf32> to vector<8x32xf32>
    %cst = arith.constant dense<0.000000e+00> : vector<16x32xf32>
    %8 = tpu.matmul %5, %7, %cst {dimension_numbers = #tpu.dot_dimension_numbers<[1], [0], [0], [1], [0, 0, 1, 1], [], []>} : vector<16x8xf32>, vector<8x32xf32>, vector<16x32xf32> -> vector<16x32xf32>
    %9 = arith.addf %3, %8 : vector<16x32xf32>
    %c0_8 = arith.constant 0 : index
    %c0_9 = arith.constant 0 : index
    %10 = vector.load %arg7[%c0_8, %c0_9] : memref<16x32xf32, #tpu.memory_space<vmem>>, vector<16x32xf32>
    tpu.vector_store %arg7[%c0_8, %c0_9], %9 {strides = array<i32>} : memref<16x32xf32, #tpu.memory_space<vmem>>, vector<16x32xf32>,
    %c3_i32 = arith.constant 3 : i32
    %11 = arith.cmpi eq, %arg1, %c3_i32 : i32
    %12 = arith.extui %11 : i1 to i32
    %c0_i32_10 = arith.constant 0 : i32
    %13 = arith.cmpi ne, %12, %c0_i32_10 : i32
    scf.if %13 {
      %c0_11 = arith.constant 0 : index
      %c0_12 = arith.constant 0 : index
      %14 = vector.load %arg7[%c0_11, %c0_12] : memref<16x32xf32, #tpu.memory_space<vmem>>, vector<16x32xf32>
      %c0_13 = arith.constant 0 : index
      %c0_14 = arith.constant 0 : index
      %15 = vector.load %arg4[%c0_13, %c0_14] : memref<1x32xf32, #tpu.memory_space<vmem>>, vector<1x32xf32>
      %16 = vector.broadcast %15 : vector<1x32xf32> to vector<16x32xf32>
      %17 = arith.addf %14, %16 : vector<16x32xf32>
      %c0_15 = arith.constant 0 : index
      %c0_16 = arith.constant 0 : index
      %18 = vector.load %arg5[%c0_15, %c0_16] : memref<16x32xf32, #tpu.memory_space<vmem>>, vector<16x32xf32>
      %19 = arith.addf %17, %18 : vector<16x32xf32>
      %c0_17 = arith.constant 0 : index
      %c0_18 = arith.constant 0 : index
      %20 = vector.load %arg6[%c0_17, %c0_18] : memref<16x32xf32, #tpu.memory_space<vmem>>, vector<16x32xf32>
      tpu.vector_store %arg6[%c0_17, %c0_18], %19 {strides = array<i32>} : memref<16x32xf32, #tpu.memory_space<vmem>>, vector<16x32xf32>,
    } else {
    }
    return
  }
  func.func @transform_0(%arg0: i32, %arg1: i32) -> (i32, i32, i32) {
    %c0_i32 = arith.constant 0 : i32
    %c0_i32_0 = arith.constant 0 : i32
    return %arg1, %arg0, %c0_i32 : i32, i32, i32
  }
  func.func @transform_1(%arg0: i32, %arg1: i32) -> (i32, i32, i32) {
    %c0_i32 = arith.constant 0 : i32
    %c0_i32_0 = arith.constant 0 : i32
    %c0_i32_1 = arith.constant 0 : i32
    return %arg1, %c0_i32, %c0_i32_0 : i32, i32, i32
  }
  func.func @transform_2(%arg0: i32, %arg1: i32) -> (i32, i32) {
    %c0_i32 = arith.constant 0 : i32
    %c0_i32_0 = arith.constant 0 : i32
    %c0_i32_1 = arith.constant 0 : i32
    return %c0_i32, %c0_i32_0 : i32, i32
  }
  func.func @transform_3(%arg0: i32, %arg1: i32) -> (i32, i32) {
    %c0_i32 = arith.constant 0 : i32
    %c0_i32_0 = arith.constant 0 : i32
    return %arg0, %c0_i32 : i32, i32
  }
  func.func @transform_4(%arg0: i32, %arg1: i32) -> (i32, i32) {
    %c0_i32 = arith.constant 0 : i32
    %c0_i32_0 = arith.constant 0 : i32
    return %arg0, %c0_i32 : i32, i32
  }
}

module attributes {stable_mosaic.version = 11 : i64} {
  func.func @_ln_head_proj_kernel(%arg0: i32, %arg1: i32, %arg2: memref<16x32xf32, #tpu.memory_space<vmem>>, %arg3: memref<1x32xf32, #tpu.memory_space<vmem>>, %arg4: memref<1x32xf32, #tpu.memory_space<vmem>>, %arg5: memref<1x32x8xf32, #tpu.memory_space<vmem>>, %arg6: memref<1x1x8xf32, #tpu.memory_space<vmem>>, %arg7: memref<1x16x8xf32, #tpu.memory_space<vmem>>, %arg8: memref<16x32xf32, #tpu.memory_space<vmem>>) attributes {dimension_semantics = [#tpu.dimension_semantics<parallel>, #tpu.dimension_semantics<arbitrary>], iteration_bounds = array<i64: 1, 4>, scalar_prefetch = 0 : i64, scratch_operands = 1 : i64, tpu.core_type = #tpu.core_type<tc>, window_params = [{transform_indices = @transform_0, window_bounds = array<i64: 16, 32>}, {pipeline_mode = #tpu.pipeline_mode<synchronous>, transform_indices = @transform_1, window_bounds = array<i64: 1, 32>}, {pipeline_mode = #tpu.pipeline_mode<synchronous>, transform_indices = @transform_2, window_bounds = array<i64: 1, 32>}, {transform_indices = @transform_3, window_bounds = array<i64: 1, 32, 8>}, {transform_indices = @transform_4, window_bounds = array<i64: 1, 1, 8>}, {transform_indices = @transform_5, window_bounds = array<i64: 1, 16, 8>}]} {
    %c0_i32 = arith.constant 0 : i32
    %0 = arith.cmpi eq, %arg1, %c0_i32 : i32
    %1 = arith.extui %0 : i1 to i32
    %c0_i32_0 = arith.constant 0 : i32
    %2 = arith.cmpi ne, %1, %c0_i32_0 : i32
    scf.if %2 {
      %c0_11 = arith.constant 0 : index
      %c0_12 = arith.constant 0 : index
      %14 = vector.load %arg2[%c0_11, %c0_12] : memref<16x32xf32, #tpu.memory_space<vmem>>, vector<16x32xf32>
      %c0_13 = arith.constant 0 : index
      %c0_14 = arith.constant 0 : index
      %15 = vector.load %arg3[%c0_13, %c0_14] : memref<1x32xf32, #tpu.memory_space<vmem>>, vector<1x32xf32>
      %c0_15 = arith.constant 0 : index
      %c0_16 = arith.constant 0 : index
      %16 = vector.load %arg4[%c0_15, %c0_16] : memref<1x32xf32, #tpu.memory_space<vmem>>, vector<1x32xf32>
      %cst_17 = arith.constant dense<0.000000e+00> : vector<16xf32>
      %17 = vector.multi_reduction <add>, %14, %cst_17 [1] : vector<16x32xf32> to vector<16xf32>
      %18 = vector.shape_cast %17 : vector<16xf32> to vector<16x1xf32>
      %cst_18 = arith.constant 3.200000e+01 : f32
      %19 = vector.broadcast %cst_18 : f32 to vector<16x1xf32>
      %20 = arith.divf %18, %19 : vector<16x1xf32>
      %21 = vector.broadcast %20 : vector<16x1xf32> to vector<16x32xf32>
      %22 = arith.subf %14, %21 : vector<16x32xf32>
      %23 = arith.mulf %22, %22 : vector<16x32xf32>
      %cst_19 = arith.constant dense<0.000000e+00> : vector<16xf32>
      %24 = vector.multi_reduction <add>, %23, %cst_19 [1] : vector<16x32xf32> to vector<16xf32>
      %25 = vector.shape_cast %24 : vector<16xf32> to vector<16x1xf32>
      %cst_20 = arith.constant 0.0322580636 : f32
      %26 = vector.broadcast %cst_20 : f32 to vector<16x1xf32>
      %27 = arith.mulf %25, %26 : vector<16x1xf32>
      %28 = math.sqrt %27 : vector<16x1xf32>
      %cst_21 = arith.constant 9.99999997E-7 : f32
      %29 = vector.broadcast %cst_21 : f32 to vector<16x1xf32>
      %30 = arith.addf %28, %29 : vector<16x1xf32>
      %cst_22 = arith.constant 1.000000e+00 : f32
      %31 = vector.broadcast %cst_22 : f32 to vector<16x1xf32>
      %32 = arith.divf %31, %30 : vector<16x1xf32>
      %33 = vector.broadcast %32 : vector<16x1xf32> to vector<16x32xf32>
      %34 = arith.mulf %22, %33 : vector<16x32xf32>
      %35 = vector.broadcast %15 : vector<1x32xf32> to vector<16x32xf32>
      %36 = arith.mulf %35, %34 : vector<16x32xf32>
      %37 = vector.broadcast %16 : vector<1x32xf32> to vector<16x32xf32>
      %38 = arith.addf %36, %37 : vector<16x32xf32>
      %c0_23 = arith.constant 0 : index
      %c0_24 = arith.constant 0 : index
      %39 = vector.load %arg8[%c0_23, %c0_24] : memref<16x32xf32, #tpu.memory_space<vmem>>, vector<16x32xf32>
      tpu.vector_store %arg8[%c0_23, %c0_24], %38 {strides = array<i32>} : memref<16x32xf32, #tpu.memory_space<vmem>>, vector<16x32xf32>,
    } else {
    }
    %c0 = arith.constant 0 : index
    %c0_1 = arith.constant 0 : index
    %3 = vector.load %arg8[%c0, %c0_1] : memref<16x32xf32, #tpu.memory_space<vmem>>, vector<16x32xf32>
    %c0_2 = arith.constant 0 : index
    %c0_3 = arith.constant 0 : index
    %c0_4 = arith.constant 0 : index
    %4 = vector.load %arg5[%c0_2, %c0_3, %c0_4] : memref<1x32x8xf32, #tpu.memory_space<vmem>>, vector<1x32x8xf32>
    %5 = vector.shape_cast %4 : vector<1x32x8xf32> to vector<32x8xf32>
    %cst = arith.constant dense<0.000000e+00> : vector<16x8xf32>
    %6 = tpu.matmul %3, %5, %cst {dimension_numbers = #tpu.dot_dimension_numbers<[1], [0], [0], [1], [0, 0, 1, 1], [], []>} : vector<16x32xf32>, vector<32x8xf32>, vector<16x8xf32> -> vector<16x8xf32>
    %c0_5 = arith.constant 0 : index
    %c0_6 = arith.constant 0 : index
    %c0_7 = arith.constant 0 : index
    %7 = vector.load %arg6[%c0_5, %c0_6, %c0_7] : memref<1x1x8xf32, #tpu.memory_space<vmem>>, vector<1x1x8xf32>
    %8 = vector.shape_cast %7 : vector<1x1x8xf32> to vector<1x8xf32>
    %9 = vector.broadcast %8 : vector<1x8xf32> to vector<16x8xf32>
    %10 = arith.addf %6, %9 : vector<16x8xf32>
    %c0_8 = arith.constant 0 : index
    %c0_9 = arith.constant 0 : index
    %c0_10 = arith.constant 0 : index
    %11 = vector.load %arg7[%c0_8, %c0_9, %c0_10] : memref<1x16x8xf32, #tpu.memory_space<vmem>>, vector<1x16x8xf32>
    %12 = vector.shape_cast %11 : vector<1x16x8xf32> to vector<16x8xf32>
    %13 = vector.shape_cast %10 : vector<16x8xf32> to vector<1x16x8xf32>
    tpu.vector_store %arg7[%c0_8, %c0_9, %c0_10], %13 {strides = array<i32>} : memref<1x16x8xf32, #tpu.memory_space<vmem>>, vector<1x16x8xf32>,
    return
  }
  func.func @transform_0(%arg0: i32, %arg1: i32) -> (i32, i32) {
    %c0_i32 = arith.constant 0 : i32
    %c0_i32_0 = arith.constant 0 : i32
    return %arg0, %c0_i32 : i32, i32
  }
  func.func @transform_1(%arg0: i32, %arg1: i32) -> (i32, i32) {
    %c0_i32 = arith.constant 0 : i32
    %c0_i32_0 = arith.constant 0 : i32
    %c0_i32_1 = arith.constant 0 : i32
    return %c0_i32, %c0_i32_0 : i32, i32
  }
  func.func @transform_2(%arg0: i32, %arg1: i32) -> (i32, i32) {
    %c0_i32 = arith.constant 0 : i32
    %c0_i32_0 = arith.constant 0 : i32
    %c0_i32_1 = arith.constant 0 : i32
    return %c0_i32, %c0_i32_0 : i32, i32
  }
  func.func @transform_3(%arg0: i32, %arg1: i32) -> (i32, i32, i32) {
    %c0_i32 = arith.constant 0 : i32
    %c0_i32_0 = arith.constant 0 : i32
    %c0_i32_1 = arith.constant 0 : i32
    return %arg1, %c0_i32, %c0_i32_0 : i32, i32, i32
  }
  func.func @transform_4(%arg0: i32, %arg1: i32) -> (i32, i32, i32) {
    %c0_i32 = arith.constant 0 : i32
    %c0_i32_0 = arith.constant 0 : i32
    %c0_i32_1 = arith.constant 0 : i32
    return %arg1, %c0_i32, %c0_i32_0 : i32, i32, i32
  }
  func.func @transform_5(%arg0: i32, %arg1: i32) -> (i32, i32, i32) {
    %c0_i32 = arith.constant 0 : i32
    %c0_i32_0 = arith.constant 0 : i32
    return %arg1, %arg0, %c0_i32 : i32, i32, i32
  }
}

module attributes {stable_mosaic.version = 11 : i64} {
  func.func @_ln_head_proj_kernel(%arg0: i32, %arg1: i32, %arg2: memref<16x32xf32, #tpu.memory_space<vmem>>, %arg3: memref<1x32xf32, #tpu.memory_space<vmem>>, %arg4: memref<1x32xf32, #tpu.memory_space<vmem>>, %arg5: memref<1x32x8xf32, #tpu.memory_space<vmem>>, %arg6: memref<1x1x8xf32, #tpu.memory_space<vmem>>, %arg7: memref<1x16x8xf32, #tpu.memory_space<vmem>>, %arg8: memref<16x32xf32, #tpu.memory_space<vmem>>) attributes {dimension_semantics = [#tpu.dimension_semantics<parallel>, #tpu.dimension_semantics<arbitrary>], iteration_bounds = array<i64: 1, 8>, scalar_prefetch = 0 : i64, scratch_operands = 1 : i64, tpu.core_type = #tpu.core_type<tc>, window_params = [{transform_indices = @transform_0, window_bounds = array<i64: 16, 32>}, {pipeline_mode = #tpu.pipeline_mode<synchronous>, transform_indices = @transform_1, window_bounds = array<i64: 1, 32>}, {pipeline_mode = #tpu.pipeline_mode<synchronous>, transform_indices = @transform_2, window_bounds = array<i64: 1, 32>}, {transform_indices = @transform_3, window_bounds = array<i64: 1, 32, 8>}, {transform_indices = @transform_4, window_bounds = array<i64: 1, 1, 8>}, {transform_indices = @transform_5, window_bounds = array<i64: 1, 16, 8>}]} {
    %c0 = arith.constant 0 : index
    %c0_0 = arith.constant 0 : index
    %0 = vector.load %arg2[%c0, %c0_0] : memref<16x32xf32, #tpu.memory_space<vmem>>, vector<16x32xf32>
    %c0_1 = arith.constant 0 : index
    %c0_2 = arith.constant 0 : index
    %c0_3 = arith.constant 0 : index
    %1 = vector.load %arg5[%c0_1, %c0_2, %c0_3] : memref<1x32x8xf32, #tpu.memory_space<vmem>>, vector<1x32x8xf32>
    %2 = vector.shape_cast %1 : vector<1x32x8xf32> to vector<32x8xf32>
    %cst = arith.constant dense<0.000000e+00> : vector<16x8xf32>
    %3 = tpu.matmul %0, %2, %cst {dimension_numbers = #tpu.dot_dimension_numbers<[1], [0], [0], [1], [0, 0, 1, 1], [], []>} : vector<16x32xf32>, vector<32x8xf32>, vector<16x8xf32> -> vector<16x8xf32>
    %c0_4 = arith.constant 0 : index
    %c0_5 = arith.constant 0 : index
    %c0_6 = arith.constant 0 : index
    %4 = vector.load %arg6[%c0_4, %c0_5, %c0_6] : memref<1x1x8xf32, #tpu.memory_space<vmem>>, vector<1x1x8xf32>
    %5 = vector.shape_cast %4 : vector<1x1x8xf32> to vector<1x8xf32>
    %6 = vector.broadcast %5 : vector<1x8xf32> to vector<16x8xf32>
    %7 = arith.addf %3, %6 : vector<16x8xf32>
    %c0_7 = arith.constant 0 : index
    %c0_8 = arith.constant 0 : index
    %c0_9 = arith.constant 0 : index
    %8 = vector.load %arg7[%c0_7, %c0_8, %c0_9] : memref<1x16x8xf32, #tpu.memory_space<vmem>>, vector<1x16x8xf32>
    %9 = vector.shape_cast %8 : vector<1x16x8xf32> to vector<16x8xf32>
    %10 = vector.shape_cast %7 : vector<16x8xf32> to vector<1x16x8xf32>
    tpu.vector_store %arg7[%c0_7, %c0_8, %c0_9], %10 {strides = array<i32>} : memref<1x16x8xf32, #tpu.memory_space<vmem>>, vector<1x16x8xf32>,
    return
  }
  func.func @transform_0(%arg0: i32, %arg1: i32) -> (i32, i32) {
    %c0_i32 = arith.constant 0 : i32
    %c0_i32_0 = arith.constant 0 : i32
    return %arg0, %c0_i32 : i32, i32
  }
  func.func @transform_1(%arg0: i32, %arg1: i32) -> (i32, i32) {
    %c0_i32 = arith.constant 0 : i32
    %c0_i32_0 = arith.constant 0 : i32
    %c0_i32_1 = arith.constant 0 : i32
    return %c0_i32, %c0_i32_0 : i32, i32
  }
  func.func @transform_2(%arg0: i32, %arg1: i32) -> (i32, i32) {
    %c0_i32 = arith.constant 0 : i32
    %c0_i32_0 = arith.constant 0 : i32
    %c0_i32_1 = arith.constant 0 : i32
    return %c0_i32, %c0_i32_0 : i32, i32
  }
  func.func @transform_3(%arg0: i32, %arg1: i32) -> (i32, i32, i32) {
    %c0_i32 = arith.constant 0 : i32
    %c0_i32_0 = arith.constant 0 : i32
    %c0_i32_1 = arith.constant 0 : i32
    return %arg1, %c0_i32, %c0_i32_0 : i32, i32, i32
  }
  func.func @transform_4(%arg0: i32, %arg1: i32) -> (i32, i32, i32) {
    %c0_i32 = arith.constant 0 : i32
    %c0_i32_0 = arith.constant 0 : i32
    %c0_i32_1 = arith.constant 0 : i32
    return %arg1, %c0_i32, %c0_i32_0 : i32, i32, i32
  }
  func.func @transform_5(%arg0: i32, %arg1: i32) -> (i32, i32, i32) {
    %c0_i32 = arith.constant 0 : i32
    %c0_i32_0 = arith.constant 0 : i32
    return %arg1, %arg0, %c0_i32 : i32, i32, i32
  }
}

module attributes {stable_mosaic.version = 11 : i64} {
  func.func @_flash_attention_kernel(%arg0: i32, %arg1: i32, %arg2: i32, %arg3: i32, %arg4: memref<1x1x1x8x8xf32, #tpu.memory_space<vmem>>, %arg5: memref<1x1x1x8x8xf32, #tpu.memory_space<vmem>>, %arg6: memref<1x1x1x8x8xf32, #tpu.memory_space<vmem>>, %arg7: memref<1x1x1x8xf32, #tpu.memory_space<vmem>>, %arg8: memref<1x1x8x8xf32, #tpu.memory_space<vmem>>, %arg9: memref<8x1xf32, #tpu.memory_space<vmem>>, %arg10: memref<8x1xf32, #tpu.memory_space<vmem>>, %arg11: memref<8x8xf32, #tpu.memory_space<vmem>>) attributes {dimension_semantics = [#tpu.dimension_semantics<parallel>, #tpu.dimension_semantics<parallel>, #tpu.dimension_semantics<parallel>, #tpu.dimension_semantics<arbitrary>], iteration_bounds = array<i64: 2, 4, 1, 1>, scalar_prefetch = 0 : i64, scratch_operands = 3 : i64, tpu.core_type = #tpu.core_type<tc>, window_params = [{transform_indices = @transform_0, window_bounds = array<i64: 1, 1, 1, 8, 8>}, {transform_indices = @transform_1, window_bounds = array<i64: 1, 1, 1, 8, 8>}, {transform_indices = @transform_2, window_bounds = array<i64: 1, 1, 1, 8, 8>}, {transform_indices = @transform_3, window_bounds = array<i64: 1, 1, 1, 8>}, {transform_indices = @transform_4, window_bounds = array<i64: 1, 1, 8, 8>}]} {
    %c0_i32 = arith.constant 0 : i32
    %0 = arith.cmpi eq, %arg3, %c0_i32 : i32
    %1 = arith.extui %0 : i1 to i32
    %c0_i32_0 = arith.constant 0 : i32
    %2 = arith.cmpi ne, %1, %c0_i32_0 : i32
    scf.if %2 {
      %cst_38 = arith.constant 0xFF800000 : f32
      %43 = vector.broadcast %cst_38 : f32 to vector<8x1xf32>
      %c0_39 = arith.constant 0 : index
      %c0_40 = arith.constant 0 : index
      %44 = vector.load %arg9[%c0_39, %c0_40] : memref<8x1xf32, #tpu.memory_space<vmem>>, vector<8x1xf32>
      tpu.vector_store %arg9[%c0_39, %c0_40], %43 {strides = array<i32>} : memref<8x1xf32, #tpu.memory_space<vmem>>, vector<8x1xf32>,
      %cst_41 = arith.constant 0.000000e+00 : f32
      %45 = vector.broadcast %cst_41 : f32 to vector<8x1xf32>
      %c0_42 = arith.constant 0 : index
      %c0_43 = arith.constant 0 : index
      %46 = vector.load %arg10[%c0_42, %c0_43] : memref<8x1xf32, #tpu.memory_space<vmem>>, vector<8x1xf32>
      tpu.vector_store %arg10[%c0_42, %c0_43], %45 {strides = array<i32>} : memref<8x1xf32, #tpu.memory_space<vmem>>, vector<8x1xf32>,
      %cst_44 = arith.constant 0.000000e+00 : f32
      %47 = vector.broadcast %cst_44 : f32 to vector<8x8xf32>
      %c0_45 = arith.constant 0 : index
      %c0_46 = arith.constant 0 : index
      %48 = vector.load %arg11[%c0_45, %c0_46] : memref<8x8xf32, #tpu.memory_space<vmem>>, vector<8x8xf32>
      tpu.vector_store %arg11[%c0_45, %c0_46], %47 {strides = array<i32>} : memref<8x8xf32, #tpu.memory_space<vmem>>, vector<8x8xf32>,
    } else {
    }
    %c0 = arith.constant 0 : index
    %c0_1 = arith.constant 0 : index
    %c0_2 = arith.constant 0 : index
    %c0_3 = arith.constant 0 : index
    %c0_4 = arith.constant 0 : index
    %3 = vector.load %arg4[%c0, %c0_1, %c0_2, %c0_3, %c0_4] : memref<1x1x1x8x8xf32, #tpu.memory_space<vmem>>, vector<1x1x1x8x8xf32>
    %4 = vector.shape_cast %3 : vector<1x1x1x8x8xf32> to vector<8x8xf32>
    %c0_5 = arith.constant 0 : index
    %c0_6 = arith.constant 0 : index
    %c0_7 = arith.constant 0 : index
    %c0_8 = arith.constant 0 : index
    %c0_9 = arith.constant 0 : index
    %5 = vector.load %arg5[%c0_5, %c0_6, %c0_7, %c0_8, %c0_9] : memref<1x1x1x8x8xf32, #tpu.memory_space<vmem>>, vector<1x1x1x8x8xf32>
    %6 = vector.shape_cast %5 : vector<1x1x1x8x8xf32> to vector<8x8xf32>
    %c0_10 = arith.constant 0 : index
    %c0_11 = arith.constant 0 : index
    %c0_12 = arith.constant 0 : index
    %c0_13 = arith.constant 0 : index
    %c0_14 = arith.constant 0 : index
    %7 = vector.load %arg6[%c0_10, %c0_11, %c0_12, %c0_13, %c0_14] : memref<1x1x1x8x8xf32, #tpu.memory_space<vmem>>, vector<1x1x1x8x8xf32>
    %8 = vector.shape_cast %7 : vector<1x1x1x8x8xf32> to vector<8x8xf32>
    %cst = arith.constant dense<0.000000e+00> : vector<8x8xf32>
    %9 = tpu.matmul %4, %6, %cst {dimension_numbers = #tpu.dot_dimension_numbers<[1], [1], [0], [0], [0, 0, 1, 0], [], []>} : vector<8x8xf32>, vector<8x8xf32>, vector<8x8xf32> -> vector<8x8xf32>
    %c0_15 = arith.constant 0 : index
    %c0_16 = arith.constant 0 : index
    %c0_17 = arith.constant 0 : index
    %c0_18 = arith.constant 0 : index
    %10 = vector.load %arg7[%c0_15, %c0_16, %c0_17, %c0_18] : memref<1x1x1x8xf32, #tpu.memory_space<vmem>>, vector<1x1x1x8xf32>
    %11 = vector.shape_cast %10 : vector<1x1x1x8xf32> to vector<1x8xf32>
    %cst_19 = arith.constant 0.000000e+00 : f32
    %12 = vector.broadcast %cst_19 : f32 to vector<1x8xf32>
    %13 = arith.cmpf oeq, %11, %12 : vector<1x8xf32>
    %cst_20 = arith.constant -1.000000e+09 : f32
    %14 = vector.shape_cast %13 : vector<1x8xi1> to vector<1x8xi1>
    %15 = vector.broadcast %14 : vector<1x8xi1> to vector<8x8xi1>
    %16 = vector.broadcast %cst_20 : f32 to vector<8x8xf32>
    %17 = arith.select %15, %16, %9 : vector<8x8xi1>, vector<8x8xf32>
    %c0_21 = arith.constant 0 : index
    %c0_22 = arith.constant 0 : index
    %18 = vector.load %arg9[%c0_21, %c0_22] : memref<8x1xf32, #tpu.memory_space<vmem>>, vector<8x1xf32>
    %cst_23 = arith.constant dense<0xFF800000> : vector<8xf32>
    %19 = vector.multi_reduction <maximumf>, %17, %cst_23 [1] : vector<8x8xf32> to vector<8xf32>
    %20 = vector.shape_cast %19 : vector<8xf32> to vector<8x1xf32>
    %21 = arith.maximumf %18, %20 : vector<8x1xf32>
    %22 = arith.subf %18, %21 : vector<8x1xf32>
    %23 = math.exp %22 : vector<8x1xf32>
    %24 = vector.broadcast %21 : vector<8x1xf32> to vector<8x8xf32>
    %25 = arith.subf %17, %24 : vector<8x8xf32>
    %26 = math.exp %25 : vector<8x8xf32>
    %c0_24 = arith.constant 0 : index
    %c0_25 = arith.constant 0 : index
    %27 = vector.load %arg10[%c0_24, %c0_25] : memref<8x1xf32, #tpu.memory_space<vmem>>, vector<8x1xf32>
    %28 = arith.mulf %23, %27 : vector<8x1xf32>
    %cst_26 = arith.constant dense<0.000000e+00> : vector<8xf32>
    %29 = vector.multi_reduction <add>, %26, %cst_26 [1] : vector<8x8xf32> to vector<8xf32>
    %30 = vector.shape_cast %29 : vector<8xf32> to vector<8x1xf32>
    %31 = arith.addf %28, %30 : vector<8x1xf32>
    %c0_27 = arith.constant 0 : index
    %c0_28 = arith.constant 0 : index
    %32 = vector.load %arg10[%c0_27, %c0_28] : memref<8x1xf32, #tpu.memory_space<vmem>>, vector<8x1xf32>
    tpu.vector_store %arg10[%c0_27, %c0_28], %31 {strides = array<i32>} : memref<8x1xf32, #tpu.memory_space<vmem>>, vector<8x1xf32>,
    %c0_29 = arith.constant 0 : index
    %c0_30 = arith.constant 0 : index
    %33 = vector.load %arg11[%c0_29, %c0_30] : memref<8x8xf32, #tpu.memory_space<vmem>>, vector<8x8xf32>
    %34 = vector.broadcast %23 : vector<8x1xf32> to vector<8x8xf32>
    %35 = arith.mulf %34, %33 : vector<8x8xf32>
    %cst_31 = arith.constant dense<0.000000e+00> : vector<8x8xf32>
    %36 = tpu.matmul %26, %8, %cst_31 {dimension_numbers = #tpu.dot_dimension_numbers<[1], [0], [0], [1], [0, 0, 1, 1], [], []>} : vector<8x8xf32>, vector<8x8xf32>, vector<8x8xf32> -> vector<8x8xf32>
    %37 = arith.addf %35, %36 : vector<8x8xf32>
    %c0_32 = arith.constant 0 : index
    %c0_33 = arith.constant 0 : index
    %38 = vector.load %arg11[%c0_32, %c0_33] : memref<8x8xf32, #tpu.memory_space<vmem>>, vector<8x8xf32>
    tpu.vector_store %arg11[%c0_32, %c0_33], %37 {strides = array<i32>} : memref<8x8xf32, #tpu.memory_space<vmem>>, vector<8x8xf32>,
    %c0_34 = arith.constant 0 : index
    %c0_35 = arith.constant 0 : index
    %39 = vector.load %arg9[%c0_34, %c0_35] : memref<8x1xf32, #tpu.memory_space<vmem>>, vector<8x1xf32>
    tpu.vector_store %arg9[%c0_34, %c0_35], %21 {strides = array<i32>} : memref<8x1xf32, #tpu.memory_space<vmem>>, vector<8x1xf32>,
    %c0_i32_36 = arith.constant 0 : i32
    %40 = arith.cmpi eq, %arg3, %c0_i32_36 : i32
    %41 = arith.extui %40 : i1 to i32
    %c0_i32_37 = arith.constant 0 : i32
    %42 = arith.cmpi ne, %41, %c0_i32_37 : i32
    scf.if %42 {
      %c0_38 = arith.constant 0 : index
      %c0_39 = arith.constant 0 : index
      %43 = vector.load %arg10[%c0_38, %c0_39] : memref<8x1xf32, #tpu.memory_space<vmem>>, vector<8x1xf32>
      %cst_40 = arith.constant 1.000000e+00 : f32
      %44 = vector.broadcast %cst_40 : f32 to vector<8x1xf32>
      %45 = arith.divf %44, %43 : vector<8x1xf32>
      %c0_41 = arith.constant 0 : index
      %c0_42 = arith.constant 0 : index
      %46 = vector.load %arg11[%c0_41, %c0_42] : memref<8x8xf32, #tpu.memory_space<vmem>>, vector<8x8xf32>
      %47 = vector.broadcast %45 : vector<8x1xf32> to vector<8x8xf32>
      %48 = arith.mulf %46, %47 : vector<8x8xf32>
      %c0_43 = arith.constant 0 : index
      %c0_44 = arith.constant 0 : index
      %c0_45 = arith.constant 0 : index
      %c0_46 = arith.constant 0 : index
      %49 = vector.load %arg8[%c0_43, %c0_44, %c0_45, %c0_46] : memref<1x1x8x8xf32, #tpu.memory_space<vmem>>, vector<1x1x8x8xf32>
      %50 = vector.shape_cast %49 : vector<1x1x8x8xf32> to vector<8x8xf32>
      %51 = vector.shape_cast %48 : vector<8x8xf32> to vector<1x1x8x8xf32>
      tpu.vector_store %arg8[%c0_43, %c0_44, %c0_45, %c0_46], %51 {strides = array<i32>} : memref<1x1x8x8xf32, #tpu.memory_space<vmem>>, vector<1x1x8x8xf32>,
    } else {
    }
    return
  }
  func.func @transform_0(%arg0: i32, %arg1: i32, %arg2: i32, %arg3: i32) -> (i32, i32, i32, i32, i32) {
    %c0_i32 = arith.constant 0 : i32
    %c0_i32_0 = arith.constant 0 : i32
    %c0_i32_1 = arith.constant 0 : i32
    return %c0_i32, %arg1, %arg0, %arg2, %c0_i32_0 : i32, i32, i32, i32, i32
  }
  func.func @transform_1(%arg0: i32, %arg1: i32, %arg2: i32, %arg3: i32) -> (i32, i32, i32, i32, i32) {
    %c0_i32 = arith.constant 0 : i32
    %c0_i32_0 = arith.constant 0 : i32
    %c0_i32_1 = arith.constant 0 : i32
    return %c0_i32, %arg1, %arg0, %arg3, %c0_i32_0 : i32, i32, i32, i32, i32
  }
  func.func @transform_2(%arg0: i32, %arg1: i32, %arg2: i32, %arg3: i32) -> (i32, i32, i32, i32, i32) {
    %c1_i32 = arith.constant 1 : i32
    %c0_i32 = arith.constant 0 : i32
    %c0_i32_0 = arith.constant 0 : i32
    return %c1_i32, %arg1, %arg0, %arg3, %c0_i32 : i32, i32, i32, i32, i32
  }
  func.func @transform_3(%arg0: i32, %arg1: i32, %arg2: i32, %arg3: i32) -> (i32, i32, i32, i32) {
    %c0_i32 = arith.constant 0 : i32
    %c0_i32_0 = arith.constant 0 : i32
    %c0_i32_1 = arith.constant 0 : i32
    return %arg0, %c0_i32, %c0_i32_0, %arg3 : i32, i32, i32, i32
  }
  func.func @transform_4(%arg0: i32, %arg1: i32, %arg2: i32, %arg3: i32) -> (i32, i32, i32, i32) {
    %c0_i32 = arith.constant 0 : i32
    %c0_i32_0 = arith.constant 0 : i32
    return %arg1, %arg0, %arg2, %c0_i32 : i32, i32, i32, i32
  }
}

module attributes {stable_mosaic.version = 11 : i64} {
  func.func @_ffn_kernel(%arg0: i32, %arg1: i32, %arg2: memref<16x32xf32, #tpu.memory_space<vmem>>, %arg3: memref<1x32xf32, #tpu.memory_space<vmem>>, %arg4: memref<1x32xf32, #tpu.memory_space<vmem>>, %arg5: memref<32x64xf32, #tpu.memory_space<vmem>>, %arg6: memref<1x64xf32, #tpu.memory_space<vmem>>, %arg7: memref<64x32xf32, #tpu.memory_space<vmem>>, %arg8: memref<1x32xf32, #tpu.memory_space<vmem>>, %arg9: memref<16x32xf32, #tpu.memory_space<vmem>>, %arg10: memref<16x32xf32, #tpu.memory_space<vmem>>, %arg11: memref<16x32xf32, #tpu.memory_space<vmem>>) attributes {dimension_semantics = [#tpu.dimension_semantics<parallel>, #tpu.dimension_semantics<arbitrary>], iteration_bounds = array<i64: 1, 1>, scalar_prefetch = 0 : i64, scratch_operands = 2 : i64, tpu.core_type = #tpu.core_type<tc>, window_params = [{transform_indices = @transform_0, window_bounds = array<i64: 16, 32>}, {pipeline_mode = #tpu.pipeline_mode<synchronous>, transform_indices = @transform_1, window_bounds = array<i64: 1, 32>}, {pipeline_mode = #tpu.pipeline_mode<synchronous>, transform_indices = @transform_2, window_bounds = array<i64: 1, 32>}, {transform_indices = @transform_3, window_bounds = array<i64: 32, 64>}, {transform_indices = @transform_4, window_bounds = array<i64: 1, 64>}, {transform_indices = @transform_5, window_bounds = array<i64: 64, 32>}, {pipeline_mode = #tpu.pipeline_mode<synchronous>, transform_indices = @transform_6, window_bounds = array<i64: 1, 32>}, {transform_indices = @transform_7, window_bounds = array<i64: 16, 32>}]} {
    %c0_i32 = arith.constant 0 : i32
    %0 = arith.cmpi eq, %arg1, %c0_i32 : i32
    %1 = arith.extui %0 : i1 to i32
    %c0_i32_0 = arith.constant 0 : i32
    %2 = arith.cmpi ne, %1, %c0_i32_0 : i32
    scf.if %2 {
      %c0_16 = arith.constant 0 : index
      %c0_17 = arith.constant 0 : index
      %19 = vector.load %arg2[%c0_16, %c0_17] : memref<16x32xf32, #tpu.memory_space<vmem>>, vector<16x32xf32>
      %c0_18 = arith.constant 0 : index
      %c0_19 = arith.constant 0 : index
      %20 = vector.load %arg3[%c0_18, %c0_19] : memref<1x32xf32, #tpu.memory_space<vmem>>, vector<1x32xf32>
      %c0_20 = arith.constant 0 : index
      %c0_21 = arith.constant 0 : index
      %21 = vector.load %arg4[%c0_20, %c0_21] : memref<1x32xf32, #tpu.memory_space<vmem>>, vector<1x32xf32>
      %cst_22 = arith.constant dense<0.000000e+00> : vector<16xf32>
      %22 = vector.multi_reduction <add>, %19, %cst_22 [1] : vector<16x32xf32> to vector<16xf32>
      %23 = vector.shape_cast %22 : vector<16xf32> to vector<16x1xf32>
      %cst_23 = arith.constant 3.200000e+01 : f32
      %24 = vector.broadcast %cst_23 : f32 to vector<16x1xf32>
      %25 = arith.divf %23, %24 : vector<16x1xf32>
      %26 = vector.broadcast %25 : vector<16x1xf32> to vector<16x32xf32>
      %27 = arith.subf %19, %26 : vector<16x32xf32>
      %28 = arith.mulf %27, %27 : vector<16x32xf32>
      %cst_24 = arith.constant dense<0.000000e+00> : vector<16xf32>
      %29 = vector.multi_reduction <add>, %28, %cst_24 [1] : vector<16x32xf32> to vector<16xf32>
      %30 = vector.shape_cast %29 : vector<16xf32> to vector<16x1xf32>
      %cst_25 = arith.constant 0.0322580636 : f32
      %31 = vector.broadcast %cst_25 : f32 to vector<16x1xf32>
      %32 = arith.mulf %30, %31 : vector<16x1xf32>
      %33 = math.sqrt %32 : vector<16x1xf32>
      %cst_26 = arith.constant 9.99999997E-7 : f32
      %34 = vector.broadcast %cst_26 : f32 to vector<16x1xf32>
      %35 = arith.addf %33, %34 : vector<16x1xf32>
      %cst_27 = arith.constant 1.000000e+00 : f32
      %36 = vector.broadcast %cst_27 : f32 to vector<16x1xf32>
      %37 = arith.divf %36, %35 : vector<16x1xf32>
      %38 = vector.broadcast %37 : vector<16x1xf32> to vector<16x32xf32>
      %39 = arith.mulf %27, %38 : vector<16x32xf32>
      %40 = vector.broadcast %20 : vector<1x32xf32> to vector<16x32xf32>
      %41 = arith.mulf %40, %39 : vector<16x32xf32>
      %42 = vector.broadcast %21 : vector<1x32xf32> to vector<16x32xf32>
      %43 = arith.addf %41, %42 : vector<16x32xf32>
      %c0_28 = arith.constant 0 : index
      %c0_29 = arith.constant 0 : index
      %44 = vector.load %arg10[%c0_28, %c0_29] : memref<16x32xf32, #tpu.memory_space<vmem>>, vector<16x32xf32>
      tpu.vector_store %arg10[%c0_28, %c0_29], %43 {strides = array<i32>} : memref<16x32xf32, #tpu.memory_space<vmem>>, vector<16x32xf32>,
      %cst_30 = arith.constant 0.000000e+00 : f32
      %45 = vector.broadcast %cst_30 : f32 to vector<16x32xf32>
      %c0_31 = arith.constant 0 : index
      %c0_32 = arith.constant 0 : index
      %46 = vector.load %arg11[%c0_31, %c0_32] : memref<16x32xf32, #tpu.memory_space<vmem>>, vector<16x32xf32>
      tpu.vector_store %arg11[%c0_31, %c0_32], %45 {strides = array<i32>} : memref<16x32xf32, #tpu.memory_space<vmem>>, vector<16x32xf32>,
    } else {
    }
    %c0 = arith.constant 0 : index
    %c0_1 = arith.constant 0 : index
    %3 = vector.load %arg10[%c0, %c0_1] : memref<16x32xf32, #tpu.memory_space<vmem>>, vector<16x32xf32>
    %c0_2 = arith.constant 0 : index
    %c0_3 = arith.constant 0 : index
    %4 = vector.load %arg5[%c0_2, %c0_3] : memref<32x64xf32, #tpu.memory_space<vmem>>, vector<32x64xf32>
    %cst = arith.constant dense<0.000000e+00> : vector<16x64xf32>
    %5 = tpu.matmul %3, %4, %cst {dimension_numbers = #tpu.dot_dimension_numbers<[1], [0], [0], [1], [0, 0, 1, 1], [], []>} : vector<16x32xf32>, vector<32x64xf32>, vector<16x64xf32> -> vector<16x64xf32>
    %c0_4 = arith.constant 0 : index
    %c0_5 = arith.constant 0 : index
    %6 = vector.load %arg6[%c0_4, %c0_5] : memref<1x64xf32, #tpu.memory_space<vmem>>, vector<1x64xf32>
    %7 = vector.broadcast %6 : vector<1x64xf32> to vector<16x64xf32>
    %8 = arith.addf %5, %7 : vector<16x64xf32>
    %cst_6 = arith.constant 0.000000e+00 : f32
    %9 = vector.broadcast %cst_6 : f32 to vector<16x64xf32>
    %10 = arith.maximumf %8, %9 : vector<16x64xf32>
    %c0_7 = arith.constant 0 : index
    %c0_8 = arith.constant 0 : index
    %11 = vector.load %arg11[%c0_7, %c0_8] : memref<16x32xf32, #tpu.memory_space<vmem>>, vector<16x32xf32>
    %c0_9 = arith.constant 0 : index
    %c0_10 = arith.constant 0 : index
    %12 = vector.load %arg7[%c0_9, %c0_10] : memref<64x32xf32, #tpu.memory_space<vmem>>, vector<64x32xf32>
    %cst_11 = arith.constant dense<0.000000e+00> : vector<16x32xf32>
    %13 = tpu.matmul %10, %12, %cst_11 {dimension_numbers = #tpu.dot_dimension_numbers<[1], [0], [0], [1], [0, 0, 1, 1], [], []>} : vector<16x64xf32>, vector<64x32xf32>, vector<16x32xf32> -> vector<16x32xf32>
    %14 = arith.addf %11, %13 : vector<16x32xf32>
    %c0_12 = arith.constant 0 : index
    %c0_13 = arith.constant 0 : index
    %15 = vector.load %arg11[%c0_12, %c0_13] : memref<16x32xf32, #tpu.memory_space<vmem>>, vector<16x32xf32>
    tpu.vector_store %arg11[%c0_12, %c0_13], %14 {strides = array<i32>} : memref<16x32xf32, #tpu.memory_space<vmem>>, vector<16x32xf32>,
    %c0_i32_14 = arith.constant 0 : i32
    %16 = arith.cmpi eq, %arg1, %c0_i32_14 : i32
    %17 = arith.extui %16 : i1 to i32
    %c0_i32_15 = arith.constant 0 : i32
    %18 = arith.cmpi ne, %17, %c0_i32_15 : i32
    scf.if %18 {
      %c0_16 = arith.constant 0 : index
      %c0_17 = arith.constant 0 : index
      %19 = vector.load %arg11[%c0_16, %c0_17] : memref<16x32xf32, #tpu.memory_space<vmem>>, vector<16x32xf32>
      %c0_18 = arith.constant 0 : index
      %c0_19 = arith.constant 0 : index
      %20 = vector.load %arg8[%c0_18, %c0_19] : memref<1x32xf32, #tpu.memory_space<vmem>>, vector<1x32xf32>
      %21 = vector.broadcast %20 : vector<1x32xf32> to vector<16x32xf32>
      %22 = arith.addf %19, %21 : vector<16x32xf32>
      %c0_20 = arith.constant 0 : index
      %c0_21 = arith.constant 0 : index
      %23 = vector.load %arg2[%c0_20, %c0_21] : memref<16x32xf32, #tpu.memory_space<vmem>>, vector<16x32xf32>
      %24 = arith.addf %22, %23 : vector<16x32xf32>
      %c0_22 = arith.constant 0 : index
      %c0_23 = arith.constant 0 : index
      %25 = vector.load %arg9[%c0_22, %c0_23] : memref<16x32xf32, #tpu.memory_space<vmem>>, vector<16x32xf32>
      tpu.vector_store %arg9[%c0_22, %c0_23], %24 {strides = array<i32>} : memref<16x32xf32, #tpu.memory_space<vmem>>, vector<16x32xf32>,
    } else {
    }
    return
  }
  func.func @transform_0(%arg0: i32, %arg1: i32) -> (i32, i32) {
    %c0_i32 = arith.constant 0 : i32
    %c0_i32_0 = arith.constant 0 : i32
    return %arg0, %c0_i32 : i32, i32
  }
  func.func @transform_1(%arg0: i32, %arg1: i32) -> (i32, i32) {
    %c0_i32 = arith.constant 0 : i32
    %c0_i32_0 = arith.constant 0 : i32
    %c0_i32_1 = arith.constant 0 : i32
    return %c0_i32, %c0_i32_0 : i32, i32
  }
  func.func @transform_2(%arg0: i32, %arg1: i32) -> (i32, i32) {
    %c0_i32 = arith.constant 0 : i32
    %c0_i32_0 = arith.constant 0 : i32
    %c0_i32_1 = arith.constant 0 : i32
    return %c0_i32, %c0_i32_0 : i32, i32
  }
  func.func @transform_3(%arg0: i32, %arg1: i32) -> (i32, i32) {
    %c0_i32 = arith.constant 0 : i32
    %c0_i32_0 = arith.constant 0 : i32
    return %c0_i32, %arg1 : i32, i32
  }
  func.func @transform_4(%arg0: i32, %arg1: i32) -> (i32, i32) {
    %c0_i32 = arith.constant 0 : i32
    %c0_i32_0 = arith.constant 0 : i32
    return %c0_i32, %arg1 : i32, i32
  }
  func.func @transform_5(%arg0: i32, %arg1: i32) -> (i32, i32) {
    %c0_i32 = arith.constant 0 : i32
    %c0_i32_0 = arith.constant 0 : i32
    return %arg1, %c0_i32 : i32, i32
  }
  func.func @transform_6(%arg0: i32, %arg1: i32) -> (i32, i32) {
    %c0_i32 = arith.constant 0 : i32
    %c0_i32_0 = arith.constant 0 : i32
    %c0_i32_1 = arith.constant 0 : i32
    return %c0_i32, %c0_i32_0 : i32, i32
  }
  func.func @transform_7(%arg0: i32, %arg1: i32) -> (i32, i32) {
    %c0_i32 = arith.constant 0 : i32
    %c0_i32_0 = arith.constant 0 : i32
    return %arg0, %c0_i32 : i32, i32
  }
}

module attributes {stable_mosaic.version = 11 : i64} {
  func.func @_layernorm_kernel(%arg0: i32, %arg1: memref<16x32xf32, #tpu.memory_space<vmem>>, %arg2: memref<1x32xf32, #tpu.memory_space<vmem>>, %arg3: memref<1x32xf32, #tpu.memory_space<vmem>>, %arg4: memref<16x32xf32, #tpu.memory_space<vmem>>) attributes {dimension_semantics = [#tpu.dimension_semantics<parallel>], iteration_bounds = array<i64: 1>, scalar_prefetch = 0 : i64, scratch_operands = 0 : i64, tpu.core_type = #tpu.core_type<tc>, window_params = [{transform_indices = @transform_0, window_bounds = array<i64: 16, 32>}, {pipeline_mode = #tpu.pipeline_mode<synchronous>, transform_indices = @transform_1, window_bounds = array<i64: 1, 32>}, {pipeline_mode = #tpu.pipeline_mode<synchronous>, transform_indices = @transform_2, window_bounds = array<i64: 1, 32>}, {transform_indices = @transform_3, window_bounds = array<i64: 16, 32>}]} {
    %c0 = arith.constant 0 : index
    %c0_0 = arith.constant 0 : index
    %0 = vector.load %arg1[%c0, %c0_0] : memref<16x32xf32, #tpu.memory_space<vmem>>, vector<16x32xf32>
    %c0_1 = arith.constant 0 : index
    %c0_2 = arith.constant 0 : index
    %1 = vector.load %arg2[%c0_1, %c0_2] : memref<1x32xf32, #tpu.memory_space<vmem>>, vector<1x32xf32>
    %c0_3 = arith.constant 0 : index
    %c0_4 = arith.constant 0 : index
    %2 = vector.load %arg3[%c0_3, %c0_4] : memref<1x32xf32, #tpu.memory_space<vmem>>, vector<1x32xf32>
    %cst = arith.constant dense<0.000000e+00> : vector<16xf32>
    %3 = vector.multi_reduction <add>, %0, %cst [1] : vector<16x32xf32> to vector<16xf32>
    %4 = vector.shape_cast %3 : vector<16xf32> to vector<16x1xf32>
    %cst_5 = arith.constant 3.200000e+01 : f32
    %5 = vector.broadcast %cst_5 : f32 to vector<16x1xf32>
    %6 = arith.divf %4, %5 : vector<16x1xf32>
    %7 = vector.broadcast %6 : vector<16x1xf32> to vector<16x32xf32>
    %8 = arith.subf %0, %7 : vector<16x32xf32>
    %9 = arith.mulf %8, %8 : vector<16x32xf32>
    %cst_6 = arith.constant dense<0.000000e+00> : vector<16xf32>
    %10 = vector.multi_reduction <add>, %9, %cst_6 [1] : vector<16x32xf32> to vector<16xf32>
    %11 = vector.shape_cast %10 : vector<16xf32> to vector<16x1xf32>
    %cst_7 = arith.constant 0.0322580636 : f32
    %12 = vector.broadcast %cst_7 : f32 to vector<16x1xf32>
    %13 = arith.mulf %11, %12 : vector<16x1xf32>
    %14 = math.sqrt %13 : vector<16x1xf32>
    %cst_8 = arith.constant 9.99999997E-7 : f32
    %15 = vector.broadcast %cst_8 : f32 to vector<16x1xf32>
    %16 = arith.addf %14, %15 : vector<16x1xf32>
    %cst_9 = arith.constant 1.000000e+00 : f32
    %17 = vector.broadcast %cst_9 : f32 to vector<16x1xf32>
    %18 = arith.divf %17, %16 : vector<16x1xf32>
    %19 = vector.broadcast %18 : vector<16x1xf32> to vector<16x32xf32>
    %20 = arith.mulf %8, %19 : vector<16x32xf32>
    %21 = vector.broadcast %1 : vector<1x32xf32> to vector<16x32xf32>
    %22 = arith.mulf %21, %20 : vector<16x32xf32>
    %23 = vector.broadcast %2 : vector<1x32xf32> to vector<16x32xf32>
    %24 = arith.addf %22, %23 : vector<16x32xf32>
    %c0_10 = arith.constant 0 : index
    %c0_11 = arith.constant 0 : index
    %25 = vector.load %arg4[%c0_10, %c0_11] : memref<16x32xf32, #tpu.memory_space<vmem>>, vector<16x32xf32>
    tpu.vector_store %arg4[%c0_10, %c0_11], %24 {strides = array<i32>} : memref<16x32xf32, #tpu.memory_space<vmem>>, vector<16x32xf32>,
    return
  }
  func.func @transform_0(%arg0: i32) -> (i32, i32) {
    %c0_i32 = arith.constant 0 : i32
    %c0_i32_0 = arith.constant 0 : i32
    return %arg0, %c0_i32 : i32, i32
  }
  func.func @transform_1(%arg0: i32) -> (i32, i32) {
    %c0_i32 = arith.constant 0 : i32
    %c0_i32_0 = arith.constant 0 : i32
    %c0_i32_1 = arith.constant 0 : i32
    return %c0_i32, %c0_i32_0 : i32, i32
  }
  func.func @transform_2(%arg0: i32) -> (i32, i32) {
    %c0_i32 = arith.constant 0 : i32
    %c0_i32_0 = arith.constant 0 : i32
    %c0_i32_1 = arith.constant 0 : i32
    return %c0_i32, %c0_i32_0 : i32, i32
  }
  func.func @transform_3(%arg0: i32) -> (i32, i32) {
    %c0_i32 = arith.constant 0 : i32
    %c0_i32_0 = arith.constant 0 : i32
    return %arg0, %c0_i32 : i32, i32
  }
}

</mosaic_0001>

<llo_original>
// kernel: decoder_forward.18
$region0: #{decoder_forward.18}
  #allocation0 [shape = 'u32[]', space=smem, size = 0x4, offset = 0x4, fixed_abs, tag = 'smem constant byte address 0x4 - core index']
  #allocation1 [shape = 'u32[144,128]{1,0:T(1,128)}', space=vmem, size = 0x12000, scoped, tag = 'internal scratch']
  #allocation2 [shape = 'f32[8,1]{1,0:T(8,128)}', space=vmem, size = 0x1000, scoped, tag = 'scratch operand']
  #allocation3 [shape = 'f32[8,1]{1,0:T(8,128)}', space=vmem, size = 0x1000, scoped, tag = 'scratch operand']
  #allocation4 [shape = 'f32[8,8]{1,0:T(8,128)}', space=vmem, size = 0x1000, scoped, tag = 'scratch operand']
  %s0 = inlined_call_operand.vmem [shape: f32[3,4,2,8,8], index: 0, kind: input, shape index: {}, may-alias: {0,1,2}]
  %s1 = inlined_call_operand.vmem [shape: f32[3,4,2,8,8], index: 1, kind: input, shape index: {}, may-alias: {0,1,2}]
  %s2 = inlined_call_operand.vmem [shape: f32[3,4,2,8,8], index: 2, kind: input, shape index: {}, may-alias: {0,1,2}]
  %s3 = inlined_call_operand.vmem [shape: f32[2,1,8,8], index: 3, kind: input, shape index: {}]
  %s4 = inlined_call_operand.vmem [shape: f32[4,2,8,8], index: 4, kind: output, shape index: {}]
  %s5 = sld [smem:[#allocation0]]
  $region57: #{decoder_forward.18} parent=0
    _
  %s7 = ssub.s32 1, %s5
  %s8 = scalar_select 0, %s7, %s5
  loop: start=0, step=1, limit=10
  $region2: #{decoder_forward.18} parent=0 // loop_pre_header
    _
  $region3: #{decoder_forward.18} parent=0 // loop_header
    %s10 = sphi 0, %s14
    %p11 = scmp.ge.s32.totalorder %s10, 10
    %s17 = sphi 0, %s43
    %s18 = sphi 0, %s39
    %s19 = sphi 0, %s35
    %s20 = sphi 0, %s31
    %s21 = sphi 0, %s17
    %s22 = sphi 0, %s18
    %s23 = sphi 0, %s19
    %s24 = sphi 0, %s20
    %s25 = sphi 0, %s21
    %s26 = sphi 0, %s22
    %s27 = sphi 0, %s23
    %s28 = sphi 0, %s24
    %s50 = sphi 0, %s52
    %s53 = sphi 0, %s50
    %s54 = sphi 0, %s53
    %s70 = sphi 0, %s54
    %s80 = sphi 0, %s82
    %s83 = sphi 0, %s80
    %s84 = sphi 0, %s83
    %s100 = sphi 0, %s84
    %s110 = sphi 0, %s112
    %s113 = sphi 0, %s110
    %s114 = sphi 0, %s113
    %s130 = sphi 0, %s114
    %s140 = sphi 0, %s142
    %s143 = sphi 0, %s140
    %s144 = sphi 0, %s143
    %s160 = sphi 0, %s144
    %s170 = sphi 0, %s172
    %s173 = sphi 0, %s170
    %s174 = sphi 0, %s173
    %s190 = sphi 0, %s174
  $region4: #{decoder_forward.18} parent=0 // loop_header_branch
    %13 = sbr.rel (%p11) target = $region8
  $region5: #{decoder_forward.18} parent=0 // loop_body
    %s15 = ssub.s32 %s10, 1
    %s16 = ssub.s32 %s10, 2
    %s29 = sadd.s32 1, %s20
    %p30 = scmp.ge.s32.totalorder %s29, 1
    %s31 = scalar_select %p30, 0, %s29
    %s32 = sadd.s32 1, %s19
    %s33 = scalar_select %p30, %s32, %s19
    %p34 = scmp.ge.s32.totalorder %s33, 1
    %s35 = scalar_select %p34, 0, %s33
    %s36 = sadd.s32 1, %s18
    %s37 = scalar_select %p34, %s36, %s18
    %p38 = scmp.ge.s32.totalorder %s37, 4
    %s39 = scalar_select %p38, 0, %s37
    %s40 = sadd.s32 1, %s17
    %s41 = scalar_select %p38, %s40, %s17
    %p42 = scmp.ge.s32.totalorder %s41, 2
    %s43 = scalar_select %p42, 0, %s41
    %s44 = ssub.s32 %s18, %s39
    %s45 = ssub.s32 %s17, %s43
    %s46 = sor.u32 %s44, %s45
    %s47 = ssub.s32 %s19, %s35
    %s48 = sor.u32 %s46, %s47
    %p49 = scmp.eq.s32.totalorder %s48, 0
    %s51 = sadd.s32 %s50, 1
    %s52 = scalar_select %p49, %s50, %s51
    %p55 = pneg %p49
    %p56 = scmp.eq.s32.totalorder %s10, 7
    %p57 = por %p55, %p56
    %p58 = scmp.ne.s32.totalorder %s50, %s53
    %p59 = scmp.eq.s32.totalorder %s10, 0
    %p60 = por %p58, %p59
    %p61 = scmp.ne.s32.totalorder %s50, %s53
    %p62 = scmp.eq.s32.totalorder %s15, 7
    %p63 = por %p61, %p62
    %p64 = scmp.ne.s32.totalorder %s53, %s54
    %p65 = scmp.eq.s32.totalorder %s15, 0
    %p66 = por %p64, %p65
    %p67 = scmp.ne.s32.totalorder %s53, %s54
    %p68 = scmp.eq.s32.totalorder %s16, 7
    %p69 = por %p67, %p68
    %p71 = scmp.ne.s32.totalorder %s54, %s70
    %p72 = scmp.eq.s32.totalorder %s16, 0
    %p73 = por %p71, %p72
    %s74 = ssub.s32 %s18, %s39
    %s75 = ssub.s32 %s17, %s43
    %s76 = sor.u32 %s74, %s75
    %s77 = ssub.s32 %s20, %s31
    %s78 = sor.u32 %s76, %s77
    %p79 = scmp.eq.s32.totalorder %s78, 0
    %s81 = sadd.s32 %s80, 1
    %s82 = scalar_select %p79, %s80, %s81
    %p85 = pneg %p79
    %p86 = scmp.eq.s32.totalorder %s10, 7
    %p87 = por %p85, %p86
    %p88 = scmp.ne.s32.totalorder %s80, %s83
    %p89 = scmp.eq.s32.totalorder %s10, 0
    %p90 = por %p88, %p89
    %p91 = scmp.ne.s32.totalorder %s80, %s83
    %p92 = scmp.eq.s32.totalorder %s15, 7
    %p93 = por %p91, %p92
    %p94 = scmp.ne.s32.totalorder %s83, %s84
    %p95 = scmp.eq.s32.totalorder %s15, 0
    %p96 = por %p94, %p95
    %p97 = scmp.ne.s32.totalorder %s83, %s84
    %p98 = scmp.eq.s32.totalorder %s16, 7
    %p99 = por %p97, %p98
    %p101 = scmp.ne.s32.totalorder %s84, %s100
    %p102 = scmp.eq.s32.totalorder %s16, 0
    %p103 = por %p101, %p102
    %s104 = ssub.s32 %s18, %s39
    %s105 = ssub.s32 %s17, %s43
    %s106 = sor.u32 %s104, %s105
    %s107 = ssub.s32 %s20, %s31
    %s108 = sor.u32 %s106, %s107
    %p109 = scmp.eq.s32.totalorder %s108, 0
    %s111 = sadd.s32 %s110, 1
    %s112 = scalar_select %p109, %s110, %s111
    %p115 = pneg %p109
    %p116 = scmp.eq.s32.totalorder %s10, 7
    %p117 = por %p115, %p116
    %p118 = scmp.ne.s32.totalorder %s110, %s113
    %p119 = scmp.eq.s32.totalorder %s10, 0
    %p120 = por %p118, %p119
    %p121 = scmp.ne.s32.totalorder %s110, %s113
    %p122 = scmp.eq.s32.totalorder %s15, 7
    %p123 = por %p121, %p122
    %p124 = scmp.ne.s32.totalorder %s113, %s114
    %p125 = scmp.eq.s32.totalorder %s15, 0
    %p126 = por %p124, %p125
    %p127 = scmp.ne.s32.totalorder %s113, %s114
    %p128 = scmp.eq.s32.totalorder %s16, 7
    %p129 = por %p127, %p128
    %p131 = scmp.ne.s32.totalorder %s114, %s130
    %p132 = scmp.eq.s32.totalorder %s16, 0
    %p133 = por %p131, %p132
    %s134 = ssub.s32 %s17, %s43
    %s135 = ssub.s32 %s19, %s35
    %s136 = sor.u32 %s134, %s135
    %s137 = ssub.s32 %s20, %s31
    %s138 = sor.u32 %s136, %s137
    %p139 = scmp.eq.s32.totalorder %s138, 0
    %s141 = sadd.s32 %s140, 1
    %s142 = scalar_select %p139, %s140, %s141
    %p145 = pneg %p139
    %p146 = scmp.eq.s32.totalorder %s10, 7
    %p147 = por %p145, %p146
    %p148 = scmp.ne.s32.totalorder %s140, %s143
    %p149 = scmp.eq.s32.totalorder %s10, 0
    %p150 = por %p148, %p149
    %p151 = scmp.ne.s32.totalorder %s140, %s143
    %p152 = scmp.eq.s32.totalorder %s15, 7
    %p153 = por %p151, %p152
    %p154 = scmp.ne.s32.totalorder %s143, %s144
    %p155 = scmp.eq.s32.totalorder %s15, 0
    %p156 = por %p154, %p155
    %p157 = scmp.ne.s32.totalorder %s143, %s144
    %p158 = scmp.eq.s32.totalorder %s16, 7
    %p159 = por %p157, %p158
    %p161 = scmp.ne.s32.totalorder %s144, %s160
    %p162 = scmp.eq.s32.totalorder %s16, 0
    %p163 = por %p161, %p162
    %s164 = ssub.s32 %s18, %s39
    %s165 = ssub.s32 %s17, %s43
    %s166 = sor.u32 %s164, %s165
    %s167 = ssub.s32 %s19, %s35
    %s168 = sor.u32 %s166, %s167
    %p169 = scmp.eq.s32.totalorder %s168, 0
    %s171 = sadd.s32 %s170, 1
    %s172 = scalar_select %p169, %s170, %s171
    %p175 = pneg %p169
    %p176 = scmp.eq.s32.totalorder %s10, 7
    %p177 = por %p175, %p176
    %p178 = scmp.ne.s32.totalorder %s170, %s173
    %p179 = scmp.eq.s32.totalorder %s10, 0
    %p180 = por %p178, %p179
    %p181 = scmp.ne.s32.totalorder %s170, %s173
    %p182 = scmp.eq.s32.totalorder %s15, 7
    %p183 = por %p181, %p182
    %p184 = scmp.ne.s32.totalorder %s173, %s174
    %p185 = scmp.eq.s32.totalorder %s15, 0
    %p186 = por %p184, %p185
    %p187 = scmp.ne.s32.totalorder %s173, %s174
    %p188 = scmp.eq.s32.totalorder %s16, 7
    %p189 = por %p187, %p188
    %p191 = scmp.ne.s32.totalorder %s174, %s190
    %p192 = scmp.eq.s32.totalorder %s16, 0
    %p193 = por %p191, %p192
    %p194 = scmp.le.s32.totalorder 1, %s10
    %p195 = scmp.lt.s32.totalorder %s10, 9
    %p196 = pnand %p194, %p195
    %p197 = pneg %p196
    // Predicated region
    $region9: #{decoder_forward.18} parent=5 // pred_check
      _
    $region10: #{decoder_forward.18} parent=5 // pred_check_branch
      %199 = sbr.rel (%p196) target = $region12
    $region11: #{decoder_forward.18} parent=5 // pred_region
      %s200 = ssub.s32 %s10, 1
    $region12: #{decoder_forward.18} parent=5 // pred_fallthru
      _
    %p201 = scmp.lt.s32.totalorder %s10, 8
    // Predicated region
    $region13: #{decoder_forward.18} parent=5 // pred_check
      %p202 = pneg %p201
    $region14: #{decoder_forward.18} parent=5 // pred_check_branch
      %204 = sbr.rel (%p202) target = $region16
    $region15: #{decoder_forward.18} parent=5 // pred_region
      // Predicated region
      $region17: #{decoder_forward.18} parent=15 // pred_check
        %p205 = pneg %p60
      $region18: #{decoder_forward.18} parent=15 // pred_check_branch
        %207 = sbr.rel (%p205) target = $region20
      $region19: #{decoder_forward.18} parent=15 // pred_region
        %p208 = scmp.lt.s32.totalorder %s18, 3
        %s209 = scalar_select %p208, %s18, 3
        %p210 = scmp.lt.s32.totalorder %s17, 1
        %s211 = scalar_select %p210, %s17, 1
        %p212 = scmp.lt.s32.totalorder %s19, 0
        %s213 = scalar_select %p212, %s19, 0
        %s214 = sadd.s32 %s213, %s211
        %s215 = smul.addr %s209, 2
        %s216 = sadd.s32 %s214, %s215
        %s217 = smul.addr %s216, 8
        %s218 = scalar_lea.vmem %s0, %s217
      $region20: #{decoder_forward.18} parent=15 // pred_fallthru
        _
      // Predicated region
      $region21: #{decoder_forward.18} parent=15 // pred_check
        %p219 = pneg %p90
      $region22: #{decoder_forward.18} parent=15 // pred_check_branch
        %221 = sbr.rel (%p219) target = $region24
      $region23: #{decoder_forward.18} parent=15 // pred_region
        %p222 = scmp.lt.s32.totalorder %s18, 3
        %s223 = scalar_select %p222, %s18, 3
        %p224 = scmp.lt.s32.totalorder %s17, 1
        %s225 = scalar_select %p224, %s17, 1
        %p226 = scmp.lt.s32.totalorder %s20, 0
        %s227 = scalar_select %p226, %s20, 0
        %s228 = sadd.s32 %s227, %s225
        %s229 = smul.addr %s223, 2
        %s230 = sadd.s32 %s228, %s229
        %s231 = sadd.s32 %s230, 8
        %s232 = smul.addr %s231, 8
        %s233 = scalar_lea.vmem %s1, %s232
      $region24: #{decoder_forward.18} parent=15 // pred_fallthru
        _
      // Predicated region
      $region25: #{decoder_forward.18} parent=15 // pred_check
        %p234 = pneg %p120
      $region26: #{decoder_forward.18} parent=15 // pred_check_branch
        %236 = sbr.rel (%p234) target = $region28
      $region27: #{decoder_forward.18} parent=15 // pred_region
        %p237 = scmp.lt.s32.totalorder %s18, 3
        %s238 = scalar_select %p237, %s18, 3
        %p239 = scmp.lt.s32.totalorder %s17, 1
        %s240 = scalar_select %p239, %s17, 1
        %p241 = scmp.lt.s32.totalorder %s20, 0
        %s242 = scalar_select %p241, %s20, 0
        %s243 = sadd.s32 %s242, %s240
        %s244 = smul.addr %s238, 2
        %s245 = sadd.s32 %s243, %s244
        %s246 = sadd.s32 %s245, 16
        %s247 = smul.addr %s246, 8
        %s248 = scalar_lea.vmem %s2, %s247
      $region28: #{decoder_forward.18} parent=15 // pred_fallthru
        _
      // Predicated region
      $region29: #{decoder_forward.18} parent=15 // pred_check
        %p249 = pneg %p150
      $region30: #{decoder_forward.18} parent=15 // pred_check_branch
        %251 = sbr.rel (%p249) target = $region32
      $region31: #{decoder_forward.18} parent=15 // pred_region
        %p252 = scmp.lt.s32.totalorder %s17, 1
        %s253 = scalar_select %p252, %s17, 1
        %p254 = scmp.lt.s32.totalorder %s19, 0
        %s255 = scalar_select %p254, %s19, 0
        %p256 = scmp.lt.s32.totalorder %s20, 0
        %s257 = scalar_select %p256, %s20, 0
        %s258 = sadd.s32 %s257, %s255
        %s259 = sadd.s32 %s258, %s253
        %s260 = smul.addr %s259, 8
        %s261 = scalar_lea.vmem %s3, %s260
      $region32: #{decoder_forward.18} parent=15 // pred_fallthru
        _
    $region16: #{decoder_forward.18} parent=5 // pred_fallthru
      _
    %p262 = scmp.le.s32.totalorder 1, %s10
    %p263 = scmp.lt.s32.totalorder %s10, 9
    %p264 = pnand %p262, %p263
    %p265 = pneg %p264
    // Predicated region
    $region33: #{decoder_forward.18} parent=5 // pred_check
      _
    $region34: #{decoder_forward.18} parent=5 // pred_check_branch
      %267 = sbr.rel (%p264) target = $region36
    $region35: #{decoder_forward.18} parent=5 // pred_region
      %s268 = ssub.s32 %s10, 1
      %p269 = scmp.lt.s32.totalorder %s22, 3
      %s270 = scalar_select %p269, %s22, 3
      %p271 = scmp.lt.s32.totalorder %s21, 1
      %s272 = scalar_select %p271, %s21, 1
      %p273 = scmp.lt.s32.totalorder %s23, 0
      %s274 = scalar_select %p273, %s23, 0
      %s275 = sadd.s32 %s274, %s272
      %s276 = smul.addr %s270, 2
      %s277 = sadd.s32 %s275, %s276
      %s278 = smul.addr %s277, 8
      %s279 = scalar_lea.vmem %s0, %s278
      %p280 = pneg %p66
      %p281 = pneg %p63
      %p282 = scmp.lt.s32.totalorder %s22, 3
      %s283 = scalar_select %p282, %s22, 3
      %p284 = scmp.lt.s32.totalorder %s21, 1
      %s285 = scalar_select %p284, %s21, 1
      %p286 = scmp.lt.s32.totalorder %s24, 0
      %s287 = scalar_select %p286, %s24, 0
      %s288 = sadd.s32 %s287, %s285
      %s289 = smul.addr %s283, 2
      %s290 = sadd.s32 %s288, %s289
      %s291 = sadd.s32 %s290, 8
      %s292 = smul.addr %s291, 8
      %s293 = scalar_lea.vmem %s1, %s292
      %p294 = pneg %p96
      %p295 = pneg %p93
      %p296 = scmp.lt.s32.totalorder %s22, 3
      %s297 = scalar_select %p296, %s22, 3
      %p298 = scmp.lt.s32.totalorder %s21, 1
      %s299 = scalar_select %p298, %s21, 1
      %p300 = scmp.lt.s32.totalorder %s24, 0
      %s301 = scalar_select %p300, %s24, 0
      %s302 = sadd.s32 %s301, %s299
      %s303 = smul.addr %s297, 2
      %s304 = sadd.s32 %s302, %s303
      %s305 = sadd.s32 %s304, 16
      %s306 = smul.addr %s305, 8
      %s307 = scalar_lea.vmem %s2, %s306
      %p308 = pneg %p126
      %p309 = pneg %p123
      %p310 = scmp.lt.s32.totalorder %s21, 1
      %s311 = scalar_select %p310, %s21, 1
      %p312 = scmp.lt.s32.totalorder %s23, 0
      %s313 = scalar_select %p312, %s23, 0
      %p314 = scmp.lt.s32.totalorder %s24, 0
      %s315 = scalar_select %p314, %s24, 0
      %s316 = sadd.s32 %s315, %s313
      %s317 = sadd.s32 %s316, %s311
      %s318 = smul.addr %s317, 8
      %s319 = scalar_lea.vmem %s3, %s318
      %p320 = pneg %p156
      %p321 = pneg %p153
      %p322 = pneg %p186
      %p323 = pneg %p183
      %p324 = scmp.lt.s32.totalorder %s22, 3
      %s325 = scalar_select %p324, %s22, 3
      %p326 = scmp.lt.s32.totalorder %s21, 1
      %s327 = scalar_select %p326, %s21, 1
      %p328 = scmp.lt.s32.totalorder %s23, 0
      %s329 = scalar_select %p328, %s23, 0
      %s330 = sadd.s32 %s329, %s327
      %s331 = smul.addr %s325, 2
      %s332 = sadd.s32 %s330, %s331
      %s333 = smul.addr %s332, 8
      %s334 = scalar_lea.vmem %s4, %s333
      %p335 = scmp.lt.s32.totalorder %s22, 3
      %s336 = scalar_select %p335, %s22, 3
      %p337 = scmp.lt.s32.totalorder %s21, 1
      %s338 = scalar_select %p337, %s21, 1
      %p339 = scmp.lt.s32.totalorder %s23, 0
      %s340 = scalar_select %p339, %s23, 0
      %s341 = sadd.s32 %s340, %s338
      %s342 = smul.addr %s336, 2
      %s343 = sadd.s32 %s341, %s342
      %s344 = smul.addr %s343, 8
      %s345 = scalar_lea.vmem %s0, %s344
      %p346 = scmp.lt.s32.totalorder %s22, 3
      %s347 = scalar_select %p346, %s22, 3
      %p348 = scmp.lt.s32.totalorder %s21, 1
      %s349 = scalar_select %p348, %s21, 1
      %p350 = scmp.lt.s32.totalorder %s24, 0
      %s351 = scalar_select %p350, %s24, 0
      %s352 = sadd.s32 %s351, %s349
      %s353 = smul.addr %s347, 2
      %s354 = sadd.s32 %s352, %s353
      %s355 = sadd.s32 %s354, 8
      %s356 = smul.addr %s355, 8
      %s357 = scalar_lea.vmem %s1, %s356
      %p358 = scmp.lt.s32.totalorder %s22, 3
      %s359 = scalar_select %p358, %s22, 3
      %p360 = scmp.lt.s32.totalorder %s21, 1
      %s361 = scalar_select %p360, %s21, 1
      %p362 = scmp.lt.s32.totalorder %s24, 0
      %s363 = scalar_select %p362, %s24, 0
      %s364 = sadd.s32 %s363, %s361
      %s365 = smul.addr %s359, 2
      %s366 = sadd.s32 %s364, %s365
      %s367 = sadd.s32 %s366, 16
      %s368 = smul.addr %s367, 8
      %s369 = scalar_lea.vmem %s2, %s368
      %p370 = scmp.lt.s32.totalorder %s21, 1
      %s371 = scalar_select %p370, %s21, 1
      %p372 = scmp.lt.s32.totalorder %s23, 0
      %s373 = scalar_select %p372, %s23, 0
      %p374 = scmp.lt.s32.totalorder %s24, 0
      %s375 = scalar_select %p374, %s24, 0
      %s376 = sadd.s32 %s375, %s373
      %s377 = sadd.s32 %s376, %s371
      %s378 = smul.addr %s377, 8
      %s379 = scalar_lea.vmem %s3, %s378
      %p380 = scmp.lt.s32.totalorder %s22, 3
      %s381 = scalar_select %p380, %s22, 3
      %p382 = scmp.lt.s32.totalorder %s21, 1
      %s383 = scalar_select %p382, %s21, 1
      %p384 = scmp.lt.s32.totalorder %s23, 0
      %s385 = scalar_select %p384, %s23, 0
      %s386 = sadd.s32 %s385, %s383
      %s387 = smul.addr %s381, 2
      %s388 = sadd.s32 %s386, %s387
      %s389 = smul.addr %s388, 8
      %s390 = scalar_lea.vmem %s4, %s389
      %p391 = scmp.eq.s32.totalorder %s24, 0
      // Predicated region
      $region37: #{decoder_forward.18} parent=35 // pred_check
        %p392 = pneg %p391
      $region38: #{decoder_forward.18} parent=35 // pred_check_branch
        %394 = sbr.rel (%p392) target = $region40
      $region39: #{decoder_forward.18} parent=35 // pred_region
        %vm395 = vcmask 7168
        %396 = vst.msk [vmem:[#allocation2] sm:$0xff] %vm395, -inf
        %397 = vst.msk [vmem:[#allocation3] sm:$0xff] %vm395, 0.0
        %vm398 = vcmask 64512
        %399 = vst.msk [vmem:[#allocation4] sm:$0xff] %vm398, 0.0
      $region40: #{decoder_forward.18} parent=35 // pred_fallthru
        _
      %v400 = vld [vmem:[%s345] sm:$0xff]
      %v401 = vld [vmem:[%s357] sm:$0xff]
      %v402 = vld [vmem:[%s369] sm:$0xff]
      %vm403 = vcmask 64512
      %v405 = vsel %vm403, %v400, 0
      %v408 = vsel %vm403, %v401, 0
      %410 = vmatprep.subr.mxu0 0.0
      %411 = vmatpush1.xpose.msra.mxu0 %v408
      %412 = vmatprep.subr.mxu0 0.0
      %413 = vmatpush1.xpose.msra.mxu0 0.0
      %414 = vmatprep.subr.mxu0 0.0
      %415 = vmatpush1.xpose.msra.mxu0 0.0
      %416 = vmatprep.subr.mxu0 0.0
      %417 = vmatpush1.xpose.msra.mxu0 0.0
      %418 = vmatprep.subr.mxu0 0.0
      %419 = vmatpush1.xpose.msra.mxu0 0.0
      %420 = vmatprep.subr.mxu0 0.0
      %421 = vmatpush1.xpose.msra.mxu0 0.0
      %422 = vmatprep.subr.mxu0 0.0
      %423 = vmatpush1.xpose.msra.mxu0 0.0
      %424 = vmatprep.subr.mxu0 0.0
      %425 = vmatpush1.xpose.msra.mxu0 0.0
      %426 = vmatprep.subr.mxu0 0.0
      %427 = vmatpush1.xpose.msra.mxu0 0.0
      %428 = vmatprep.subr.mxu0 0.0
      %429 = vmatpush1.xpose.msra.mxu0 0.0
      %430 = vmatprep.subr.mxu0 0.0
      %431 = vmatpush1.xpose.msra.mxu0 0.0
      %432 = vmatprep.subr.mxu0 0.0
      %433 = vmatpush1.xpose.msra.mxu0 0.0
      %434 = vmatprep.subr.mxu0 0.0
      %435 = vmatpush1.xpose.msra.mxu0 0.0
      %436 = vmatprep.subr.mxu0 0.0
      %437 = vmatpush1.xpose.msra.mxu0 0.0
      %438 = vmatprep.subr.mxu0 0.0
      %439 = vmatpush1.xpose.msra.mxu0 0.0
      %440 = vmatprep.subr.mxu0 0.0
      %441 = vmatpush1.xpose.msra.mxu0 0.0
      %442 = vmatprep.subr.mxu0 0.0
      %443 = vmatpush1.xpose.msra.mxu0 0.0
      %444 = vmatprep.subr.mxu0 0.0
      %445 = vmatpush1.xpose.msra.mxu0 0.0
      %446 = vmatprep.subr.mxu0 0.0
      %447 = vmatpush1.xpose.msra.mxu0 0.0
      %448 = vmatprep.subr.mxu0 0.0
      %449 = vmatpush1.xpose.msra.mxu0 0.0
      %450 = vmatprep.subr.mxu0 0.0
      %451 = vmatpush1.xpose.msra.mxu0 0.0
      %452 = vmatprep.subr.mxu0 0.0
      %453 = vmatpush1.xpose.msra.mxu0 0.0
      %454 = vmatprep.subr.mxu0 0.0
      %455 = vmatpush1.xpose.msra.mxu0 0.0
      %456 = vmatprep.subr.mxu0 0.0
      %457 = vmatpush1.xpose.msra.mxu0 0.0
      %458 = vmatprep.subr.mxu0 0.0
      %459 = vmatpush1.xpose.msra.mxu0 0.0
      %460 = vmatprep.subr.mxu0 0.0
      %461 = vmatpush1.xpose.msra.mxu0 0.0
      %462 = vmatprep.subr.mxu0 0.0
      %463 = vmatpush1.xpose.msra.mxu0 0.0
      %464 = vmatprep.subr.mxu0 0.0
      %465 = vmatpush1.xpose.msra.mxu0 0.0
      %466 = vmatprep.subr.mxu0 0.0
      %467 = vmatpush1.xpose.msra.mxu0 0.0
      %468 = vmatprep.subr.mxu0 0.0
      %469 = vmatpush1.xpose.msra.mxu0 0.0
      %470 = vmatprep.subr.mxu0 0.0
      %471 = vmatpush1.xpose.msra.mxu0 0.0
      %472 = vmatprep.subr.mxu0 0.0
      %473 = vmatpush1.xpose.msra.mxu0 0.0
      %474 = vmatprep.mubr.f32.mxu0 0.0
      %475 = vmatmul.mubr.f32.gmra.mrb[0].mxu0 %v405
      %v476 = vpop.f32.mrb[0].mxu0
      %v477 = vadd.f32 0.0, %v476
      %v478 = vpop.f32.mrb[0].mxu0
      %479 = vdwg.mxu0
      %v480 = vld [vmem:[%s379] sm:$0xff]
      %vm481 = vcmp.eq.f32.partialorder %v480, 0.0
      %v482 = vsel %vm481, -1e+09, %v477
      %v483 = vld [vmem:[#allocation2] sm:$0xff]
      %v484 = vsel %vm403, %v482, -inf
      %485 = vmax.xlane.f32.xlu0 %v484
      %v486 = vpop.xlane.xlu0 %485
      %v487 = vmax.f32 %v483, %v486
      %v488 = vsub.f32 %v483, %v487
      %v489 = vmul.f32 %v488, 1.442695
      %v490 = vpow.pop %v489
      %492 = vset.pattern.permute.xlu0 0
      %493 = vperm.xlu0 %492, %v487
      %v494 = vpop.permute.xlu0 %493
      %v496 = vsub.f32 %v482, %v494
      %v497 = vmul.f32 %v496, 1.442695
      %v498 = vpow.pop %v497
      %v499 = vld [vmem:[#allocation3] sm:$0xff]
      %v500 = vmul.f32 %v490, %v499
      %v501 = vsel %vm403, %v498, 0.0
      %502 = vadd.xlane.f32.xlu0 %v501
      %v503 = vpop.xlane.xlu0 %502
      %v504 = vadd.f32 %v500, %v503
      %vm505 = vcmask 7168
      %506 = vst.msk [vmem:[#allocation3] sm:$0xff] %vm505, %v504
      %v507 = vld [vmem:[#allocation4] sm:$0xff]
      %509 = vset.pattern.permute.xlu0 0
      %510 = vperm.xlu0 %509, %v490
      %v511 = vpop.permute.xlu0 %510
      %v513 = vmul.f32 %v511, %v507
      %v515 = vsel %vm403, %v498, 0
      %517 = vmatprep.subr.mxu0 0.0
      %518 = vmatpush1.msra.mxu0 %v402
      %519 = vmatprep.subr.mxu0 0.0
      %520 = vmatpush1.msra.mxu0 0.0
      %521 = vmatprep.subr.mxu0 0.0
      %522 = vmatpush1.msra.mxu0 0.0
      %523 = vmatprep.subr.mxu0 0.0
      %524 = vmatpush1.msra.mxu0 0.0
      %525 = vmatprep.subr.mxu0 0.0
      %526 = vmatpush1.msra.mxu0 0.0
      %527 = vmatprep.subr.mxu0 0.0
      %528 = vmatpush1.msra.mxu0 0.0
      %529 = vmatprep.subr.mxu0 0.0
      %530 = vmatpush1.msra.mxu0 0.0
      %531 = vmatprep.subr.mxu0 0.0
      %532 = vmatpush1.msra.mxu0 0.0
      %533 = vmatprep.subr.mxu0 0.0
      %534 = vmatpush1.msra.mxu0 0.0
      %535 = vmatprep.subr.mxu0 0.0
      %536 = vmatpush1.msra.mxu0 0.0
      %537 = vmatprep.subr.mxu0 0.0
      %538 = vmatpush1.msra.mxu0 0.0
      %539 = vmatprep.subr.mxu0 0.0
      %540 = vmatpush1.msra.mxu0 0.0
      %541 = vmatprep.subr.mxu0 0.0
      %542 = vmatpush1.msra.mxu0 0.0
      %543 = vmatprep.subr.mxu0 0.0
      %544 = vmatpush1.msra.mxu0 0.0
      %545 = vmatprep.subr.mxu0 0.0
      %546 = vmatpush1.msra.mxu0 0.0
      %547 = vmatprep.subr.mxu0 0.0
      %548 = vmatpush1.msra.mxu0 0.0
      %549 = vmatprep.subr.mxu0 0.0
      %550 = vmatpush1.msra.mxu0 0.0
      %551 = vmatprep.subr.mxu0 0.0
      %552 = vmatpush1.msra.mxu0 0.0
      %553 = vmatprep.subr.mxu0 0.0
      %554 = vmatpush1.msra.mxu0 0.0
      %555 = vmatprep.subr.mxu0 0.0
      %556 = vmatpush1.msra.mxu0 0.0
      %557 = vmatprep.subr.mxu0 0.0
      %558 = vmatpush1.msra.mxu0 0.0
      %559 = vmatprep.subr.mxu0 0.0
      %560 = vmatpush1.msra.mxu0 0.0
      %561 = vmatprep.subr.mxu0 0.0
      %562 = vmatpush1.msra.mxu0 0.0
      %563 = vmatprep.subr.mxu0 0.0
      %564 = vmatpush1.msra.mxu0 0.0
      %565 = vmatprep.subr.mxu0 0.0
      %566 = vmatpush1.msra.mxu0 0.0
      %567 = vmatprep.subr.mxu0 0.0
      %568 = vmatpush1.msra.mxu0 0.0
      %569 = vmatprep.subr.mxu0 0.0
      %570 = vmatpush1.msra.mxu0 0.0
      %571 = vmatprep.subr.mxu0 0.0
      %572 = vmatpush1.msra.mxu0 0.0
      %573 = vmatprep.subr.mxu0 0.0
      %574 = vmatpush1.msra.mxu0 0.0
      %575 = vmatprep.subr.mxu0 0.0
      %576 = vmatpush1.msra.mxu0 0.0
      %577 = vmatprep.subr.mxu0 0.0
      %578 = vmatpush1.msra.mxu0 0.0
      %579 = vmatprep.subr.mxu0 0.0
      %580 = vmatpush1.msra.mxu0 0.0
      %581 = vmatprep.mubr.f32.mxu0 0.0
      %582 = vmatmul.mubr.f32.gmra.mrb[0].mxu0 %v515
      %v583 = vpop.f32.mrb[0].mxu0
      %v584 = vadd.f32 0.0, %v583
      %v585 = vpop.f32.mrb[0].mxu0
      %586 = vdwg.mxu0
      %v587 = vadd.f32 %v513, %v584
      %588 = vst.msk [vmem:[#allocation4] sm:$0xff] %vm403, %v587
      %589 = vst.msk [vmem:[#allocation2] sm:$0xff] %vm505, %v487
      // Predicated region
      $region41: #{decoder_forward.18} parent=35 // pred_check
        %p590 = pneg %p391
      $region42: #{decoder_forward.18} parent=35 // pred_check_branch
        %592 = sbr.rel (%p590) target = $region44
      $region43: #{decoder_forward.18} parent=35 // pred_region
        %v593 = vld [vmem:[#allocation3] sm:$0xff]
        %v594 = vrcp.pop %v593
        %v595 = vmul.f32 1.0, %v594
        %v596 = vld [vmem:[#allocation4] sm:$0xff]
        %598 = vset.pattern.permute.xlu0 0
        %599 = vperm.xlu0 %598, %v595
        %v600 = vpop.permute.xlu0 %599
        %v602 = vmul.f32 %v596, %v600
        %603 = vst.msk [vmem:[%s390] sm:$0xff] %vm403, %v602
      $region44: #{decoder_forward.18} parent=35 // pred_fallthru
        _
      %p604 = scmp.lt.s32.totalorder %s22, 3
      %s605 = scalar_select %p604, %s22, 3
      %p606 = scmp.lt.s32.totalorder %s21, 1
      %s607 = scalar_select %p606, %s21, 1
      %p608 = scmp.lt.s32.totalorder %s23, 0
      %s609 = scalar_select %p608, %s23, 0
      %s610 = sadd.s32 %s609, %s607
      %s611 = smul.addr %s605, 2
      %s612 = sadd.s32 %s610, %s611
      %s613 = smul.addr %s612, 8
      %s614 = scalar_lea.vmem %s4, %s613
      // Predicated region
      $region45: #{decoder_forward.18} parent=35 // pred_check
        %p615 = pneg %p183
      $region46: #{decoder_forward.18} parent=35 // pred_check_branch
        %617 = sbr.rel (%p615) target = $region48
      $region47: #{decoder_forward.18} parent=35 // pred_region
        _
      $region48: #{decoder_forward.18} parent=35 // pred_fallthru
        _
    $region36: #{decoder_forward.18} parent=5 // pred_fallthru
      _
    %p618 = scmp.le.s32.totalorder 2, %s10
    // Predicated region
    $region49: #{decoder_forward.18} parent=5 // pred_check
      %p619 = pneg %p618
    $region50: #{decoder_forward.18} parent=5 // pred_check_branch
      %621 = sbr.rel (%p619) target = $region52
    $region51: #{decoder_forward.18} parent=5 // pred_region
      %s622 = ssub.s32 %s10, 2
      // Predicated region
      $region53: #{decoder_forward.18} parent=51 // pred_check
        %p623 = pneg %p189
      $region54: #{decoder_forward.18} parent=51 // pred_check_branch
        %625 = sbr.rel (%p623) target = $region56
      $region55: #{decoder_forward.18} parent=51 // pred_region
        %p626 = scmp.lt.s32.totalorder %s26, 3
        %s627 = scalar_select %p626, %s26, 3
        %p628 = scmp.lt.s32.totalorder %s25, 1
        %s629 = scalar_select %p628, %s25, 1
        %p630 = scmp.lt.s32.totalorder %s27, 0
        %s631 = scalar_select %p630, %s27, 0
        %s632 = sadd.s32 %s631, %s629
        %s633 = smul.addr %s627, 2
        %s634 = sadd.s32 %s632, %s633
        %s635 = smul.addr %s634, 8
        %s636 = scalar_lea.vmem %s4, %s635
      $region56: #{decoder_forward.18} parent=51 // pred_fallthru
        _
    $region52: #{decoder_forward.18} parent=5 // pred_fallthru
      _
  $region6: #{decoder_forward.18} parent=0 // loop_footer
    %s14 = sadd.s32 1, %s10
  $region7: #{decoder_forward.18} parent=0 // loop_footer_branch
    %9 = sbr.rel target = $region3
  $region8: #{decoder_forward.18} parent=0 // loop_exit
    _

// kernel: decoder_forward.17
$region0: #{decoder_forward.17}
  #allocation0 [shape = 'u32[]', space=smem, size = 0x4, offset = 0x4, fixed_abs, tag = 'smem constant byte address 0x4 - core index']
  #allocation1 [shape = 'u32[144,128]{1,0:T(1,128)}', space=vmem, size = 0x12000, scoped, tag = 'internal scratch']
  #allocation2 [shape = 'f32[16,32]{1,0:T(8,128)}', space=vmem, size = 0x2000, scoped, tag = 'scratch operand']
  %s0 = inlined_call_operand.vmem [shape: f32[16,32], index: 0, kind: input, shape index: {}]
  %s1 = inlined_call_operand.vmem [shape: f32[1,32], index: 1, kind: input, shape index: {}]
  %s2 = inlined_call_operand.vmem [shape: f32[1,32], index: 2, kind: input, shape index: {}]
  %s3 = inlined_call_operand.vmem [shape: f32[12,32,8], index: 3, kind: input, shape index: {}]
  %s4 = inlined_call_operand.vmem [shape: f32[12,1,8], index: 4, kind: input, shape index: {}]
  %s5 = inlined_call_operand.vmem [shape: f32[12,16,8], index: 5, kind: output, shape index: {}]
  %s6 = sld [smem:[#allocation0]]
  $region57: #{decoder_forward.17} parent=0
    _
  %s8 = ssub.s32 1, %s6
  %s9 = scalar_select 0, %s8, %s6
  loop: start=0, step=1, limit=14
  $region2: #{decoder_forward.17} parent=0 // loop_pre_header
    _
  $region3: #{decoder_forward.17} parent=0 // loop_header
    %s11 = sphi 0, %s15
    %p12 = scmp.ge.s32.totalorder %s11, 14
    %s18 = sphi 0, %s30
    %s19 = sphi 0, %s26
    %s20 = sphi 0, %s18
    %s21 = sphi 0, %s19
    %s22 = sphi 0, %s20
    %s23 = sphi 0, %s21
    %s33 = sphi 0, %s35
    %s36 = sphi 0, %s33
    %s37 = sphi 0, %s36
    %s53 = sphi 0, %s37
    %s57 = sphi 0, %s57
    %s59 = sphi 0, %s57
    %s60 = sphi 0, %s59
    %s74 = sphi 0, %s60
    %s78 = sphi 0, %s78
    %s80 = sphi 0, %s78
    %s81 = sphi 0, %s80
    %s95 = sphi 0, %s81
    %s101 = sphi 0, %s103
    %s104 = sphi 0, %s101
    %s105 = sphi 0, %s104
    %s121 = sphi 0, %s105
    %s127 = sphi 0, %s129
    %s130 = sphi 0, %s127
    %s131 = sphi 0, %s130
    %s147 = sphi 0, %s131
    %s155 = sphi 0, %s157
    %s158 = sphi 0, %s155
    %s159 = sphi 0, %s158
    %s175 = sphi 0, %s159
  $region4: #{decoder_forward.17} parent=0 // loop_header_branch
    %14 = sbr.rel (%p12) target = $region8
  $region5: #{decoder_forward.17} parent=0 // loop_body
    %s16 = ssub.s32 %s11, 1
    %s17 = ssub.s32 %s11, 2
    %s24 = sadd.s32 1, %s19
    %p25 = scmp.ge.s32.totalorder %s24, 12
    %s26 = scalar_select %p25, 0, %s24
    %s27 = sadd.s32 1, %s18
    %s28 = scalar_select %p25, %s27, %s18
    %p29 = scmp.ge.s32.totalorder %s28, 1
    %s30 = scalar_select %p29, 0, %s28
    %s31 = ssub.s32 %s18, %s30
    %p32 = scmp.eq.s32.totalorder %s31, 0
    %s34 = sadd.s32 %s33, 1
    %s35 = scalar_select %p32, %s33, %s34
    %p38 = pneg %p32
    %p39 = scmp.eq.s32.totalorder %s11, 11
    %p40 = por %p38, %p39
    %p41 = scmp.ne.s32.totalorder %s33, %s36
    %p42 = scmp.eq.s32.totalorder %s11, 0
    %p43 = por %p41, %p42
    %p44 = scmp.ne.s32.totalorder %s33, %s36
    %p45 = scmp.eq.s32.totalorder %s16, 11
    %p46 = por %p44, %p45
    %p47 = scmp.ne.s32.totalorder %s36, %s37
    %p48 = scmp.eq.s32.totalorder %s16, 0
    %p49 = por %p47, %p48
    %p50 = scmp.ne.s32.totalorder %s36, %s37
    %p51 = scmp.eq.s32.totalorder %s17, 11
    %p52 = por %p50, %p51
    %p54 = scmp.ne.s32.totalorder %s37, %s53
    %p55 = scmp.eq.s32.totalorder %s17, 0
    %p56 = por %p54, %p55
    %s58 = sadd.s32 %s57, 1
    %p61 = scmp.eq.s32.totalorder %s11, 11
    %p62 = scmp.ne.s32.totalorder %s57, %s59
    %p63 = scmp.eq.s32.totalorder %s11, 0
    %p64 = por %p62, %p63
    %p65 = scmp.ne.s32.totalorder %s57, %s59
    %p66 = scmp.eq.s32.totalorder %s16, 11
    %p67 = por %p65, %p66
    %p68 = scmp.ne.s32.totalorder %s59, %s60
    %p69 = scmp.eq.s32.totalorder %s16, 0
    %p70 = por %p68, %p69
    %p71 = scmp.ne.s32.totalorder %s59, %s60
    %p72 = scmp.eq.s32.totalorder %s17, 11
    %p73 = por %p71, %p72
    %p75 = scmp.ne.s32.totalorder %s60, %s74
    %p76 = scmp.eq.s32.totalorder %s17, 0
    %p77 = por %p75, %p76
    %s79 = sadd.s32 %s78, 1
    %p82 = scmp.eq.s32.totalorder %s11, 11
    %p83 = scmp.ne.s32.totalorder %s78, %s80
    %p84 = scmp.eq.s32.totalorder %s11, 0
    %p85 = por %p83, %p84
    %p86 = scmp.ne.s32.totalorder %s78, %s80
    %p87 = scmp.eq.s32.totalorder %s16, 11
    %p88 = por %p86, %p87
    %p89 = scmp.ne.s32.totalorder %s80, %s81
    %p90 = scmp.eq.s32.totalorder %s16, 0
    %p91 = por %p89, %p90
    %p92 = scmp.ne.s32.totalorder %s80, %s81
    %p93 = scmp.eq.s32.totalorder %s17, 11
    %p94 = por %p92, %p93
    %p96 = scmp.ne.s32.totalorder %s81, %s95
    %p97 = scmp.eq.s32.totalorder %s17, 0
    %p98 = por %p96, %p97
    %s99 = ssub.s32 %s19, %s26
    %p100 = scmp.eq.s32.totalorder %s99, 0
    %s102 = sadd.s32 %s101, 1
    %s103 = scalar_select %p100, %s101, %s102
    %p106 = pneg %p100
    %p107 = scmp.eq.s32.totalorder %s11, 11
    %p108 = por %p106, %p107
    %p109 = scmp.ne.s32.totalorder %s101, %s104
    %p110 = scmp.eq.s32.totalorder %s11, 0
    %p111 = por %p109, %p110
    %p112 = scmp.ne.s32.totalorder %s101, %s104
    %p113 = scmp.eq.s32.totalorder %s16, 11
    %p114 = por %p112, %p113
    %p115 = scmp.ne.s32.totalorder %s104, %s105
    %p116 = scmp.eq.s32.totalorder %s16, 0
    %p117 = por %p115, %p116
    %p118 = scmp.ne.s32.totalorder %s104, %s105
    %p119 = scmp.eq.s32.totalorder %s17, 11
    %p120 = por %p118, %p119
    %p122 = scmp.ne.s32.totalorder %s105, %s121
    %p123 = scmp.eq.s32.totalorder %s17, 0
    %p124 = por %p122, %p123
    %s125 = ssub.s32 %s19, %s26
    %p126 = scmp.eq.s32.totalorder %s125, 0
    %s128 = sadd.s32 %s127, 1
    %s129 = scalar_select %p126, %s127, %s128
    %p132 = pneg %p126
    %p133 = scmp.eq.s32.totalorder %s11, 11
    %p134 = por %p132, %p133
    %p135 = scmp.ne.s32.totalorder %s127, %s130
    %p136 = scmp.eq.s32.totalorder %s11, 0
    %p137 = por %p135, %p136
    %p138 = scmp.ne.s32.totalorder %s127, %s130
    %p139 = scmp.eq.s32.totalorder %s16, 11
    %p140 = por %p138, %p139
    %p141 = scmp.ne.s32.totalorder %s130, %s131
    %p142 = scmp.eq.s32.totalorder %s16, 0
    %p143 = por %p141, %p142
    %p144 = scmp.ne.s32.totalorder %s130, %s131
    %p145 = scmp.eq.s32.totalorder %s17, 11
    %p146 = por %p144, %p145
    %p148 = scmp.ne.s32.totalorder %s131, %s147
    %p149 = scmp.eq.s32.totalorder %s17, 0
    %p150 = por %p148, %p149
    %s151 = ssub.s32 %s19, %s26
    %s152 = ssub.s32 %s18, %s30
    %s153 = sor.u32 %s151, %s152
    %p154 = scmp.eq.s32.totalorder %s153, 0
    %s156 = sadd.s32 %s155, 1
    %s157 = scalar_select %p154, %s155, %s156
    %p160 = pneg %p154
    %p161 = scmp.eq.s32.totalorder %s11, 11
    %p162 = por %p160, %p161
    %p163 = scmp.ne.s32.totalorder %s155, %s158
    %p164 = scmp.eq.s32.totalorder %s11, 0
    %p165 = por %p163, %p164
    %p166 = scmp.ne.s32.totalorder %s155, %s158
    %p167 = scmp.eq.s32.totalorder %s16, 11
    %p168 = por %p166, %p167
    %p169 = scmp.ne.s32.totalorder %s158, %s159
    %p170 = scmp.eq.s32.totalorder %s16, 0
    %p171 = por %p169, %p170
    %p172 = scmp.ne.s32.totalorder %s158, %s159
    %p173 = scmp.eq.s32.totalorder %s17, 11
    %p174 = por %p172, %p173
    %p176 = scmp.ne.s32.totalorder %s159, %s175
    %p177 = scmp.eq.s32.totalorder %s17, 0
    %p178 = por %p176, %p177
    %p179 = scmp.le.s32.totalorder 1, %s11
    %p180 = scmp.lt.s32.totalorder %s11, 13
    %p181 = pnand %p179, %p180
    %p182 = pneg %p181
    // Predicated region
    $region9: #{decoder_forward.17} parent=5 // pred_check
      _
    $region10: #{decoder_forward.17} parent=5 // pred_check_branch
      %184 = sbr.rel (%p181) target = $region12
    $region11: #{decoder_forward.17} parent=5 // pred_region
      %s185 = ssub.s32 %s11, 1
      // Predicated region
      $region13: #{decoder_forward.17} parent=11 // pred_check
        %p186 = pneg %p49
      $region14: #{decoder_forward.17} parent=11 // pred_check_branch
        %188 = sbr.rel (%p186) target = $region16
      $region15: #{decoder_forward.17} parent=11 // pred_region
        %s189 = smul.u32 2, %s20
        %p190 = scmp.lt.s32.totalorder %s189, 1
        %s191 = scalar_select %p190, %s189, 1
        %s192 = smul.addr %s191, 8
        %s193 = scalar_lea.vmem %s0, %s192
        %s194 = smul.u32 2, %s20
      $region16: #{decoder_forward.17} parent=11 // pred_fallthru
        _
      // Predicated region
      $region17: #{decoder_forward.17} parent=11 // pred_check
        %p195 = pneg %p70
      $region18: #{decoder_forward.17} parent=11 // pred_check_branch
        %197 = sbr.rel (%p195) target = $region20
      $region19: #{decoder_forward.17} parent=11 // pred_region
        _
      $region20: #{decoder_forward.17} parent=11 // pred_fallthru
        _
      // Predicated region
      $region21: #{decoder_forward.17} parent=11 // pred_check
        %p198 = pneg %p91
      $region22: #{decoder_forward.17} parent=11 // pred_check_branch
        %200 = sbr.rel (%p198) target = $region24
      $region23: #{decoder_forward.17} parent=11 // pred_region
        _
      $region24: #{decoder_forward.17} parent=11 // pred_fallthru
        _
    $region12: #{decoder_forward.17} parent=5 // pred_fallthru
      _
    %p201 = scmp.lt.s32.totalorder %s11, 12
    // Predicated region
    $region25: #{decoder_forward.17} parent=5 // pred_check
      %p202 = pneg %p201
    $region26: #{decoder_forward.17} parent=5 // pred_check_branch
      %204 = sbr.rel (%p202) target = $region28
    $region27: #{decoder_forward.17} parent=5 // pred_region
      // Predicated region
      $region29: #{decoder_forward.17} parent=27 // pred_check
        %p205 = pneg %p111
      $region30: #{decoder_forward.17} parent=27 // pred_check_branch
        %207 = sbr.rel (%p205) target = $region32
      $region31: #{decoder_forward.17} parent=27 // pred_region
        %p208 = scmp.lt.s32.totalorder %s19, 11
        %s209 = scalar_select %p208, %s19, 11
        %s210 = smul.addr %s209, 4
        %s211 = smul.addr %s210, 8
        %s212 = scalar_lea.vmem %s3, %s211
      $region32: #{decoder_forward.17} parent=27 // pred_fallthru
        _
      // Predicated region
      $region33: #{decoder_forward.17} parent=27 // pred_check
        %p213 = pneg %p137
      $region34: #{decoder_forward.17} parent=27 // pred_check_branch
        %215 = sbr.rel (%p213) target = $region36
      $region35: #{decoder_forward.17} parent=27 // pred_region
        %p216 = scmp.lt.s32.totalorder %s19, 11
        %s217 = scalar_select %p216, %s19, 11
        %s218 = scalar_lea.vmem %s4, %s217
      $region36: #{decoder_forward.17} parent=27 // pred_fallthru
        _
    $region28: #{decoder_forward.17} parent=5 // pred_fallthru
      _
    %p219 = scmp.le.s32.totalorder 1, %s11
    %p220 = scmp.lt.s32.totalorder %s11, 13
    %p221 = pnand %p219, %p220
    %p222 = pneg %p221
    // Predicated region
    $region37: #{decoder_forward.17} parent=5 // pred_check
      _
    $region38: #{decoder_forward.17} parent=5 // pred_check_branch
      %224 = sbr.rel (%p221) target = $region40
    $region39: #{decoder_forward.17} parent=5 // pred_region
      %s225 = ssub.s32 %s11, 1
      %s226 = smul.u32 2, %s20
      %p227 = scmp.lt.s32.totalorder %s226, 1
      %s228 = scalar_select %p227, %s226, 1
      %s229 = smul.addr %s228, 8
      %s230 = scalar_lea.vmem %s0, %s229
      %p231 = pneg %p49
      %p232 = pneg %p46
      %p233 = pneg %p70
      %p234 = pneg %p67
      %p235 = pneg %p91
      %p236 = pneg %p88
      %p237 = scmp.lt.s32.totalorder %s21, 11
      %s238 = scalar_select %p237, %s21, 11
      %s239 = smul.addr %s238, 4
      %s240 = smul.addr %s239, 8
      %s241 = scalar_lea.vmem %s3, %s240
      %p242 = pneg %p117
      %p243 = pneg %p114
      %p244 = scmp.lt.s32.totalorder %s21, 11
      %s245 = scalar_select %p244, %s21, 11
      %s246 = scalar_lea.vmem %s4, %s245
      %p247 = pneg %p143
      %p248 = pneg %p140
      %p249 = pneg %p171
      %p250 = pneg %p168
      %s251 = smul.u32 2, %s20
      %p252 = scmp.lt.s32.totalorder %s21, 11
      %s253 = scalar_select %p252, %s21, 11
      %p254 = scmp.lt.s32.totalorder %s251, 1
      %s255 = scalar_select %p254, %s251, 1
      %s256 = smul.addr %s253, 2
      %s257 = sadd.s32 %s255, %s256
      %s258 = smul.addr %s257, 8
      %s259 = scalar_lea.vmem %s5, %s258
      %s260 = smul.u32 2, %s20
      %p261 = scmp.lt.s32.totalorder %s260, 1
      %s262 = scalar_select %p261, %s260, 1
      %s263 = smul.addr %s262, 8
      %s264 = scalar_lea.vmem %s0, %s263
      %s265 = smul.u32 2, %s20
      %p266 = scmp.lt.s32.totalorder %s21, 11
      %s267 = scalar_select %p266, %s21, 11
      %s268 = smul.addr %s267, 4
      %s269 = smul.addr %s268, 8
      %s270 = scalar_lea.vmem %s3, %s269
      %p271 = scmp.lt.s32.totalorder %s21, 11
      %s272 = scalar_select %p271, %s21, 11
      %s273 = scalar_lea.vmem %s4, %s272
      %s274 = smul.u32 2, %s20
      %p275 = scmp.lt.s32.totalorder %s21, 11
      %s276 = scalar_select %p275, %s21, 11
      %p277 = scmp.lt.s32.totalorder %s274, 1
      %s278 = scalar_select %p277, %s274, 1
      %s279 = smul.addr %s276, 2
      %s280 = sadd.s32 %s278, %s279
      %s281 = smul.addr %s280, 8
      %s282 = scalar_lea.vmem %s5, %s281
      %s283 = smul.u32 2, %s20
      %p284 = scmp.eq.s32.totalorder %s21, 0
      // Predicated region
      $region41: #{decoder_forward.17} parent=39 // pred_check
        %p285 = pneg %p284
      $region42: #{decoder_forward.17} parent=39 // pred_check_branch
        %287 = sbr.rel (%p285) target = $region44
      $region43: #{decoder_forward.17} parent=39 // pred_region
        %v288 = vld [vmem:[%s264] sm:$0xff]
        %v289 = vld [vmem:[%s264 + $0x8] sm:$0xff]
        %v290 = vld [vmem:[%s1] sm:$0x1]
        %v291 = vld [vmem:[%s2] sm:$0x1]
        %vm292 = vcmask 261120
        %v293 = vsel %vm292, %v288, 0.0
        %294 = vadd.xlane.f32.xlu0 %v293
        %v295 = vpop.xlane.xlu0 %294
        %v296 = vsel %vm292, %v289, 0.0
        %297 = vadd.xlane.f32.xlu0 %v296
        %v298 = vpop.xlane.xlu0 %297
        %v299 = vrcp.pop 32.0
        %v300 = vmul.f32 %v295, %v299
        %v301 = vmul.f32 %v298, %v299
        %v302 = vsub.f32 %v288, %v300
        %v303 = vsub.f32 %v289, %v301
        %v304 = vmul.f32 %v302, %v302
        %v305 = vmul.f32 %v303, %v303
        %v306 = vsel %vm292, %v304, 0.0
        %307 = vadd.xlane.f32.xlu0 %v306
        %v308 = vpop.xlane.xlu0 %307
        %v309 = vsel %vm292, %v305, 0.0
        %310 = vadd.xlane.f32.xlu0 %v309
        %v311 = vpop.xlane.xlu0 %310
        %v312 = vmul.f32 %v308, 0.032258064
        %v313 = vmul.f32 %v311, 0.032258064
        %v314 = vrsqrt.pop %v312
        %v315 = vmul.f32 %v312, %v314
        %vm316 = vcmp.eq.f32.partialorder %v312, inf
        %v317 = vsel %vm316, %v312, %v315
        %vm318 = vcmp.eq.f32.partialorder %v312, 0.0
        %v319 = vand.u32 %v312, 2147483648
        %v320 = vsel %vm318, %v319, %v317
        %v321 = vrsqrt.pop %v313
        %v322 = vmul.f32 %v313, %v321
        %vm323 = vcmp.eq.f32.partialorder %v313, inf
        %v324 = vsel %vm323, %v313, %v322
        %vm325 = vcmp.eq.f32.partialorder %v313, 0.0
        %v326 = vand.u32 %v313, 2147483648
        %v327 = vsel %vm325, %v326, %v324
        %v328 = vadd.f32 %v320, 1e-06
        %v329 = vadd.f32 %v327, 1e-06
        %v330 = vrcp.pop %v328
        %v331 = vmul.f32 1.0, %v330
        %v332 = vrcp.pop %v329
        %v333 = vmul.f32 1.0, %v332
        %v334 = vmul.f32 %v302, %v331
        %v335 = vmul.f32 %v303, %v333
        %v337 = vlaneseq
        %v338 = vshrl.u32 %v337, 7
        %v339 = vsub.s32 0, %v338
        %v340 = vrot.slane %v290, %v339
        %v342 = vmul.f32 %v340, %v334
        %v343 = vmul.f32 %v340, %v335
        %v345 = vlaneseq
        %v346 = vshrl.u32 %v345, 7
        %v347 = vsub.s32 0, %v346
        %v348 = vrot.slane %v291, %v347
        %v350 = vadd.f32 %v342, %v348
        %v351 = vadd.f32 %v343, %v348
        %352 = vst.msk [vmem:[#allocation2] sm:$0xff] %vm292, %v350
        %353 = vst.msk [vmem:[#allocation2 + $0x8] sm:$0xff] %vm292, %v351
      $region44: #{decoder_forward.17} parent=39 // pred_fallthru
        _
      %v354 = vld [vmem:[#allocation2] sm:$0xff]
      %v355 = vld [vmem:[#allocation2 + $0x8] sm:$0xff]
      %v356 = vld [vmem:[%s270] sm:$0xff]
      %v357 = vld [vmem:[%s270 + $0x8] sm:$0xff]
      %v358 = vld [vmem:[%s270 + $0x10] sm:$0xff]
      %v359 = vld [vmem:[%s270 + $0x18] sm:$0xff]
      %v360 = vld [vmem:[%s273] sm:$0x1]
      %v362 = vlaneseq
      %v363 = vshrl.u32 %v362, 7
      %v364 = vsub.s32 0, %v363
      %v365 = vrot.slane %v360, %v364
      %vm367 = vcmask 261120
      %v369 = vsel %vm367, %v354, 0
      %v372 = vsel %vm367, %v355, 0
      %374 = vmatprep.subr.mxu0 0.0
      %375 = vmatpush1.msra.mxu0 %v356
      %376 = vmatprep.subr.mxu0 0.0
      %377 = vmatpush1.msra.mxu0 %v357
      %378 = vmatprep.subr.mxu0 0.0
      %379 = vmatpush1.msra.mxu0 %v358
      %380 = vmatprep.subr.mxu0 0.0
      %381 = vmatpush1.msra.mxu0 %v359
      %382 = vmatprep.subr.mxu0 0.0
      %383 = vmatpush1.msra.mxu0 0.0
      %384 = vmatprep.subr.mxu0 0.0
      %385 = vmatpush1.msra.mxu0 0.0
      %386 = vmatprep.subr.mxu0 0.0
      %387 = vmatpush1.msra.mxu0 0.0
      %388 = vmatprep.subr.mxu0 0.0
      %389 = vmatpush1.msra.mxu0 0.0
      %390 = vmatprep.subr.mxu0 0.0
      %391 = vmatpush1.msra.mxu0 0.0
      %392 = vmatprep.subr.mxu0 0.0
      %393 = vmatpush1.msra.mxu0 0.0
      %394 = vmatprep.subr.mxu0 0.0
      %395 = vmatpush1.msra.mxu0 0.0
      %396 = vmatprep.subr.mxu0 0.0
      %397 = vmatpush1.msra.mxu0 0.0
      %398 = vmatprep.subr.mxu0 0.0
      %399 = vmatpush1.msra.mxu0 0.0
      %400 = vmatprep.subr.mxu0 0.0
      %401 = vmatpush1.msra.mxu0 0.0
      %402 = vmatprep.subr.mxu0 0.0
      %403 = vmatpush1.msra.mxu0 0.0
      %404 = vmatprep.subr.mxu0 0.0
      %405 = vmatpush1.msra.mxu0 0.0
      %406 = vmatprep.subr.mxu0 0.0
      %407 = vmatpush1.msra.mxu0 0.0
      %408 = vmatprep.subr.mxu0 0.0
      %409 = vmatpush1.msra.mxu0 0.0
      %410 = vmatprep.subr.mxu0 0.0
      %411 = vmatpush1.msra.mxu0 0.0
      %412 = vmatprep.subr.mxu0 0.0
      %413 = vmatpush1.msra.mxu0 0.0
      %414 = vmatprep.subr.mxu0 0.0
      %415 = vmatpush1.msra.mxu0 0.0
      %416 = vmatprep.subr.mxu0 0.0
      %417 = vmatpush1.msra.mxu0 0.0
      %418 = vmatprep.subr.mxu0 0.0
      %419 = vmatpush1.msra.mxu0 0.0
      %420 = vmatprep.subr.mxu0 0.0
      %421 = vmatpush1.msra.mxu0 0.0
      %422 = vmatprep.subr.mxu0 0.0
      %423 = vmatpush1.msra.mxu0 0.0
      %424 = vmatprep.subr.mxu0 0.0
      %425 = vmatpush1.msra.mxu0 0.0
      %426 = vmatprep.subr.mxu0 0.0
      %427 = vmatpush1.msra.mxu0 0.0
      %428 = vmatprep.subr.mxu0 0.0
      %429 = vmatpush1.msra.mxu0 0.0
      %430 = vmatprep.subr.mxu0 0.0
      %431 = vmatpush1.msra.mxu0 0.0
      %432 = vmatprep.subr.mxu0 0.0
      %433 = vmatpush1.msra.mxu0 0.0
      %434 = vmatprep.subr.mxu0 0.0
      %435 = vmatpush1.msra.mxu0 0.0
      %436 = vmatprep.subr.mxu0 0.0
      %437 = vmatpush1.msra.mxu0 0.0
      %438 = vmatprep.mubr.f32.mxu0 0.0
      %439 = vmatmul.mubr.f32.gmra.mrb[0].mxu0 %v369
      %v440 = vpop.f32.mrb[0].mxu0
      %v441 = vadd.f32 %v365, %v440
      %v442 = vpop.f32.mrb[0].mxu0
      %443 = vmatprep.mubr.f32.mxu0 0.0
      %444 = vmatmul.mubr.f32.gmra.mrb[0].mxu0 %v372
      %v445 = vpop.f32.mrb[0].mxu0
      %v446 = vadd.f32 %v365, %v445
      %v447 = vpop.f32.mrb[0].mxu0
      %448 = vdwg.mxu0
      %vm449 = vcmask 64512
      %450 = vst.msk [vmem:[%s282] sm:$0xff] %vm449, %v441
      %451 = vst.msk [vmem:[%s282 + $0x8] sm:$0xff] %vm449, %v446
      %s452 = smul.u32 2, %s20
      %p453 = scmp.lt.s32.totalorder %s21, 11
      %s454 = scalar_select %p453, %s21, 11
      %p455 = scmp.lt.s32.totalorder %s452, 1
      %s456 = scalar_select %p455, %s452, 1
      %s457 = smul.addr %s454, 2
      %s458 = sadd.s32 %s456, %s457
      %s459 = smul.addr %s458, 8
      %s460 = scalar_lea.vmem %s5, %s459
      // Predicated region
      $region45: #{decoder_forward.17} parent=39 // pred_check
        %p461 = pneg %p168
      $region46: #{decoder_forward.17} parent=39 // pred_check_branch
        %463 = sbr.rel (%p461) target = $region48
      $region47: #{decoder_forward.17} parent=39 // pred_region
        %s464 = smul.u32 2, %s20
      $region48: #{decoder_forward.17} parent=39 // pred_fallthru
        _
    $region40: #{decoder_forward.17} parent=5 // pred_fallthru
      _
    %p465 = scmp.le.s32.totalorder 2, %s11
    // Predicated region
    $region49: #{decoder_forward.17} parent=5 // pred_check
      %p466 = pneg %p465
    $region50: #{decoder_forward.17} parent=5 // pred_check_branch
      %468 = sbr.rel (%p466) target = $region52
    $region51: #{decoder_forward.17} parent=5 // pred_region
      %s469 = ssub.s32 %s11, 2
      // Predicated region
      $region53: #{decoder_forward.17} parent=51 // pred_check
        %p470 = pneg %p174
      $region54: #{decoder_forward.17} parent=51 // pred_check_branch
        %472 = sbr.rel (%p470) target = $region56
      $region55: #{decoder_forward.17} parent=51 // pred_region
        %s473 = smul.u32 2, %s22
        %p474 = scmp.lt.s32.totalorder %s23, 11
        %s475 = scalar_select %p474, %s23, 11
        %p476 = scmp.lt.s32.totalorder %s473, 1
        %s477 = scalar_select %p476, %s473, 1
        %s478 = smul.addr %s475, 2
        %s479 = sadd.s32 %s477, %s478
        %s480 = smul.addr %s479, 8
        %s481 = scalar_lea.vmem %s5, %s480
      $region56: #{decoder_forward.17} parent=51 // pred_fallthru
        _
    $region52: #{decoder_forward.17} parent=5 // pred_fallthru
      _
  $region6: #{decoder_forward.17} parent=0 // loop_footer
    %s15 = sadd.s32 1, %s11
  $region7: #{decoder_forward.17} parent=0 // loop_footer_branch
    %10 = sbr.rel target = $region3
  $region8: #{decoder_forward.17} parent=0 // loop_exit
    _

// kernel: decoder_forward.19
$region0: #{decoder_forward.19}
  #allocation0 [shape = 'u32[]', space=smem, size = 0x4, offset = 0x4, fixed_abs, tag = 'smem constant byte address 0x4 - core index']
  #allocation1 [shape = 'u32[144,128]{1,0:T(1,128)}', space=vmem, size = 0x12000, scoped, tag = 'internal scratch']
  #allocation2 [shape = 'f32[16,32]{1,0:T(8,128)}', space=vmem, size = 0x2000, scoped, tag = 'scratch operand']
  %s0 = inlined_call_operand.vmem [shape: f32[4,16,8], index: 0, kind: input, shape index: {}]
  %s1 = inlined_call_operand.vmem [shape: f32[4,8,32], index: 1, kind: input, shape index: {}]
  %s2 = inlined_call_operand.vmem [shape: f32[1,32], index: 2, kind: input, shape index: {}]
  %s3 = inlined_call_operand.vmem [shape: f32[16,32], index: 3, kind: input, shape index: {}]
  %s4 = inlined_call_operand.vmem [shape: f32[16,32], index: 4, kind: output, shape index: {}]
  %s5 = sld [smem:[#allocation0]]
  $region57: #{decoder_forward.19} parent=0
    _
  %s7 = ssub.s32 1, %s5
  %s8 = scalar_select 0, %s7, %s5
  loop: start=0, step=1, limit=6
  $region2: #{decoder_forward.19} parent=0 // loop_pre_header
    _
  $region3: #{decoder_forward.19} parent=0 // loop_header
    %s10 = sphi 0, %s14
    %p11 = scmp.ge.s32.totalorder %s10, 6
    %s17 = sphi 0, %s29
    %s18 = sphi 0, %s25
    %s19 = sphi 0, %s17
    %s20 = sphi 0, %s18
    %s21 = sphi 0, %s19
    %s22 = sphi 0, %s20
    %s34 = sphi 0, %s36
    %s37 = sphi 0, %s34
    %s38 = sphi 0, %s37
    %s54 = sphi 0, %s38
    %s60 = sphi 0, %s62
    %s63 = sphi 0, %s60
    %s64 = sphi 0, %s63
    %s80 = sphi 0, %s64
    %s84 = sphi 0, %s84
    %s86 = sphi 0, %s84
    %s87 = sphi 0, %s86
    %s101 = sphi 0, %s87
    %s107 = sphi 0, %s109
    %s110 = sphi 0, %s107
    %s111 = sphi 0, %s110
    %s127 = sphi 0, %s111
    %s133 = sphi 0, %s135
    %s136 = sphi 0, %s133
    %s137 = sphi 0, %s136
    %s153 = sphi 0, %s137
  $region4: #{decoder_forward.19} parent=0 // loop_header_branch
    %13 = sbr.rel (%p11) target = $region8
  $region5: #{decoder_forward.19} parent=0 // loop_body
    %s15 = ssub.s32 %s10, 1
    %s16 = ssub.s32 %s10, 2
    %s23 = sadd.s32 1, %s18
    %p24 = scmp.ge.s32.totalorder %s23, 4
    %s25 = scalar_select %p24, 0, %s23
    %s26 = sadd.s32 1, %s17
    %s27 = scalar_select %p24, %s26, %s17
    %p28 = scmp.ge.s32.totalorder %s27, 1
    %s29 = scalar_select %p28, 0, %s27
    %s30 = ssub.s32 %s18, %s25
    %s31 = ssub.s32 %s17, %s29
    %s32 = sor.u32 %s30, %s31
    %p33 = scmp.eq.s32.totalorder %s32, 0
    %s35 = sadd.s32 %s34, 1
    %s36 = scalar_select %p33, %s34, %s35
    %p39 = pneg %p33
    %p40 = scmp.eq.s32.totalorder %s10, 3
    %p41 = por %p39, %p40
    %p42 = scmp.ne.s32.totalorder %s34, %s37
    %p43 = scmp.eq.s32.totalorder %s10, 0
    %p44 = por %p42, %p43
    %p45 = scmp.ne.s32.totalorder %s34, %s37
    %p46 = scmp.eq.s32.totalorder %s15, 3
    %p47 = por %p45, %p46
    %p48 = scmp.ne.s32.totalorder %s37, %s38
    %p49 = scmp.eq.s32.totalorder %s15, 0
    %p50 = por %p48, %p49
    %p51 = scmp.ne.s32.totalorder %s37, %s38
    %p52 = scmp.eq.s32.totalorder %s16, 3
    %p53 = por %p51, %p52
    %p55 = scmp.ne.s32.totalorder %s38, %s54
    %p56 = scmp.eq.s32.totalorder %s16, 0
    %p57 = por %p55, %p56
    %s58 = ssub.s32 %s18, %s25
    %p59 = scmp.eq.s32.totalorder %s58, 0
    %s61 = sadd.s32 %s60, 1
    %s62 = scalar_select %p59, %s60, %s61
    %p65 = pneg %p59
    %p66 = scmp.eq.s32.totalorder %s10, 3
    %p67 = por %p65, %p66
    %p68 = scmp.ne.s32.totalorder %s60, %s63
    %p69 = scmp.eq.s32.totalorder %s10, 0
    %p70 = por %p68, %p69
    %p71 = scmp.ne.s32.totalorder %s60, %s63
    %p72 = scmp.eq.s32.totalorder %s15, 3
    %p73 = por %p71, %p72
    %p74 = scmp.ne.s32.totalorder %s63, %s64
    %p75 = scmp.eq.s32.totalorder %s15, 0
    %p76 = por %p74, %p75
    %p77 = scmp.ne.s32.totalorder %s63, %s64
    %p78 = scmp.eq.s32.totalorder %s16, 3
    %p79 = por %p77, %p78
    %p81 = scmp.ne.s32.totalorder %s64, %s80
    %p82 = scmp.eq.s32.totalorder %s16, 0
    %p83 = por %p81, %p82
    %s85 = sadd.s32 %s84, 1
    %p88 = scmp.eq.s32.totalorder %s10, 3
    %p89 = scmp.ne.s32.totalorder %s84, %s86
    %p90 = scmp.eq.s32.totalorder %s10, 0
    %p91 = por %p89, %p90
    %p92 = scmp.ne.s32.totalorder %s84, %s86
    %p93 = scmp.eq.s32.totalorder %s15, 3
    %p94 = por %p92, %p93
    %p95 = scmp.ne.s32.totalorder %s86, %s87
    %p96 = scmp.eq.s32.totalorder %s15, 0
    %p97 = por %p95, %p96
    %p98 = scmp.ne.s32.totalorder %s86, %s87
    %p99 = scmp.eq.s32.totalorder %s16, 3
    %p100 = por %p98, %p99
    %p102 = scmp.ne.s32.totalorder %s87, %s101
    %p103 = scmp.eq.s32.totalorder %s16, 0
    %p104 = por %p102, %p103
    %s105 = ssub.s32 %s17, %s29
    %p106 = scmp.eq.s32.totalorder %s105, 0
    %s108 = sadd.s32 %s107, 1
    %s109 = scalar_select %p106, %s107, %s108
    %p112 = pneg %p106
    %p113 = scmp.eq.s32.totalorder %s10, 3
    %p114 = por %p112, %p113
    %p115 = scmp.ne.s32.totalorder %s107, %s110
    %p116 = scmp.eq.s32.totalorder %s10, 0
    %p117 = por %p115, %p116
    %p118 = scmp.ne.s32.totalorder %s107, %s110
    %p119 = scmp.eq.s32.totalorder %s15, 3
    %p120 = por %p118, %p119
    %p121 = scmp.ne.s32.totalorder %s110, %s111
    %p122 = scmp.eq.s32.totalorder %s15, 0
    %p123 = por %p121, %p122
    %p124 = scmp.ne.s32.totalorder %s110, %s111
    %p125 = scmp.eq.s32.totalorder %s16, 3
    %p126 = por %p124, %p125
    %p128 = scmp.ne.s32.totalorder %s111, %s127
    %p129 = scmp.eq.s32.totalorder %s16, 0
    %p130 = por %p128, %p129
    %s131 = ssub.s32 %s17, %s29
    %p132 = scmp.eq.s32.totalorder %s131, 0
    %s134 = sadd.s32 %s133, 1
    %s135 = scalar_select %p132, %s133, %s134
    %p138 = pneg %p132
    %p139 = scmp.eq.s32.totalorder %s10, 3
    %p140 = por %p138, %p139
    %p141 = scmp.ne.s32.totalorder %s133, %s136
    %p142 = scmp.eq.s32.totalorder %s10, 0
    %p143 = por %p141, %p142
    %p144 = scmp.ne.s32.totalorder %s133, %s136
    %p145 = scmp.eq.s32.totalorder %s15, 3
    %p146 = por %p144, %p145
    %p147 = scmp.ne.s32.totalorder %s136, %s137
    %p148 = scmp.eq.s32.totalorder %s15, 0
    %p149 = por %p147, %p148
    %p150 = scmp.ne.s32.totalorder %s136, %s137
    %p151 = scmp.eq.s32.totalorder %s16, 3
    %p152 = por %p150, %p151
    %p154 = scmp.ne.s32.totalorder %s137, %s153
    %p155 = scmp.eq.s32.totalorder %s16, 0
    %p156 = por %p154, %p155
    %p157 = scmp.le.s32.totalorder 1, %s10
    %p158 = scmp.lt.s32.totalorder %s10, 5
    %p159 = pnand %p157, %p158
    %p160 = pneg %p159
    // Predicated region
    $region9: #{decoder_forward.19} parent=5 // pred_check
      _
    $region10: #{decoder_forward.19} parent=5 // pred_check_branch
      %162 = sbr.rel (%p159) target = $region12
    $region11: #{decoder_forward.19} parent=5 // pred_region
      %s163 = ssub.s32 %s10, 1
      // Predicated region
      $region13: #{decoder_forward.19} parent=11 // pred_check
        %p164 = pneg %p97
      $region14: #{decoder_forward.19} parent=11 // pred_check_branch
        %166 = sbr.rel (%p164) target = $region16
      $region15: #{decoder_forward.19} parent=11 // pred_region
        _
      $region16: #{decoder_forward.19} parent=11 // pred_fallthru
        _
      // Predicated region
      $region17: #{decoder_forward.19} parent=11 // pred_check
        %p167 = pneg %p123
      $region18: #{decoder_forward.19} parent=11 // pred_check_branch
        %169 = sbr.rel (%p167) target = $region20
      $region19: #{decoder_forward.19} parent=11 // pred_region
        %s170 = smul.u32 2, %s19
        %p171 = scmp.lt.s32.totalorder %s170, 1
        %s172 = scalar_select %p171, %s170, 1
        %s173 = smul.addr %s172, 8
        %s174 = scalar_lea.vmem %s3, %s173
        %s175 = smul.u32 2, %s19
      $region20: #{decoder_forward.19} parent=11 // pred_fallthru
        _
    $region12: #{decoder_forward.19} parent=5 // pred_fallthru
      _
    %p176 = scmp.lt.s32.totalorder %s10, 4
    // Predicated region
    $region21: #{decoder_forward.19} parent=5 // pred_check
      %p177 = pneg %p176
    $region22: #{decoder_forward.19} parent=5 // pred_check_branch
      %179 = sbr.rel (%p177) target = $region24
    $region23: #{decoder_forward.19} parent=5 // pred_region
      // Predicated region
      $region25: #{decoder_forward.19} parent=23 // pred_check
        %p180 = pneg %p44
      $region26: #{decoder_forward.19} parent=23 // pred_check_branch
        %182 = sbr.rel (%p180) target = $region28
      $region27: #{decoder_forward.19} parent=23 // pred_region
        %s183 = smul.u32 2, %s17
        %p184 = scmp.lt.s32.totalorder %s18, 3
        %s185 = scalar_select %p184, %s18, 3
        %p186 = scmp.lt.s32.totalorder %s183, 1
        %s187 = scalar_select %p186, %s183, 1
        %s188 = smul.addr %s185, 2
        %s189 = sadd.s32 %s187, %s188
        %s190 = smul.addr %s189, 8
        %s191 = scalar_lea.vmem %s0, %s190
        %s192 = smul.u32 2, %s17
      $region28: #{decoder_forward.19} parent=23 // pred_fallthru
        _
      // Predicated region
      $region29: #{decoder_forward.19} parent=23 // pred_check
        %p193 = pneg %p70
      $region30: #{decoder_forward.19} parent=23 // pred_check_branch
        %195 = sbr.rel (%p193) target = $region32
      $region31: #{decoder_forward.19} parent=23 // pred_region
        %p196 = scmp.lt.s32.totalorder %s18, 3
        %s197 = scalar_select %p196, %s18, 3
        %s198 = smul.addr %s197, 8
        %s199 = scalar_lea.vmem %s1, %s198
      $region32: #{decoder_forward.19} parent=23 // pred_fallthru
        _
    $region24: #{decoder_forward.19} parent=5 // pred_fallthru
      _
    %p200 = scmp.le.s32.totalorder 1, %s10
    %p201 = scmp.lt.s32.totalorder %s10, 5
    %p202 = pnand %p200, %p201
    %p203 = pneg %p202
    // Predicated region
    $region33: #{decoder_forward.19} parent=5 // pred_check
      _
    $region34: #{decoder_forward.19} parent=5 // pred_check_branch
      %205 = sbr.rel (%p202) target = $region36
    $region35: #{decoder_forward.19} parent=5 // pred_region
      %s206 = ssub.s32 %s10, 1
      %s207 = smul.u32 2, %s19
      %p208 = scmp.lt.s32.totalorder %s20, 3
      %s209 = scalar_select %p208, %s20, 3
      %p210 = scmp.lt.s32.totalorder %s207, 1
      %s211 = scalar_select %p210, %s207, 1
      %s212 = smul.addr %s209, 2
      %s213 = sadd.s32 %s211, %s212
      %s214 = smul.addr %s213, 8
      %s215 = scalar_lea.vmem %s0, %s214
      %p216 = pneg %p50
      %p217 = pneg %p47
      %p218 = scmp.lt.s32.totalorder %s20, 3
      %s219 = scalar_select %p218, %s20, 3
      %s220 = smul.addr %s219, 8
      %s221 = scalar_lea.vmem %s1, %s220
      %p222 = pneg %p76
      %p223 = pneg %p73
      %p224 = pneg %p97
      %p225 = pneg %p94
      %s226 = smul.u32 2, %s19
      %p227 = scmp.lt.s32.totalorder %s226, 1
      %s228 = scalar_select %p227, %s226, 1
      %s229 = smul.addr %s228, 8
      %s230 = scalar_lea.vmem %s3, %s229
      %p231 = pneg %p123
      %p232 = pneg %p120
      %p233 = pneg %p149
      %p234 = pneg %p146
      %s235 = smul.u32 2, %s19
      %p236 = scmp.lt.s32.totalorder %s235, 1
      %s237 = scalar_select %p236, %s235, 1
      %s238 = smul.addr %s237, 8
      %s239 = scalar_lea.vmem %s4, %s238
      %s240 = smul.u32 2, %s19
      %p241 = scmp.lt.s32.totalorder %s20, 3
      %s242 = scalar_select %p241, %s20, 3
      %p243 = scmp.lt.s32.totalorder %s240, 1
      %s244 = scalar_select %p243, %s240, 1
      %s245 = smul.addr %s242, 2
      %s246 = sadd.s32 %s244, %s245
      %s247 = smul.addr %s246, 8
      %s248 = scalar_lea.vmem %s0, %s247
      %s249 = smul.u32 2, %s19
      %p250 = scmp.lt.s32.totalorder %s20, 3
      %s251 = scalar_select %p250, %s20, 3
      %s252 = smul.addr %s251, 8
      %s253 = scalar_lea.vmem %s1, %s252
      %s254 = smul.u32 2, %s19
      %p255 = scmp.lt.s32.totalorder %s254, 1
      %s256 = scalar_select %p255, %s254, 1
      %s257 = smul.addr %s256, 8
      %s258 = scalar_lea.vmem %s3, %s257
      %s259 = smul.u32 2, %s19
      %s260 = smul.u32 2, %s19
      %p261 = scmp.lt.s32.totalorder %s260, 1
      %s262 = scalar_select %p261, %s260, 1
      %s263 = smul.addr %s262, 8
      %s264 = scalar_lea.vmem %s4, %s263
      %s265 = smul.u32 2, %s19
      %p266 = scmp.eq.s32.totalorder %s20, 0
      // Predicated region
      $region37: #{decoder_forward.19} parent=35 // pred_check
        %p267 = pneg %p266
      $region38: #{decoder_forward.19} parent=35 // pred_check_branch
        %269 = sbr.rel (%p267) target = $region40
      $region39: #{decoder_forward.19} parent=35 // pred_region
        %vm270 = vcmask 261120
        %271 = vst.msk [vmem:[#allocation2] sm:$0xff] %vm270, 0.0
        %272 = vst.msk [vmem:[#allocation2 + $0x8] sm:$0xff] %vm270, 0.0
      $region40: #{decoder_forward.19} parent=35 // pred_fallthru
        _
      %v273 = vld [vmem:[#allocation2] sm:$0xff]
      %v274 = vld [vmem:[#allocation2 + $0x8] sm:$0xff]
      %v275 = vld [vmem:[%s248] sm:$0xff]
      %v276 = vld [vmem:[%s248 + $0x8] sm:$0xff]
      %v277 = vld [vmem:[%s253] sm:$0xff]
      %vm278 = vcmask 64512
      %v280 = vsel %vm278, %v275, 0
      %v283 = vsel %vm278, %v276, 0
      %285 = vmatprep.subr.mxu0 0.0
      %286 = vmatpush1.msra.mxu0 %v277
      %287 = vmatprep.subr.mxu0 0.0
      %288 = vmatpush1.msra.mxu0 0.0
      %289 = vmatprep.subr.mxu0 0.0
      %290 = vmatpush1.msra.mxu0 0.0
      %291 = vmatprep.subr.mxu0 0.0
      %292 = vmatpush1.msra.mxu0 0.0
      %293 = vmatprep.subr.mxu0 0.0
      %294 = vmatpush1.msra.mxu0 0.0
      %295 = vmatprep.subr.mxu0 0.0
      %296 = vmatpush1.msra.mxu0 0.0
      %297 = vmatprep.subr.mxu0 0.0
      %298 = vmatpush1.msra.mxu0 0.0
      %299 = vmatprep.subr.mxu0 0.0
      %300 = vmatpush1.msra.mxu0 0.0
      %301 = vmatprep.subr.mxu0 0.0
      %302 = vmatpush1.msra.mxu0 0.0
      %303 = vmatprep.subr.mxu0 0.0
      %304 = vmatpush1.msra.mxu0 0.0
      %305 = vmatprep.subr.mxu0 0.0
      %306 = vmatpush1.msra.mxu0 0.0
      %307 = vmatprep.subr.mxu0 0.0
      %308 = vmatpush1.msra.mxu0 0.0
      %309 = vmatprep.subr.mxu0 0.0
      %310 = vmatpush1.msra.mxu0 0.0
      %311 = vmatprep.subr.mxu0 0.0
      %312 = vmatpush1.msra.mxu0 0.0
      %313 = vmatprep.subr.mxu0 0.0
      %314 = vmatpush1.msra.mxu0 0.0
      %315 = vmatprep.subr.mxu0 0.0
      %316 = vmatpush1.msra.mxu0 0.0
      %317 = vmatprep.subr.mxu0 0.0
      %318 = vmatpush1.msra.mxu0 0.0
      %319 = vmatprep.subr.mxu0 0.0
      %320 = vmatpush1.msra.mxu0 0.0
      %321 = vmatprep.subr.mxu0 0.0
      %322 = vmatpush1.msra.mxu0 0.0
      %323 = vmatprep.subr.mxu0 0.0
      %324 = vmatpush1.msra.mxu0 0.0
      %325 = vmatprep.subr.mxu0 0.0
      %326 = vmatpush1.msra.mxu0 0.0
      %327 = vmatprep.subr.mxu0 0.0
      %328 = vmatpush1.msra.mxu0 0.0
      %329 = vmatprep.subr.mxu0 0.0
      %330 = vmatpush1.msra.mxu0 0.0
      %331 = vmatprep.subr.mxu0 0.0
      %332 = vmatpush1.msra.mxu0 0.0
      %333 = vmatprep.subr.mxu0 0.0
      %334 = vmatpush1.msra.mxu0 0.0
      %335 = vmatprep.subr.mxu0 0.0
      %336 = vmatpush1.msra.mxu0 0.0
      %337 = vmatprep.subr.mxu0 0.0
      %338 = vmatpush1.msra.mxu0 0.0
      %339 = vmatprep.subr.mxu0 0.0
      %340 = vmatpush1.msra.mxu0 0.0
      %341 = vmatprep.subr.mxu0 0.0
      %342 = vmatpush1.msra.mxu0 0.0
      %343 = vmatprep.subr.mxu0 0.0
      %344 = vmatpush1.msra.mxu0 0.0
      %345 = vmatprep.subr.mxu0 0.0
      %346 = vmatpush1.msra.mxu0 0.0
      %347 = vmatprep.subr.mxu0 0.0
      %348 = vmatpush1.msra.mxu0 0.0
      %349 = vmatprep.mubr.f32.mxu0 0.0
      %350 = vmatmul.mubr.f32.gmra.mrb[0].mxu0 %v280
      %v351 = vpop.f32.mrb[0].mxu0
      %v352 = vadd.f32 0.0, %v351
      %v353 = vpop.f32.mrb[0].mxu0
      %354 = vmatprep.mubr.f32.mxu0 0.0
      %355 = vmatmul.mubr.f32.gmra.mrb[0].mxu0 %v283
      %v356 = vpop.f32.mrb[0].mxu0
      %v357 = vadd.f32 0.0, %v356
      %v358 = vpop.f32.mrb[0].mxu0
      %359 = vdwg.mxu0
      %v360 = vadd.f32 %v273, %v352
      %v361 = vadd.f32 %v274, %v357
      %vm362 = vcmask 261120
      %363 = vst.msk [vmem:[#allocation2] sm:$0xff] %vm362, %v360
      %364 = vst.msk [vmem:[#allocation2 + $0x8] sm:$0xff] %vm362, %v361
      %p365 = scmp.eq.s32.totalorder %s20, 3
      // Predicated region
      $region41: #{decoder_forward.19} parent=35 // pred_check
        %p366 = pneg %p365
      $region42: #{decoder_forward.19} parent=35 // pred_check_branch
        %368 = sbr.rel (%p366) target = $region44
      $region43: #{decoder_forward.19} parent=35 // pred_region
        %v369 = vld [vmem:[#allocation2] sm:$0xff]
        %v370 = vld [vmem:[#allocation2 + $0x8] sm:$0xff]
        %v371 = vld [vmem:[%s2] sm:$0x1]
        %v373 = vlaneseq
        %v374 = vshrl.u32 %v373, 7
        %v375 = vsub.s32 0, %v374
        %v376 = vrot.slane %v371, %v375
        %v378 = vadd.f32 %v369, %v376
        %v379 = vadd.f32 %v370, %v376
        %v380 = vld [vmem:[%s258] sm:$0xff]
        %v381 = vld [vmem:[%s258 + $0x8] sm:$0xff]
        %v382 = vadd.f32 %v378, %v380
        %v383 = vadd.f32 %v379, %v381
        %384 = vst.msk [vmem:[%s264] sm:$0xff] %vm362, %v382
        %385 = vst.msk [vmem:[%s264 + $0x8] sm:$0xff] %vm362, %v383
      $region44: #{decoder_forward.19} parent=35 // pred_fallthru
        _
      %s386 = smul.u32 2, %s19
      %p387 = scmp.lt.s32.totalorder %s386, 1
      %s388 = scalar_select %p387, %s386, 1
      %s389 = smul.addr %s388, 8
      %s390 = scalar_lea.vmem %s4, %s389
      // Predicated region
      $region45: #{decoder_forward.19} parent=35 // pred_check
        %p391 = pneg %p146
      $region46: #{decoder_forward.19} parent=35 // pred_check_branch
        %393 = sbr.rel (%p391) target = $region48
      $region47: #{decoder_forward.19} parent=35 // pred_region
        %s394 = smul.u32 2, %s19
      $region48: #{decoder_forward.19} parent=35 // pred_fallthru
        _
      // Predicated region
      $region49: #{decoder_forward.19} parent=35 // pred_check
        %p395 = pneg %p146
      $region50: #{decoder_forward.19} parent=35 // pred_check_branch
        %397 = sbr.rel (%p395) target = $region52
      $region51: #{decoder_forward.19} parent=35 // pred_region
        %s398 = smul.u32 2, %s19
        %p399 = scmp.lt.s32.totalorder %s398, 1
        %s400 = scalar_select %p399, %s398, 1
        %s401 = smul.addr %s400, 8
        %s402 = scalar_lea.vmem %s4, %s401
      $region52: #{decoder_forward.19} parent=35 // pred_fallthru
        _
    $region36: #{decoder_forward.19} parent=5 // pred_fallthru
      _
    %p403 = scmp.le.s32.totalorder 2, %s10
    // Predicated region
    $region53: #{decoder_forward.19} parent=5 // pred_check
      %p404 = pneg %p403
    $region54: #{decoder_forward.19} parent=5 // pred_check_branch
      %406 = sbr.rel (%p404) target = $region56
    $region55: #{decoder_forward.19} parent=5 // pred_region
      %s407 = ssub.s32 %s10, 2
    $region56: #{decoder_forward.19} parent=5 // pred_fallthru
      _
  $region6: #{decoder_forward.19} parent=0 // loop_footer
    %s14 = sadd.s32 1, %s10
  $region7: #{decoder_forward.19} parent=0 // loop_footer_branch
    %9 = sbr.rel target = $region3
  $region8: #{decoder_forward.19} parent=0 // loop_exit
    _

// kernel: decoder_forward.20
$region0: #{decoder_forward.20}
  #allocation0 [shape = 'u32[]', space=smem, size = 0x4, offset = 0x4, fixed_abs, tag = 'smem constant byte address 0x4 - core index']
  #allocation1 [shape = 'u32[144,128]{1,0:T(1,128)}', space=vmem, size = 0x12000, scoped, tag = 'internal scratch']
  #allocation2 [shape = 'f32[16,32]{1,0:T(8,128)}', space=vmem, size = 0x2000, scoped, tag = 'scratch operand']
  %s0 = inlined_call_operand.vmem [shape: f32[16,32], index: 0, kind: input, shape index: {}]
  %s1 = inlined_call_operand.vmem [shape: f32[1,32], index: 1, kind: input, shape index: {}]
  %s2 = inlined_call_operand.vmem [shape: f32[1,32], index: 2, kind: input, shape index: {}]
  %s3 = inlined_call_operand.vmem [shape: f32[4,32,8], index: 3, kind: input, shape index: {}]
  %s4 = inlined_call_operand.vmem [shape: f32[4,1,8], index: 4, kind: input, shape index: {}]
  %s5 = inlined_call_operand.vmem [shape: f32[4,16,8], index: 5, kind: output, shape index: {}]
  %s6 = sld [smem:[#allocation0]]
  $region57: #{decoder_forward.20} parent=0
    _
  %s8 = ssub.s32 1, %s6
  %s9 = scalar_select 0, %s8, %s6
  loop: start=0, step=1, limit=6
  $region2: #{decoder_forward.20} parent=0 // loop_pre_header
    _
  $region3: #{decoder_forward.20} parent=0 // loop_header
    %s11 = sphi 0, %s15
    %p12 = scmp.ge.s32.totalorder %s11, 6
    %s18 = sphi 0, %s30
    %s19 = sphi 0, %s26
    %s20 = sphi 0, %s18
    %s21 = sphi 0, %s19
    %s22 = sphi 0, %s20
    %s23 = sphi 0, %s21
    %s33 = sphi 0, %s35
    %s36 = sphi 0, %s33
    %s37 = sphi 0, %s36
    %s53 = sphi 0, %s37
    %s57 = sphi 0, %s57
    %s59 = sphi 0, %s57
    %s60 = sphi 0, %s59
    %s74 = sphi 0, %s60
    %s78 = sphi 0, %s78
    %s80 = sphi 0, %s78
    %s81 = sphi 0, %s80
    %s95 = sphi 0, %s81
    %s101 = sphi 0, %s103
    %s104 = sphi 0, %s101
    %s105 = sphi 0, %s104
    %s121 = sphi 0, %s105
    %s127 = sphi 0, %s129
    %s130 = sphi 0, %s127
    %s131 = sphi 0, %s130
    %s147 = sphi 0, %s131
    %s155 = sphi 0, %s157
    %s158 = sphi 0, %s155
    %s159 = sphi 0, %s158
    %s175 = sphi 0, %s159
  $region4: #{decoder_forward.20} parent=0 // loop_header_branch
    %14 = sbr.rel (%p12) target = $region8
  $region5: #{decoder_forward.20} parent=0 // loop_body
    %s16 = ssub.s32 %s11, 1
    %s17 = ssub.s32 %s11, 2
    %s24 = sadd.s32 1, %s19
    %p25 = scmp.ge.s32.totalorder %s24, 4
    %s26 = scalar_select %p25, 0, %s24
    %s27 = sadd.s32 1, %s18
    %s28 = scalar_select %p25, %s27, %s18
    %p29 = scmp.ge.s32.totalorder %s28, 1
    %s30 = scalar_select %p29, 0, %s28
    %s31 = ssub.s32 %s18, %s30
    %p32 = scmp.eq.s32.totalorder %s31, 0
    %s34 = sadd.s32 %s33, 1
    %s35 = scalar_select %p32, %s33, %s34
    %p38 = pneg %p32
    %p39 = scmp.eq.s32.totalorder %s11, 3
    %p40 = por %p38, %p39
    %p41 = scmp.ne.s32.totalorder %s33, %s36
    %p42 = scmp.eq.s32.totalorder %s11, 0
    %p43 = por %p41, %p42
    %p44 = scmp.ne.s32.totalorder %s33, %s36
    %p45 = scmp.eq.s32.totalorder %s16, 3
    %p46 = por %p44, %p45
    %p47 = scmp.ne.s32.totalorder %s36, %s37
    %p48 = scmp.eq.s32.totalorder %s16, 0
    %p49 = por %p47, %p48
    %p50 = scmp.ne.s32.totalorder %s36, %s37
    %p51 = scmp.eq.s32.totalorder %s17, 3
    %p52 = por %p50, %p51
    %p54 = scmp.ne.s32.totalorder %s37, %s53
    %p55 = scmp.eq.s32.totalorder %s17, 0
    %p56 = por %p54, %p55
    %s58 = sadd.s32 %s57, 1
    %p61 = scmp.eq.s32.totalorder %s11, 3
    %p62 = scmp.ne.s32.totalorder %s57, %s59
    %p63 = scmp.eq.s32.totalorder %s11, 0
    %p64 = por %p62, %p63
    %p65 = scmp.ne.s32.totalorder %s57, %s59
    %p66 = scmp.eq.s32.totalorder %s16, 3
    %p67 = por %p65, %p66
    %p68 = scmp.ne.s32.totalorder %s59, %s60
    %p69 = scmp.eq.s32.totalorder %s16, 0
    %p70 = por %p68, %p69
    %p71 = scmp.ne.s32.totalorder %s59, %s60
    %p72 = scmp.eq.s32.totalorder %s17, 3
    %p73 = por %p71, %p72
    %p75 = scmp.ne.s32.totalorder %s60, %s74
    %p76 = scmp.eq.s32.totalorder %s17, 0
    %p77 = por %p75, %p76
    %s79 = sadd.s32 %s78, 1
    %p82 = scmp.eq.s32.totalorder %s11, 3
    %p83 = scmp.ne.s32.totalorder %s78, %s80
    %p84 = scmp.eq.s32.totalorder %s11, 0
    %p85 = por %p83, %p84
    %p86 = scmp.ne.s32.totalorder %s78, %s80
    %p87 = scmp.eq.s32.totalorder %s16, 3
    %p88 = por %p86, %p87
    %p89 = scmp.ne.s32.totalorder %s80, %s81
    %p90 = scmp.eq.s32.totalorder %s16, 0
    %p91 = por %p89, %p90
    %p92 = scmp.ne.s32.totalorder %s80, %s81
    %p93 = scmp.eq.s32.totalorder %s17, 3
    %p94 = por %p92, %p93
    %p96 = scmp.ne.s32.totalorder %s81, %s95
    %p97 = scmp.eq.s32.totalorder %s17, 0
    %p98 = por %p96, %p97
    %s99 = ssub.s32 %s19, %s26
    %p100 = scmp.eq.s32.totalorder %s99, 0
    %s102 = sadd.s32 %s101, 1
    %s103 = scalar_select %p100, %s101, %s102
    %p106 = pneg %p100
    %p107 = scmp.eq.s32.totalorder %s11, 3
    %p108 = por %p106, %p107
    %p109 = scmp.ne.s32.totalorder %s101, %s104
    %p110 = scmp.eq.s32.totalorder %s11, 0
    %p111 = por %p109, %p110
    %p112 = scmp.ne.s32.totalorder %s101, %s104
    %p113 = scmp.eq.s32.totalorder %s16, 3
    %p114 = por %p112, %p113
    %p115 = scmp.ne.s32.totalorder %s104, %s105
    %p116 = scmp.eq.s32.totalorder %s16, 0
    %p117 = por %p115, %p116
    %p118 = scmp.ne.s32.totalorder %s104, %s105
    %p119 = scmp.eq.s32.totalorder %s17, 3
    %p120 = por %p118, %p119
    %p122 = scmp.ne.s32.totalorder %s105, %s121
    %p123 = scmp.eq.s32.totalorder %s17, 0
    %p124 = por %p122, %p123
    %s125 = ssub.s32 %s19, %s26
    %p126 = scmp.eq.s32.totalorder %s125, 0
    %s128 = sadd.s32 %s127, 1
    %s129 = scalar_select %p126, %s127, %s128
    %p132 = pneg %p126
    %p133 = scmp.eq.s32.totalorder %s11, 3
    %p134 = por %p132, %p133
    %p135 = scmp.ne.s32.totalorder %s127, %s130
    %p136 = scmp.eq.s32.totalorder %s11, 0
    %p137 = por %p135, %p136
    %p138 = scmp.ne.s32.totalorder %s127, %s130
    %p139 = scmp.eq.s32.totalorder %s16, 3
    %p140 = por %p138, %p139
    %p141 = scmp.ne.s32.totalorder %s130, %s131
    %p142 = scmp.eq.s32.totalorder %s16, 0
    %p143 = por %p141, %p142
    %p144 = scmp.ne.s32.totalorder %s130, %s131
    %p145 = scmp.eq.s32.totalorder %s17, 3
    %p146 = por %p144, %p145
    %p148 = scmp.ne.s32.totalorder %s131, %s147
    %p149 = scmp.eq.s32.totalorder %s17, 0
    %p150 = por %p148, %p149
    %s151 = ssub.s32 %s19, %s26
    %s152 = ssub.s32 %s18, %s30
    %s153 = sor.u32 %s151, %s152
    %p154 = scmp.eq.s32.totalorder %s153, 0
    %s156 = sadd.s32 %s155, 1
    %s157 = scalar_select %p154, %s155, %s156
    %p160 = pneg %p154
    %p161 = scmp.eq.s32.totalorder %s11, 3
    %p162 = por %p160, %p161
    %p163 = scmp.ne.s32.totalorder %s155, %s158
    %p164 = scmp.eq.s32.totalorder %s11, 0
    %p165 = por %p163, %p164
    %p166 = scmp.ne.s32.totalorder %s155, %s158
    %p167 = scmp.eq.s32.totalorder %s16, 3
    %p168 = por %p166, %p167
    %p169 = scmp.ne.s32.totalorder %s158, %s159
    %p170 = scmp.eq.s32.totalorder %s16, 0
    %p171 = por %p169, %p170
    %p172 = scmp.ne.s32.totalorder %s158, %s159
    %p173 = scmp.eq.s32.totalorder %s17, 3
    %p174 = por %p172, %p173
    %p176 = scmp.ne.s32.totalorder %s159, %s175
    %p177 = scmp.eq.s32.totalorder %s17, 0
    %p178 = por %p176, %p177
    %p179 = scmp.le.s32.totalorder 1, %s11
    %p180 = scmp.lt.s32.totalorder %s11, 5
    %p181 = pnand %p179, %p180
    %p182 = pneg %p181
    // Predicated region
    $region9: #{decoder_forward.20} parent=5 // pred_check
      _
    $region10: #{decoder_forward.20} parent=5 // pred_check_branch
      %184 = sbr.rel (%p181) target = $region12
    $region11: #{decoder_forward.20} parent=5 // pred_region
      %s185 = ssub.s32 %s11, 1
      // Predicated region
      $region13: #{decoder_forward.20} parent=11 // pred_check
        %p186 = pneg %p49
      $region14: #{decoder_forward.20} parent=11 // pred_check_branch
        %188 = sbr.rel (%p186) target = $region16
      $region15: #{decoder_forward.20} parent=11 // pred_region
        %s189 = smul.u32 2, %s20
        %p190 = scmp.lt.s32.totalorder %s189, 1
        %s191 = scalar_select %p190, %s189, 1
        %s192 = smul.addr %s191, 8
        %s193 = scalar_lea.vmem %s0, %s192
        %s194 = smul.u32 2, %s20
      $region16: #{decoder_forward.20} parent=11 // pred_fallthru
        _
      // Predicated region
      $region17: #{decoder_forward.20} parent=11 // pred_check
        %p195 = pneg %p70
      $region18: #{decoder_forward.20} parent=11 // pred_check_branch
        %197 = sbr.rel (%p195) target = $region20
      $region19: #{decoder_forward.20} parent=11 // pred_region
        _
      $region20: #{decoder_forward.20} parent=11 // pred_fallthru
        _
      // Predicated region
      $region21: #{decoder_forward.20} parent=11 // pred_check
        %p198 = pneg %p91
      $region22: #{decoder_forward.20} parent=11 // pred_check_branch
        %200 = sbr.rel (%p198) target = $region24
      $region23: #{decoder_forward.20} parent=11 // pred_region
        _
      $region24: #{decoder_forward.20} parent=11 // pred_fallthru
        _
    $region12: #{decoder_forward.20} parent=5 // pred_fallthru
      _
    %p201 = scmp.lt.s32.totalorder %s11, 4
    // Predicated region
    $region25: #{decoder_forward.20} parent=5 // pred_check
      %p202 = pneg %p201
    $region26: #{decoder_forward.20} parent=5 // pred_check_branch
      %204 = sbr.rel (%p202) target = $region28
    $region27: #{decoder_forward.20} parent=5 // pred_region
      // Predicated region
      $region29: #{decoder_forward.20} parent=27 // pred_check
        %p205 = pneg %p111
      $region30: #{decoder_forward.20} parent=27 // pred_check_branch
        %207 = sbr.rel (%p205) target = $region32
      $region31: #{decoder_forward.20} parent=27 // pred_region
        %p208 = scmp.lt.s32.totalorder %s19, 3
        %s209 = scalar_select %p208, %s19, 3
        %s210 = smul.addr %s209, 4
        %s211 = smul.addr %s210, 8
        %s212 = scalar_lea.vmem %s3, %s211
      $region32: #{decoder_forward.20} parent=27 // pred_fallthru
        _
      // Predicated region
      $region33: #{decoder_forward.20} parent=27 // pred_check
        %p213 = pneg %p137
      $region34: #{decoder_forward.20} parent=27 // pred_check_branch
        %215 = sbr.rel (%p213) target = $region36
      $region35: #{decoder_forward.20} parent=27 // pred_region
        %p216 = scmp.lt.s32.totalorder %s19, 3
        %s217 = scalar_select %p216, %s19, 3
        %s218 = scalar_lea.vmem %s4, %s217
      $region36: #{decoder_forward.20} parent=27 // pred_fallthru
        _
    $region28: #{decoder_forward.20} parent=5 // pred_fallthru
      _
    %p219 = scmp.le.s32.totalorder 1, %s11
    %p220 = scmp.lt.s32.totalorder %s11, 5
    %p221 = pnand %p219, %p220
    %p222 = pneg %p221
    // Predicated region
    $region37: #{decoder_forward.20} parent=5 // pred_check
      _
    $region38: #{decoder_forward.20} parent=5 // pred_check_branch
      %224 = sbr.rel (%p221) target = $region40
    $region39: #{decoder_forward.20} parent=5 // pred_region
      %s225 = ssub.s32 %s11, 1
      %s226 = smul.u32 2, %s20
      %p227 = scmp.lt.s32.totalorder %s226, 1
      %s228 = scalar_select %p227, %s226, 1
      %s229 = smul.addr %s228, 8
      %s230 = scalar_lea.vmem %s0, %s229
      %p231 = pneg %p49
      %p232 = pneg %p46
      %p233 = pneg %p70
      %p234 = pneg %p67
      %p235 = pneg %p91
      %p236 = pneg %p88
      %p237 = scmp.lt.s32.totalorder %s21, 3
      %s238 = scalar_select %p237, %s21, 3
      %s239 = smul.addr %s238, 4
      %s240 = smul.addr %s239, 8
      %s241 = scalar_lea.vmem %s3, %s240
      %p242 = pneg %p117
      %p243 = pneg %p114
      %p244 = scmp.lt.s32.totalorder %s21, 3
      %s245 = scalar_select %p244, %s21, 3
      %s246 = scalar_lea.vmem %s4, %s245
      %p247 = pneg %p143
      %p248 = pneg %p140
      %p249 = pneg %p171
      %p250 = pneg %p168
      %s251 = smul.u32 2, %s20
      %p252 = scmp.lt.s32.totalorder %s21, 3
      %s253 = scalar_select %p252, %s21, 3
      %p254 = scmp.lt.s32.totalorder %s251, 1
      %s255 = scalar_select %p254, %s251, 1
      %s256 = smul.addr %s253, 2
      %s257 = sadd.s32 %s255, %s256
      %s258 = smul.addr %s257, 8
      %s259 = scalar_lea.vmem %s5, %s258
      %s260 = smul.u32 2, %s20
      %p261 = scmp.lt.s32.totalorder %s260, 1
      %s262 = scalar_select %p261, %s260, 1
      %s263 = smul.addr %s262, 8
      %s264 = scalar_lea.vmem %s0, %s263
      %s265 = smul.u32 2, %s20
      %p266 = scmp.lt.s32.totalorder %s21, 3
      %s267 = scalar_select %p266, %s21, 3
      %s268 = smul.addr %s267, 4
      %s269 = smul.addr %s268, 8
      %s270 = scalar_lea.vmem %s3, %s269
      %p271 = scmp.lt.s32.totalorder %s21, 3
      %s272 = scalar_select %p271, %s21, 3
      %s273 = scalar_lea.vmem %s4, %s272
      %s274 = smul.u32 2, %s20
      %p275 = scmp.lt.s32.totalorder %s21, 3
      %s276 = scalar_select %p275, %s21, 3
      %p277 = scmp.lt.s32.totalorder %s274, 1
      %s278 = scalar_select %p277, %s274, 1
      %s279 = smul.addr %s276, 2
      %s280 = sadd.s32 %s278, %s279
      %s281 = smul.addr %s280, 8
      %s282 = scalar_lea.vmem %s5, %s281
      %s283 = smul.u32 2, %s20
      %p284 = scmp.eq.s32.totalorder %s21, 0
      // Predicated region
      $region41: #{decoder_forward.20} parent=39 // pred_check
        %p285 = pneg %p284
      $region42: #{decoder_forward.20} parent=39 // pred_check_branch
        %287 = sbr.rel (%p285) target = $region44
      $region43: #{decoder_forward.20} parent=39 // pred_region
        %v288 = vld [vmem:[%s264] sm:$0xff]
        %v289 = vld [vmem:[%s264 + $0x8] sm:$0xff]
        %v290 = vld [vmem:[%s1] sm:$0x1]
        %v291 = vld [vmem:[%s2] sm:$0x1]
        %vm292 = vcmask 261120
        %v293 = vsel %vm292, %v288, 0.0
        %294 = vadd.xlane.f32.xlu0 %v293
        %v295 = vpop.xlane.xlu0 %294
        %v296 = vsel %vm292, %v289, 0.0
        %297 = vadd.xlane.f32.xlu0 %v296
        %v298 = vpop.xlane.xlu0 %297
        %v299 = vrcp.pop 32.0
        %v300 = vmul.f32 %v295, %v299
        %v301 = vmul.f32 %v298, %v299
        %v302 = vsub.f32 %v288, %v300
        %v303 = vsub.f32 %v289, %v301
        %v304 = vmul.f32 %v302, %v302
        %v305 = vmul.f32 %v303, %v303
        %v306 = vsel %vm292, %v304, 0.0
        %307 = vadd.xlane.f32.xlu0 %v306
        %v308 = vpop.xlane.xlu0 %307
        %v309 = vsel %vm292, %v305, 0.0
        %310 = vadd.xlane.f32.xlu0 %v309
        %v311 = vpop.xlane.xlu0 %310
        %v312 = vmul.f32 %v308, 0.032258064
        %v313 = vmul.f32 %v311, 0.032258064
        %v314 = vrsqrt.pop %v312
        %v315 = vmul.f32 %v312, %v314
        %vm316 = vcmp.eq.f32.partialorder %v312, inf
        %v317 = vsel %vm316, %v312, %v315
        %vm318 = vcmp.eq.f32.partialorder %v312, 0.0
        %v319 = vand.u32 %v312, 2147483648
        %v320 = vsel %vm318, %v319, %v317
        %v321 = vrsqrt.pop %v313
        %v322 = vmul.f32 %v313, %v321
        %vm323 = vcmp.eq.f32.partialorder %v313, inf
        %v324 = vsel %vm323, %v313, %v322
        %vm325 = vcmp.eq.f32.partialorder %v313, 0.0
        %v326 = vand.u32 %v313, 2147483648
        %v327 = vsel %vm325, %v326, %v324
        %v328 = vadd.f32 %v320, 1e-06
        %v329 = vadd.f32 %v327, 1e-06
        %v330 = vrcp.pop %v328
        %v331 = vmul.f32 1.0, %v330
        %v332 = vrcp.pop %v329
        %v333 = vmul.f32 1.0, %v332
        %v334 = vmul.f32 %v302, %v331
        %v335 = vmul.f32 %v303, %v333
        %v337 = vlaneseq
        %v338 = vshrl.u32 %v337, 7
        %v339 = vsub.s32 0, %v338
        %v340 = vrot.slane %v290, %v339
        %v342 = vmul.f32 %v340, %v334
        %v343 = vmul.f32 %v340, %v335
        %v345 = vlaneseq
        %v346 = vshrl.u32 %v345, 7
        %v347 = vsub.s32 0, %v346
        %v348 = vrot.slane %v291, %v347
        %v350 = vadd.f32 %v342, %v348
        %v351 = vadd.f32 %v343, %v348
        %352 = vst.msk [vmem:[#allocation2] sm:$0xff] %vm292, %v350
        %353 = vst.msk [vmem:[#allocation2 + $0x8] sm:$0xff] %vm292, %v351
      $region44: #{decoder_forward.20} parent=39 // pred_fallthru
        _
      %v354 = vld [vmem:[#allocation2] sm:$0xff]
      %v355 = vld [vmem:[#allocation2 + $0x8] sm:$0xff]
      %v356 = vld [vmem:[%s270] sm:$0xff]
      %v357 = vld [vmem:[%s270 + $0x8] sm:$0xff]
      %v358 = vld [vmem:[%s270 + $0x10] sm:$0xff]
      %v359 = vld [vmem:[%s270 + $0x18] sm:$0xff]
      %v360 = vld [vmem:[%s273] sm:$0x1]
      %v362 = vlaneseq
      %v363 = vshrl.u32 %v362, 7
      %v364 = vsub.s32 0, %v363
      %v365 = vrot.slane %v360, %v364
      %vm367 = vcmask 261120
      %v369 = vsel %vm367, %v354, 0
      %v372 = vsel %vm367, %v355, 0
      %374 = vmatprep.subr.mxu0 0.0
      %375 = vmatpush1.msra.mxu0 %v356
      %376 = vmatprep.subr.mxu0 0.0
      %377 = vmatpush1.msra.mxu0 %v357
      %378 = vmatprep.subr.mxu0 0.0
      %379 = vmatpush1.msra.mxu0 %v358
      %380 = vmatprep.subr.mxu0 0.0
      %381 = vmatpush1.msra.mxu0 %v359
      %382 = vmatprep.subr.mxu0 0.0
      %383 = vmatpush1.msra.mxu0 0.0
      %384 = vmatprep.subr.mxu0 0.0
      %385 = vmatpush1.msra.mxu0 0.0
      %386 = vmatprep.subr.mxu0 0.0
      %387 = vmatpush1.msra.mxu0 0.0
      %388 = vmatprep.subr.mxu0 0.0
      %389 = vmatpush1.msra.mxu0 0.0
      %390 = vmatprep.subr.mxu0 0.0
      %391 = vmatpush1.msra.mxu0 0.0
      %392 = vmatprep.subr.mxu0 0.0
      %393 = vmatpush1.msra.mxu0 0.0
      %394 = vmatprep.subr.mxu0 0.0
      %395 = vmatpush1.msra.mxu0 0.0
      %396 = vmatprep.subr.mxu0 0.0
      %397 = vmatpush1.msra.mxu0 0.0
      %398 = vmatprep.subr.mxu0 0.0
      %399 = vmatpush1.msra.mxu0 0.0
      %400 = vmatprep.subr.mxu0 0.0
      %401 = vmatpush1.msra.mxu0 0.0
      %402 = vmatprep.subr.mxu0 0.0
      %403 = vmatpush1.msra.mxu0 0.0
      %404 = vmatprep.subr.mxu0 0.0
      %405 = vmatpush1.msra.mxu0 0.0
      %406 = vmatprep.subr.mxu0 0.0
      %407 = vmatpush1.msra.mxu0 0.0
      %408 = vmatprep.subr.mxu0 0.0
      %409 = vmatpush1.msra.mxu0 0.0
      %410 = vmatprep.subr.mxu0 0.0
      %411 = vmatpush1.msra.mxu0 0.0
      %412 = vmatprep.subr.mxu0 0.0
      %413 = vmatpush1.msra.mxu0 0.0
      %414 = vmatprep.subr.mxu0 0.0
      %415 = vmatpush1.msra.mxu0 0.0
      %416 = vmatprep.subr.mxu0 0.0
      %417 = vmatpush1.msra.mxu0 0.0
      %418 = vmatprep.subr.mxu0 0.0
      %419 = vmatpush1.msra.mxu0 0.0
      %420 = vmatprep.subr.mxu0 0.0
      %421 = vmatpush1.msra.mxu0 0.0
      %422 = vmatprep.subr.mxu0 0.0
      %423 = vmatpush1.msra.mxu0 0.0
      %424 = vmatprep.subr.mxu0 0.0
      %425 = vmatpush1.msra.mxu0 0.0
      %426 = vmatprep.subr.mxu0 0.0
      %427 = vmatpush1.msra.mxu0 0.0
      %428 = vmatprep.subr.mxu0 0.0
      %429 = vmatpush1.msra.mxu0 0.0
      %430 = vmatprep.subr.mxu0 0.0
      %431 = vmatpush1.msra.mxu0 0.0
      %432 = vmatprep.subr.mxu0 0.0
      %433 = vmatpush1.msra.mxu0 0.0
      %434 = vmatprep.subr.mxu0 0.0
      %435 = vmatpush1.msra.mxu0 0.0
      %436 = vmatprep.subr.mxu0 0.0
      %437 = vmatpush1.msra.mxu0 0.0
      %438 = vmatprep.mubr.f32.mxu0 0.0
      %439 = vmatmul.mubr.f32.gmra.mrb[0].mxu0 %v369
      %v440 = vpop.f32.mrb[0].mxu0
      %v441 = vadd.f32 %v365, %v440
      %v442 = vpop.f32.mrb[0].mxu0
      %443 = vmatprep.mubr.f32.mxu0 0.0
      %444 = vmatmul.mubr.f32.gmra.mrb[0].mxu0 %v372
      %v445 = vpop.f32.mrb[0].mxu0
      %v446 = vadd.f32 %v365, %v445
      %v447 = vpop.f32.mrb[0].mxu0
      %448 = vdwg.mxu0
      %vm449 = vcmask 64512
      %450 = vst.msk [vmem:[%s282] sm:$0xff] %vm449, %v441
      %451 = vst.msk [vmem:[%s282 + $0x8] sm:$0xff] %vm449, %v446
      %s452 = smul.u32 2, %s20
      %p453 = scmp.lt.s32.totalorder %s21, 3
      %s454 = scalar_select %p453, %s21, 3
      %p455 = scmp.lt.s32.totalorder %s452, 1
      %s456 = scalar_select %p455, %s452, 1
      %s457 = smul.addr %s454, 2
      %s458 = sadd.s32 %s456, %s457
      %s459 = smul.addr %s458, 8
      %s460 = scalar_lea.vmem %s5, %s459
      // Predicated region
      $region45: #{decoder_forward.20} parent=39 // pred_check
        %p461 = pneg %p168
      $region46: #{decoder_forward.20} parent=39 // pred_check_branch
        %463 = sbr.rel (%p461) target = $region48
      $region47: #{decoder_forward.20} parent=39 // pred_region
        %s464 = smul.u32 2, %s20
      $region48: #{decoder_forward.20} parent=39 // pred_fallthru
        _
    $region40: #{decoder_forward.20} parent=5 // pred_fallthru
      _
    %p465 = scmp.le.s32.totalorder 2, %s11
    // Predicated region
    $region49: #{decoder_forward.20} parent=5 // pred_check
      %p466 = pneg %p465
    $region50: #{decoder_forward.20} parent=5 // pred_check_branch
      %468 = sbr.rel (%p466) target = $region52
    $region51: #{decoder_forward.20} parent=5 // pred_region
      %s469 = ssub.s32 %s11, 2
      // Predicated region
      $region53: #{decoder_forward.20} parent=51 // pred_check
        %p470 = pneg %p174
      $region54: #{decoder_forward.20} parent=51 // pred_check_branch
        %472 = sbr.rel (%p470) target = $region56
      $region55: #{decoder_forward.20} parent=51 // pred_region
        %s473 = smul.u32 2, %s22
        %p474 = scmp.lt.s32.totalorder %s23, 3
        %s475 = scalar_select %p474, %s23, 3
        %p476 = scmp.lt.s32.totalorder %s473, 1
        %s477 = scalar_select %p476, %s473, 1
        %s478 = smul.addr %s475, 2
        %s479 = sadd.s32 %s477, %s478
        %s480 = smul.addr %s479, 8
        %s481 = scalar_lea.vmem %s5, %s480
      $region56: #{decoder_forward.20} parent=51 // pred_fallthru
        _
    $region52: #{decoder_forward.20} parent=5 // pred_fallthru
      _
  $region6: #{decoder_forward.20} parent=0 // loop_footer
    %s15 = sadd.s32 1, %s11
  $region7: #{decoder_forward.20} parent=0 // loop_footer_branch
    %10 = sbr.rel target = $region3
  $region8: #{decoder_forward.20} parent=0 // loop_exit
    _

// kernel: decoder_forward.21
$region0: #{decoder_forward.21}
  #allocation0 [shape = 'u32[]', space=smem, size = 0x4, offset = 0x4, fixed_abs, tag = 'smem constant byte address 0x4 - core index']
  #allocation1 [shape = 'u32[144,128]{1,0:T(1,128)}', space=vmem, size = 0x12000, scoped, tag = 'internal scratch']
  #allocation2 [shape = 'f32[16,32]{1,0:T(8,128)}', space=vmem, size = 0x2000, scoped, tag = 'scratch operand']
  %s0 = inlined_call_operand.vmem [shape: f32[16,32], index: 0, kind: input, shape index: {}]
  %s1 = inlined_call_operand.vmem [shape: f32[1,32], index: 1, kind: input, shape index: {}]
  %s2 = inlined_call_operand.vmem [shape: f32[1,32], index: 2, kind: input, shape index: {}]
  %s3 = inlined_call_operand.vmem [shape: f32[8,32,8], index: 3, kind: input, shape index: {}]
  %s4 = inlined_call_operand.vmem [shape: f32[8,1,8], index: 4, kind: input, shape index: {}]
  %s5 = inlined_call_operand.vmem [shape: f32[8,16,8], index: 5, kind: output, shape index: {}]
  %s6 = sld [smem:[#allocation0]]
  $region53: #{decoder_forward.21} parent=0
    _
  %s8 = ssub.s32 1, %s6
  %s9 = scalar_select 0, %s8, %s6
  loop: start=0, step=1, limit=10
  $region2: #{decoder_forward.21} parent=0 // loop_pre_header
    _
  $region3: #{decoder_forward.21} parent=0 // loop_header
    %s11 = sphi 0, %s15
    %p12 = scmp.ge.s32.totalorder %s11, 10
    %s18 = sphi 0, %s30
    %s19 = sphi 0, %s26
    %s20 = sphi 0, %s18
    %s21 = sphi 0, %s19
    %s22 = sphi 0, %s20
    %s23 = sphi 0, %s21
    %s33 = sphi 0, %s35
    %s36 = sphi 0, %s33
    %s37 = sphi 0, %s36
    %s53 = sphi 0, %s37
    %s57 = sphi 0, %s57
    %s59 = sphi 0, %s57
    %s60 = sphi 0, %s59
    %s74 = sphi 0, %s60
    %s78 = sphi 0, %s78
    %s80 = sphi 0, %s78
    %s81 = sphi 0, %s80
    %s95 = sphi 0, %s81
    %s101 = sphi 0, %s103
    %s104 = sphi 0, %s101
    %s105 = sphi 0, %s104
    %s121 = sphi 0, %s105
    %s127 = sphi 0, %s129
    %s130 = sphi 0, %s127
    %s131 = sphi 0, %s130
    %s147 = sphi 0, %s131
    %s155 = sphi 0, %s157
    %s158 = sphi 0, %s155
    %s159 = sphi 0, %s158
    %s175 = sphi 0, %s159
  $region4: #{decoder_forward.21} parent=0 // loop_header_branch
    %14 = sbr.rel (%p12) target = $region8
  $region5: #{decoder_forward.21} parent=0 // loop_body
    %s16 = ssub.s32 %s11, 1
    %s17 = ssub.s32 %s11, 2
    %s24 = sadd.s32 1, %s19
    %p25 = scmp.ge.s32.totalorder %s24, 8
    %s26 = scalar_select %p25, 0, %s24
    %s27 = sadd.s32 1, %s18
    %s28 = scalar_select %p25, %s27, %s18
    %p29 = scmp.ge.s32.totalorder %s28, 1
    %s30 = scalar_select %p29, 0, %s28
    %s31 = ssub.s32 %s18, %s30
    %p32 = scmp.eq.s32.totalorder %s31, 0
    %s34 = sadd.s32 %s33, 1
    %s35 = scalar_select %p32, %s33, %s34
    %p38 = pneg %p32
    %p39 = scmp.eq.s32.totalorder %s11, 7
    %p40 = por %p38, %p39
    %p41 = scmp.ne.s32.totalorder %s33, %s36
    %p42 = scmp.eq.s32.totalorder %s11, 0
    %p43 = por %p41, %p42
    %p44 = scmp.ne.s32.totalorder %s33, %s36
    %p45 = scmp.eq.s32.totalorder %s16, 7
    %p46 = por %p44, %p45
    %p47 = scmp.ne.s32.totalorder %s36, %s37
    %p48 = scmp.eq.s32.totalorder %s16, 0
    %p49 = por %p47, %p48
    %p50 = scmp.ne.s32.totalorder %s36, %s37
    %p51 = scmp.eq.s32.totalorder %s17, 7
    %p52 = por %p50, %p51
    %p54 = scmp.ne.s32.totalorder %s37, %s53
    %p55 = scmp.eq.s32.totalorder %s17, 0
    %p56 = por %p54, %p55
    %s58 = sadd.s32 %s57, 1
    %p61 = scmp.eq.s32.totalorder %s11, 7
    %p62 = scmp.ne.s32.totalorder %s57, %s59
    %p63 = scmp.eq.s32.totalorder %s11, 0
    %p64 = por %p62, %p63
    %p65 = scmp.ne.s32.totalorder %s57, %s59
    %p66 = scmp.eq.s32.totalorder %s16, 7
    %p67 = por %p65, %p66
    %p68 = scmp.ne.s32.totalorder %s59, %s60
    %p69 = scmp.eq.s32.totalorder %s16, 0
    %p70 = por %p68, %p69
    %p71 = scmp.ne.s32.totalorder %s59, %s60
    %p72 = scmp.eq.s32.totalorder %s17, 7
    %p73 = por %p71, %p72
    %p75 = scmp.ne.s32.totalorder %s60, %s74
    %p76 = scmp.eq.s32.totalorder %s17, 0
    %p77 = por %p75, %p76
    %s79 = sadd.s32 %s78, 1
    %p82 = scmp.eq.s32.totalorder %s11, 7
    %p83 = scmp.ne.s32.totalorder %s78, %s80
    %p84 = scmp.eq.s32.totalorder %s11, 0
    %p85 = por %p83, %p84
    %p86 = scmp.ne.s32.totalorder %s78, %s80
    %p87 = scmp.eq.s32.totalorder %s16, 7
    %p88 = por %p86, %p87
    %p89 = scmp.ne.s32.totalorder %s80, %s81
    %p90 = scmp.eq.s32.totalorder %s16, 0
    %p91 = por %p89, %p90
    %p92 = scmp.ne.s32.totalorder %s80, %s81
    %p93 = scmp.eq.s32.totalorder %s17, 7
    %p94 = por %p92, %p93
    %p96 = scmp.ne.s32.totalorder %s81, %s95
    %p97 = scmp.eq.s32.totalorder %s17, 0
    %p98 = por %p96, %p97
    %s99 = ssub.s32 %s19, %s26
    %p100 = scmp.eq.s32.totalorder %s99, 0
    %s102 = sadd.s32 %s101, 1
    %s103 = scalar_select %p100, %s101, %s102
    %p106 = pneg %p100
    %p107 = scmp.eq.s32.totalorder %s11, 7
    %p108 = por %p106, %p107
    %p109 = scmp.ne.s32.totalorder %s101, %s104
    %p110 = scmp.eq.s32.totalorder %s11, 0
    %p111 = por %p109, %p110
    %p112 = scmp.ne.s32.totalorder %s101, %s104
    %p113 = scmp.eq.s32.totalorder %s16, 7
    %p114 = por %p112, %p113
    %p115 = scmp.ne.s32.totalorder %s104, %s105
    %p116 = scmp.eq.s32.totalorder %s16, 0
    %p117 = por %p115, %p116
    %p118 = scmp.ne.s32.totalorder %s104, %s105
    %p119 = scmp.eq.s32.totalorder %s17, 7
    %p120 = por %p118, %p119
    %p122 = scmp.ne.s32.totalorder %s105, %s121
    %p123 = scmp.eq.s32.totalorder %s17, 0
    %p124 = por %p122, %p123
    %s125 = ssub.s32 %s19, %s26
    %p126 = scmp.eq.s32.totalorder %s125, 0
    %s128 = sadd.s32 %s127, 1
    %s129 = scalar_select %p126, %s127, %s128
    %p132 = pneg %p126
    %p133 = scmp.eq.s32.totalorder %s11, 7
    %p134 = por %p132, %p133
    %p135 = scmp.ne.s32.totalorder %s127, %s130
    %p136 = scmp.eq.s32.totalorder %s11, 0
    %p137 = por %p135, %p136
    %p138 = scmp.ne.s32.totalorder %s127, %s130
    %p139 = scmp.eq.s32.totalorder %s16, 7
    %p140 = por %p138, %p139
    %p141 = scmp.ne.s32.totalorder %s130, %s131
    %p142 = scmp.eq.s32.totalorder %s16, 0
    %p143 = por %p141, %p142
    %p144 = scmp.ne.s32.totalorder %s130, %s131
    %p145 = scmp.eq.s32.totalorder %s17, 7
    %p146 = por %p144, %p145
    %p148 = scmp.ne.s32.totalorder %s131, %s147
    %p149 = scmp.eq.s32.totalorder %s17, 0
    %p150 = por %p148, %p149
    %s151 = ssub.s32 %s19, %s26
    %s152 = ssub.s32 %s18, %s30
    %s153 = sor.u32 %s151, %s152
    %p154 = scmp.eq.s32.totalorder %s153, 0
    %s156 = sadd.s32 %s155, 1
    %s157 = scalar_select %p154, %s155, %s156
    %p160 = pneg %p154
    %p161 = scmp.eq.s32.totalorder %s11, 7
    %p162 = por %p160, %p161
    %p163 = scmp.ne.s32.totalorder %s155, %s158
    %p164 = scmp.eq.s32.totalorder %s11, 0
    %p165 = por %p163, %p164
    %p166 = scmp.ne.s32.totalorder %s155, %s158
    %p167 = scmp.eq.s32.totalorder %s16, 7
    %p168 = por %p166, %p167
    %p169 = scmp.ne.s32.totalorder %s158, %s159
    %p170 = scmp.eq.s32.totalorder %s16, 0
    %p171 = por %p169, %p170
    %p172 = scmp.ne.s32.totalorder %s158, %s159
    %p173 = scmp.eq.s32.totalorder %s17, 7
    %p174 = por %p172, %p173
    %p176 = scmp.ne.s32.totalorder %s159, %s175
    %p177 = scmp.eq.s32.totalorder %s17, 0
    %p178 = por %p176, %p177
    %p179 = scmp.le.s32.totalorder 1, %s11
    %p180 = scmp.lt.s32.totalorder %s11, 9
    %p181 = pnand %p179, %p180
    %p182 = pneg %p181
    // Predicated region
    $region9: #{decoder_forward.21} parent=5 // pred_check
      _
    $region10: #{decoder_forward.21} parent=5 // pred_check_branch
      %184 = sbr.rel (%p181) target = $region12
    $region11: #{decoder_forward.21} parent=5 // pred_region
      %s185 = ssub.s32 %s11, 1
      // Predicated region
      $region13: #{decoder_forward.21} parent=11 // pred_check
        %p186 = pneg %p49
      $region14: #{decoder_forward.21} parent=11 // pred_check_branch
        %188 = sbr.rel (%p186) target = $region16
      $region15: #{decoder_forward.21} parent=11 // pred_region
        %s189 = smul.u32 2, %s20
        %p190 = scmp.lt.s32.totalorder %s189, 1
        %s191 = scalar_select %p190, %s189, 1
        %s192 = smul.addr %s191, 8
        %s193 = scalar_lea.vmem %s0, %s192
        %s194 = smul.u32 2, %s20
      $region16: #{decoder_forward.21} parent=11 // pred_fallthru
        _
      // Predicated region
      $region17: #{decoder_forward.21} parent=11 // pred_check
        %p195 = pneg %p70
      $region18: #{decoder_forward.21} parent=11 // pred_check_branch
        %197 = sbr.rel (%p195) target = $region20
      $region19: #{decoder_forward.21} parent=11 // pred_region
        _
      $region20: #{decoder_forward.21} parent=11 // pred_fallthru
        _
      // Predicated region
      $region21: #{decoder_forward.21} parent=11 // pred_check
        %p198 = pneg %p91
      $region22: #{decoder_forward.21} parent=11 // pred_check_branch
        %200 = sbr.rel (%p198) target = $region24
      $region23: #{decoder_forward.21} parent=11 // pred_region
        _
      $region24: #{decoder_forward.21} parent=11 // pred_fallthru
        _
    $region12: #{decoder_forward.21} parent=5 // pred_fallthru
      _
    %p201 = scmp.lt.s32.totalorder %s11, 8
    // Predicated region
    $region25: #{decoder_forward.21} parent=5 // pred_check
      %p202 = pneg %p201
    $region26: #{decoder_forward.21} parent=5 // pred_check_branch
      %204 = sbr.rel (%p202) target = $region28
    $region27: #{decoder_forward.21} parent=5 // pred_region
      // Predicated region
      $region29: #{decoder_forward.21} parent=27 // pred_check
        %p205 = pneg %p111
      $region30: #{decoder_forward.21} parent=27 // pred_check_branch
        %207 = sbr.rel (%p205) target = $region32
      $region31: #{decoder_forward.21} parent=27 // pred_region
        %p208 = scmp.lt.s32.totalorder %s19, 7
        %s209 = scalar_select %p208, %s19, 7
        %s210 = smul.addr %s209, 4
        %s211 = smul.addr %s210, 8
        %s212 = scalar_lea.vmem %s3, %s211
      $region32: #{decoder_forward.21} parent=27 // pred_fallthru
        _
      // Predicated region
      $region33: #{decoder_forward.21} parent=27 // pred_check
        %p213 = pneg %p137
      $region34: #{decoder_forward.21} parent=27 // pred_check_branch
        %215 = sbr.rel (%p213) target = $region36
      $region35: #{decoder_forward.21} parent=27 // pred_region
        %p216 = scmp.lt.s32.totalorder %s19, 7
        %s217 = scalar_select %p216, %s19, 7
        %s218 = scalar_lea.vmem %s4, %s217
      $region36: #{decoder_forward.21} parent=27 // pred_fallthru
        _
    $region28: #{decoder_forward.21} parent=5 // pred_fallthru
      _
    %p219 = scmp.le.s32.totalorder 1, %s11
    %p220 = scmp.lt.s32.totalorder %s11, 9
    %p221 = pnand %p219, %p220
    %p222 = pneg %p221
    // Predicated region
    $region37: #{decoder_forward.21} parent=5 // pred_check
      _
    $region38: #{decoder_forward.21} parent=5 // pred_check_branch
      %224 = sbr.rel (%p221) target = $region40
    $region39: #{decoder_forward.21} parent=5 // pred_region
      %s225 = ssub.s32 %s11, 1
      %s226 = smul.u32 2, %s20
      %p227 = scmp.lt.s32.totalorder %s226, 1
      %s228 = scalar_select %p227, %s226, 1
      %s229 = smul.addr %s228, 8
      %s230 = scalar_lea.vmem %s0, %s229
      %p231 = pneg %p49
      %p232 = pneg %p46
      %p233 = pneg %p70
      %p234 = pneg %p67
      %p235 = pneg %p91
      %p236 = pneg %p88
      %p237 = scmp.lt.s32.totalorder %s21, 7
      %s238 = scalar_select %p237, %s21, 7
      %s239 = smul.addr %s238, 4
      %s240 = smul.addr %s239, 8
      %s241 = scalar_lea.vmem %s3, %s240
      %p242 = pneg %p117
      %p243 = pneg %p114
      %p244 = scmp.lt.s32.totalorder %s21, 7
      %s245 = scalar_select %p244, %s21, 7
      %s246 = scalar_lea.vmem %s4, %s245
      %p247 = pneg %p143
      %p248 = pneg %p140
      %p249 = pneg %p171
      %p250 = pneg %p168
      %s251 = smul.u32 2, %s20
      %p252 = scmp.lt.s32.totalorder %s21, 7
      %s253 = scalar_select %p252, %s21, 7
      %p254 = scmp.lt.s32.totalorder %s251, 1
      %s255 = scalar_select %p254, %s251, 1
      %s256 = smul.addr %s253, 2
      %s257 = sadd.s32 %s255, %s256
      %s258 = smul.addr %s257, 8
      %s259 = scalar_lea.vmem %s5, %s258
      %s260 = smul.u32 2, %s20
      %p261 = scmp.lt.s32.totalorder %s260, 1
      %s262 = scalar_select %p261, %s260, 1
      %s263 = smul.addr %s262, 8
      %s264 = scalar_lea.vmem %s0, %s263
      %s265 = smul.u32 2, %s20
      %p266 = scmp.lt.s32.totalorder %s21, 7
      %s267 = scalar_select %p266, %s21, 7
      %s268 = smul.addr %s267, 4
      %s269 = smul.addr %s268, 8
      %s270 = scalar_lea.vmem %s3, %s269
      %p271 = scmp.lt.s32.totalorder %s21, 7
      %s272 = scalar_select %p271, %s21, 7
      %s273 = scalar_lea.vmem %s4, %s272
      %s274 = smul.u32 2, %s20
      %p275 = scmp.lt.s32.totalorder %s21, 7
      %s276 = scalar_select %p275, %s21, 7
      %p277 = scmp.lt.s32.totalorder %s274, 1
      %s278 = scalar_select %p277, %s274, 1
      %s279 = smul.addr %s276, 2
      %s280 = sadd.s32 %s278, %s279
      %s281 = smul.addr %s280, 8
      %s282 = scalar_lea.vmem %s5, %s281
      %s283 = smul.u32 2, %s20
      %v284 = vld [vmem:[%s264] sm:$0xff]
      %v285 = vld [vmem:[%s264 + $0x8] sm:$0xff]
      %v286 = vld [vmem:[%s270] sm:$0xff]
      %v287 = vld [vmem:[%s270 + $0x8] sm:$0xff]
      %v288 = vld [vmem:[%s270 + $0x10] sm:$0xff]
      %v289 = vld [vmem:[%s270 + $0x18] sm:$0xff]
      %v290 = vld [vmem:[%s273] sm:$0x1]
      %v292 = vlaneseq
      %v293 = vshrl.u32 %v292, 7
      %v294 = vsub.s32 0, %v293
      %v295 = vrot.slane %v290, %v294
      %vm297 = vcmask 261120
      %v299 = vsel %vm297, %v284, 0
      %v302 = vsel %vm297, %v285, 0
      %304 = vmatprep.subr.mxu0 0.0
      %305 = vmatpush1.msra.mxu0 %v286
      %306 = vmatprep.subr.mxu0 0.0
      %307 = vmatpush1.msra.mxu0 %v287
      %308 = vmatprep.subr.mxu0 0.0
      %309 = vmatpush1.msra.mxu0 %v288
      %310 = vmatprep.subr.mxu0 0.0
      %311 = vmatpush1.msra.mxu0 %v289
      %312 = vmatprep.subr.mxu0 0.0
      %313 = vmatpush1.msra.mxu0 0.0
      %314 = vmatprep.subr.mxu0 0.0
      %315 = vmatpush1.msra.mxu0 0.0
      %316 = vmatprep.subr.mxu0 0.0
      %317 = vmatpush1.msra.mxu0 0.0
      %318 = vmatprep.subr.mxu0 0.0
      %319 = vmatpush1.msra.mxu0 0.0
      %320 = vmatprep.subr.mxu0 0.0
      %321 = vmatpush1.msra.mxu0 0.0
      %322 = vmatprep.subr.mxu0 0.0
      %323 = vmatpush1.msra.mxu0 0.0
      %324 = vmatprep.subr.mxu0 0.0
      %325 = vmatpush1.msra.mxu0 0.0
      %326 = vmatprep.subr.mxu0 0.0
      %327 = vmatpush1.msra.mxu0 0.0
      %328 = vmatprep.subr.mxu0 0.0
      %329 = vmatpush1.msra.mxu0 0.0
      %330 = vmatprep.subr.mxu0 0.0
      %331 = vmatpush1.msra.mxu0 0.0
      %332 = vmatprep.subr.mxu0 0.0
      %333 = vmatpush1.msra.mxu0 0.0
      %334 = vmatprep.subr.mxu0 0.0
      %335 = vmatpush1.msra.mxu0 0.0
      %336 = vmatprep.subr.mxu0 0.0
      %337 = vmatpush1.msra.mxu0 0.0
      %338 = vmatprep.subr.mxu0 0.0
      %339 = vmatpush1.msra.mxu0 0.0
      %340 = vmatprep.subr.mxu0 0.0
      %341 = vmatpush1.msra.mxu0 0.0
      %342 = vmatprep.subr.mxu0 0.0
      %343 = vmatpush1.msra.mxu0 0.0
      %344 = vmatprep.subr.mxu0 0.0
      %345 = vmatpush1.msra.mxu0 0.0
      %346 = vmatprep.subr.mxu0 0.0
      %347 = vmatpush1.msra.mxu0 0.0
      %348 = vmatprep.subr.mxu0 0.0
      %349 = vmatpush1.msra.mxu0 0.0
      %350 = vmatprep.subr.mxu0 0.0
      %351 = vmatpush1.msra.mxu0 0.0
      %352 = vmatprep.subr.mxu0 0.0
      %353 = vmatpush1.msra.mxu0 0.0
      %354 = vmatprep.subr.mxu0 0.0
      %355 = vmatpush1.msra.mxu0 0.0
      %356 = vmatprep.subr.mxu0 0.0
      %357 = vmatpush1.msra.mxu0 0.0
      %358 = vmatprep.subr.mxu0 0.0
      %359 = vmatpush1.msra.mxu0 0.0
      %360 = vmatprep.subr.mxu0 0.0
      %361 = vmatpush1.msra.mxu0 0.0
      %362 = vmatprep.subr.mxu0 0.0
      %363 = vmatpush1.msra.mxu0 0.0
      %364 = vmatprep.subr.mxu0 0.0
      %365 = vmatpush1.msra.mxu0 0.0
      %366 = vmatprep.subr.mxu0 0.0
      %367 = vmatpush1.msra.mxu0 0.0
      %368 = vmatprep.mubr.f32.mxu0 0.0
      %369 = vmatmul.mubr.f32.gmra.mrb[0].mxu0 %v299
      %v370 = vpop.f32.mrb[0].mxu0
      %v371 = vadd.f32 %v295, %v370
      %v372 = vpop.f32.mrb[0].mxu0
      %373 = vmatprep.mubr.f32.mxu0 0.0
      %374 = vmatmul.mubr.f32.gmra.mrb[0].mxu0 %v302
      %v375 = vpop.f32.mrb[0].mxu0
      %v376 = vadd.f32 %v295, %v375
      %v377 = vpop.f32.mrb[0].mxu0
      %378 = vdwg.mxu0
      %vm379 = vcmask 64512
      %380 = vst.msk [vmem:[%s282] sm:$0xff] %vm379, %v371
      %381 = vst.msk [vmem:[%s282 + $0x8] sm:$0xff] %vm379, %v376
      %s382 = smul.u32 2, %s20
      %p383 = scmp.lt.s32.totalorder %s21, 7
      %s384 = scalar_select %p383, %s21, 7
      %p385 = scmp.lt.s32.totalorder %s382, 1
      %s386 = scalar_select %p385, %s382, 1
      %s387 = smul.addr %s384, 2
      %s388 = sadd.s32 %s386, %s387
      %s389 = smul.addr %s388, 8
      %s390 = scalar_lea.vmem %s5, %s389
      // Predicated region
      $region41: #{decoder_forward.21} parent=39 // pred_check
        %p391 = pneg %p168
      $region42: #{decoder_forward.21} parent=39 // pred_check_branch
        %393 = sbr.rel (%p391) target = $region44
      $region43: #{decoder_forward.21} parent=39 // pred_region
        %s394 = smul.u32 2, %s20
      $region44: #{decoder_forward.21} parent=39 // pred_fallthru
        _
    $region40: #{decoder_forward.21} parent=5 // pred_fallthru
      _
    %p395 = scmp.le.s32.totalorder 2, %s11
    // Predicated region
    $region45: #{decoder_forward.21} parent=5 // pred_check
      %p396 = pneg %p395
    $region46: #{decoder_forward.21} parent=5 // pred_check_branch
      %398 = sbr.rel (%p396) target = $region48
    $region47: #{decoder_forward.21} parent=5 // pred_region
      %s399 = ssub.s32 %s11, 2
      // Predicated region
      $region49: #{decoder_forward.21} parent=47 // pred_check
        %p400 = pneg %p174
      $region50: #{decoder_forward.21} parent=47 // pred_check_branch
        %402 = sbr.rel (%p400) target = $region52
      $region51: #{decoder_forward.21} parent=47 // pred_region
        %s403 = smul.u32 2, %s22
        %p404 = scmp.lt.s32.totalorder %s23, 7
        %s405 = scalar_select %p404, %s23, 7
        %p406 = scmp.lt.s32.totalorder %s403, 1
        %s407 = scalar_select %p406, %s403, 1
        %s408 = smul.addr %s405, 2
        %s409 = sadd.s32 %s407, %s408
        %s410 = smul.addr %s409, 8
        %s411 = scalar_lea.vmem %s5, %s410
      $region52: #{decoder_forward.21} parent=47 // pred_fallthru
        _
    $region48: #{decoder_forward.21} parent=5 // pred_fallthru
      _
  $region6: #{decoder_forward.21} parent=0 // loop_footer
    %s15 = sadd.s32 1, %s11
  $region7: #{decoder_forward.21} parent=0 // loop_footer_branch
    %10 = sbr.rel target = $region3
  $region8: #{decoder_forward.21} parent=0 // loop_exit
    _

// kernel: decoder_forward.22
$region0: #{decoder_forward.22}
  #allocation0 [shape = 'u32[]', space=smem, size = 0x4, offset = 0x4, fixed_abs, tag = 'smem constant byte address 0x4 - core index']
  #allocation1 [shape = 'u32[144,128]{1,0:T(1,128)}', space=vmem, size = 0x12000, scoped, tag = 'internal scratch']
  #allocation2 [shape = 'f32[8,1]{1,0:T(8,128)}', space=vmem, size = 0x1000, scoped, tag = 'scratch operand']
  #allocation3 [shape = 'f32[8,1]{1,0:T(8,128)}', space=vmem, size = 0x1000, scoped, tag = 'scratch operand']
  #allocation4 [shape = 'f32[8,8]{1,0:T(8,128)}', space=vmem, size = 0x1000, scoped, tag = 'scratch operand']
  %s0 = inlined_call_operand.vmem [shape: f32[1,4,2,8,8], index: 0, kind: input, shape index: {}]
  %s1 = inlined_call_operand.vmem [shape: f32[2,4,2,8,8], index: 1, kind: input, shape index: {}, may-alias: {1,2}]
  %s2 = inlined_call_operand.vmem [shape: f32[2,4,2,8,8], index: 2, kind: input, shape index: {}, may-alias: {1,2}]
  %s3 = inlined_call_operand.vmem [shape: f32[2,1,1,8], index: 3, kind: input, shape index: {}]
  %s4 = inlined_call_operand.vmem [shape: f32[4,2,8,8], index: 4, kind: output, shape index: {}]
  %s5 = sld [smem:[#allocation0]]
  $region57: #{decoder_forward.22} parent=0
    _
  %s7 = ssub.s32 1, %s5
  %s8 = scalar_select 0, %s7, %s5
  loop: start=0, step=1, limit=10
  $region2: #{decoder_forward.22} parent=0 // loop_pre_header
    _
  $region3: #{decoder_forward.22} parent=0 // loop_header
    %s10 = sphi 0, %s14
    %p11 = scmp.ge.s32.totalorder %s10, 10
    %s17 = sphi 0, %s43
    %s18 = sphi 0, %s39
    %s19 = sphi 0, %s35
    %s20 = sphi 0, %s31
    %s21 = sphi 0, %s17
    %s22 = sphi 0, %s18
    %s23 = sphi 0, %s19
    %s24 = sphi 0, %s20
    %s25 = sphi 0, %s21
    %s26 = sphi 0, %s22
    %s27 = sphi 0, %s23
    %s28 = sphi 0, %s24
    %s50 = sphi 0, %s52
    %s53 = sphi 0, %s50
    %s54 = sphi 0, %s53
    %s70 = sphi 0, %s54
    %s80 = sphi 0, %s82
    %s83 = sphi 0, %s80
    %s84 = sphi 0, %s83
    %s100 = sphi 0, %s84
    %s110 = sphi 0, %s112
    %s113 = sphi 0, %s110
    %s114 = sphi 0, %s113
    %s130 = sphi 0, %s114
    %s138 = sphi 0, %s140
    %s141 = sphi 0, %s138
    %s142 = sphi 0, %s141
    %s158 = sphi 0, %s142
    %s168 = sphi 0, %s170
    %s171 = sphi 0, %s168
    %s172 = sphi 0, %s171
    %s188 = sphi 0, %s172
  $region4: #{decoder_forward.22} parent=0 // loop_header_branch
    %13 = sbr.rel (%p11) target = $region8
  $region5: #{decoder_forward.22} parent=0 // loop_body
    %s15 = ssub.s32 %s10, 1
    %s16 = ssub.s32 %s10, 2
    %s29 = sadd.s32 1, %s20
    %p30 = scmp.ge.s32.totalorder %s29, 1
    %s31 = scalar_select %p30, 0, %s29
    %s32 = sadd.s32 1, %s19
    %s33 = scalar_select %p30, %s32, %s19
    %p34 = scmp.ge.s32.totalorder %s33, 1
    %s35 = scalar_select %p34, 0, %s33
    %s36 = sadd.s32 1, %s18
    %s37 = scalar_select %p34, %s36, %s18
    %p38 = scmp.ge.s32.totalorder %s37, 4
    %s39 = scalar_select %p38, 0, %s37
    %s40 = sadd.s32 1, %s17
    %s41 = scalar_select %p38, %s40, %s17
    %p42 = scmp.ge.s32.totalorder %s41, 2
    %s43 = scalar_select %p42, 0, %s41
    %s44 = ssub.s32 %s18, %s39
    %s45 = ssub.s32 %s17, %s43
    %s46 = sor.u32 %s44, %s45
    %s47 = ssub.s32 %s19, %s35
    %s48 = sor.u32 %s46, %s47
    %p49 = scmp.eq.s32.totalorder %s48, 0
    %s51 = sadd.s32 %s50, 1
    %s52 = scalar_select %p49, %s50, %s51
    %p55 = pneg %p49
    %p56 = scmp.eq.s32.totalorder %s10, 7
    %p57 = por %p55, %p56
    %p58 = scmp.ne.s32.totalorder %s50, %s53
    %p59 = scmp.eq.s32.totalorder %s10, 0
    %p60 = por %p58, %p59
    %p61 = scmp.ne.s32.totalorder %s50, %s53
    %p62 = scmp.eq.s32.totalorder %s15, 7
    %p63 = por %p61, %p62
    %p64 = scmp.ne.s32.totalorder %s53, %s54
    %p65 = scmp.eq.s32.totalorder %s15, 0
    %p66 = por %p64, %p65
    %p67 = scmp.ne.s32.totalorder %s53, %s54
    %p68 = scmp.eq.s32.totalorder %s16, 7
    %p69 = por %p67, %p68
    %p71 = scmp.ne.s32.totalorder %s54, %s70
    %p72 = scmp.eq.s32.totalorder %s16, 0
    %p73 = por %p71, %p72
    %s74 = ssub.s32 %s18, %s39
    %s75 = ssub.s32 %s17, %s43
    %s76 = sor.u32 %s74, %s75
    %s77 = ssub.s32 %s20, %s31
    %s78 = sor.u32 %s76, %s77
    %p79 = scmp.eq.s32.totalorder %s78, 0
    %s81 = sadd.s32 %s80, 1
    %s82 = scalar_select %p79, %s80, %s81
    %p85 = pneg %p79
    %p86 = scmp.eq.s32.totalorder %s10, 7
    %p87 = por %p85, %p86
    %p88 = scmp.ne.s32.totalorder %s80, %s83
    %p89 = scmp.eq.s32.totalorder %s10, 0
    %p90 = por %p88, %p89
    %p91 = scmp.ne.s32.totalorder %s80, %s83
    %p92 = scmp.eq.s32.totalorder %s15, 7
    %p93 = por %p91, %p92
    %p94 = scmp.ne.s32.totalorder %s83, %s84
    %p95 = scmp.eq.s32.totalorder %s15, 0
    %p96 = por %p94, %p95
    %p97 = scmp.ne.s32.totalorder %s83, %s84
    %p98 = scmp.eq.s32.totalorder %s16, 7
    %p99 = por %p97, %p98
    %p101 = scmp.ne.s32.totalorder %s84, %s100
    %p102 = scmp.eq.s32.totalorder %s16, 0
    %p103 = por %p101, %p102
    %s104 = ssub.s32 %s18, %s39
    %s105 = ssub.s32 %s17, %s43
    %s106 = sor.u32 %s104, %s105
    %s107 = ssub.s32 %s20, %s31
    %s108 = sor.u32 %s106, %s107
    %p109 = scmp.eq.s32.totalorder %s108, 0
    %s111 = sadd.s32 %s110, 1
    %s112 = scalar_select %p109, %s110, %s111
    %p115 = pneg %p109
    %p116 = scmp.eq.s32.totalorder %s10, 7
    %p117 = por %p115, %p116
    %p118 = scmp.ne.s32.totalorder %s110, %s113
    %p119 = scmp.eq.s32.totalorder %s10, 0
    %p120 = por %p118, %p119
    %p121 = scmp.ne.s32.totalorder %s110, %s113
    %p122 = scmp.eq.s32.totalorder %s15, 7
    %p123 = por %p121, %p122
    %p124 = scmp.ne.s32.totalorder %s113, %s114
    %p125 = scmp.eq.s32.totalorder %s15, 0
    %p126 = por %p124, %p125
    %p127 = scmp.ne.s32.totalorder %s113, %s114
    %p128 = scmp.eq.s32.totalorder %s16, 7
    %p129 = por %p127, %p128
    %p131 = scmp.ne.s32.totalorder %s114, %s130
    %p132 = scmp.eq.s32.totalorder %s16, 0
    %p133 = por %p131, %p132
    %s134 = ssub.s32 %s17, %s43
    %s135 = ssub.s32 %s20, %s31
    %s136 = sor.u32 %s134, %s135
    %p137 = scmp.eq.s32.totalorder %s136, 0
    %s139 = sadd.s32 %s138, 1
    %s140 = scalar_select %p137, %s138, %s139
    %p143 = pneg %p137
    %p144 = scmp.eq.s32.totalorder %s10, 7
    %p145 = por %p143, %p144
    %p146 = scmp.ne.s32.totalorder %s138, %s141
    %p147 = scmp.eq.s32.totalorder %s10, 0
    %p148 = por %p146, %p147
    %p149 = scmp.ne.s32.totalorder %s138, %s141
    %p150 = scmp.eq.s32.totalorder %s15, 7
    %p151 = por %p149, %p150
    %p152 = scmp.ne.s32.totalorder %s141, %s142
    %p153 = scmp.eq.s32.totalorder %s15, 0
    %p154 = por %p152, %p153
    %p155 = scmp.ne.s32.totalorder %s141, %s142
    %p156 = scmp.eq.s32.totalorder %s16, 7
    %p157 = por %p155, %p156
    %p159 = scmp.ne.s32.totalorder %s142, %s158
    %p160 = scmp.eq.s32.totalorder %s16, 0
    %p161 = por %p159, %p160
    %s162 = ssub.s32 %s18, %s39
    %s163 = ssub.s32 %s17, %s43
    %s164 = sor.u32 %s162, %s163
    %s165 = ssub.s32 %s19, %s35
    %s166 = sor.u32 %s164, %s165
    %p167 = scmp.eq.s32.totalorder %s166, 0
    %s169 = sadd.s32 %s168, 1
    %s170 = scalar_select %p167, %s168, %s169
    %p173 = pneg %p167
    %p174 = scmp.eq.s32.totalorder %s10, 7
    %p175 = por %p173, %p174
    %p176 = scmp.ne.s32.totalorder %s168, %s171
    %p177 = scmp.eq.s32.totalorder %s10, 0
    %p178 = por %p176, %p177
    %p179 = scmp.ne.s32.totalorder %s168, %s171
    %p180 = scmp.eq.s32.totalorder %s15, 7
    %p181 = por %p179, %p180
    %p182 = scmp.ne.s32.totalorder %s171, %s172
    %p183 = scmp.eq.s32.totalorder %s15, 0
    %p184 = por %p182, %p183
    %p185 = scmp.ne.s32.totalorder %s171, %s172
    %p186 = scmp.eq.s32.totalorder %s16, 7
    %p187 = por %p185, %p186
    %p189 = scmp.ne.s32.totalorder %s172, %s188
    %p190 = scmp.eq.s32.totalorder %s16, 0
    %p191 = por %p189, %p190
    %p192 = scmp.le.s32.totalorder 1, %s10
    %p193 = scmp.lt.s32.totalorder %s10, 9
    %p194 = pnand %p192, %p193
    %p195 = pneg %p194
    // Predicated region
    $region9: #{decoder_forward.22} parent=5 // pred_check
      _
    $region10: #{decoder_forward.22} parent=5 // pred_check_branch
      %197 = sbr.rel (%p194) target = $region12
    $region11: #{decoder_forward.22} parent=5 // pred_region
      %s198 = ssub.s32 %s10, 1
    $region12: #{decoder_forward.22} parent=5 // pred_fallthru
      _
    %p199 = scmp.lt.s32.totalorder %s10, 8
    // Predicated region
    $region13: #{decoder_forward.22} parent=5 // pred_check
      %p200 = pneg %p199
    $region14: #{decoder_forward.22} parent=5 // pred_check_branch
      %202 = sbr.rel (%p200) target = $region16
    $region15: #{decoder_forward.22} parent=5 // pred_region
      // Predicated region
      $region17: #{decoder_forward.22} parent=15 // pred_check
        %p203 = pneg %p60
      $region18: #{decoder_forward.22} parent=15 // pred_check_branch
        %205 = sbr.rel (%p203) target = $region20
      $region19: #{decoder_forward.22} parent=15 // pred_region
        %p206 = scmp.lt.s32.totalorder %s18, 3
        %s207 = scalar_select %p206, %s18, 3
        %p208 = scmp.lt.s32.totalorder %s17, 1
        %s209 = scalar_select %p208, %s17, 1
        %p210 = scmp.lt.s32.totalorder %s19, 0
        %s211 = scalar_select %p210, %s19, 0
        %s212 = sadd.s32 %s211, %s209
        %s213 = smul.addr %s207, 2
        %s214 = sadd.s32 %s212, %s213
        %s215 = smul.addr %s214, 8
        %s216 = scalar_lea.vmem %s0, %s215
      $region20: #{decoder_forward.22} parent=15 // pred_fallthru
        _
      // Predicated region
      $region21: #{decoder_forward.22} parent=15 // pred_check
        %p217 = pneg %p90
      $region22: #{decoder_forward.22} parent=15 // pred_check_branch
        %219 = sbr.rel (%p217) target = $region24
      $region23: #{decoder_forward.22} parent=15 // pred_region
        %p220 = scmp.lt.s32.totalorder %s18, 3
        %s221 = scalar_select %p220, %s18, 3
        %p222 = scmp.lt.s32.totalorder %s17, 1
        %s223 = scalar_select %p222, %s17, 1
        %p224 = scmp.lt.s32.totalorder %s20, 0
        %s225 = scalar_select %p224, %s20, 0
        %s226 = sadd.s32 %s225, %s223
        %s227 = smul.addr %s221, 2
        %s228 = sadd.s32 %s226, %s227
        %s229 = smul.addr %s228, 8
        %s230 = scalar_lea.vmem %s1, %s229
      $region24: #{decoder_forward.22} parent=15 // pred_fallthru
        _
      // Predicated region
      $region25: #{decoder_forward.22} parent=15 // pred_check
        %p231 = pneg %p120
      $region26: #{decoder_forward.22} parent=15 // pred_check_branch
        %233 = sbr.rel (%p231) target = $region28
      $region27: #{decoder_forward.22} parent=15 // pred_region
        %p234 = scmp.lt.s32.totalorder %s18, 3
        %s235 = scalar_select %p234, %s18, 3
        %p236 = scmp.lt.s32.totalorder %s17, 1
        %s237 = scalar_select %p236, %s17, 1
        %p238 = scmp.lt.s32.totalorder %s20, 0
        %s239 = scalar_select %p238, %s20, 0
        %s240 = sadd.s32 %s239, %s237
        %s241 = smul.addr %s235, 2
        %s242 = sadd.s32 %s240, %s241
        %s243 = sadd.s32 %s242, 8
        %s244 = smul.addr %s243, 8
        %s245 = scalar_lea.vmem %s2, %s244
      $region28: #{decoder_forward.22} parent=15 // pred_fallthru
        _
      // Predicated region
      $region29: #{decoder_forward.22} parent=15 // pred_check
        %p246 = pneg %p148
      $region30: #{decoder_forward.22} parent=15 // pred_check_branch
        %248 = sbr.rel (%p246) target = $region32
      $region31: #{decoder_forward.22} parent=15 // pred_region
        %p249 = scmp.lt.s32.totalorder %s17, 1
        %s250 = scalar_select %p249, %s17, 1
        %p251 = scmp.lt.s32.totalorder %s20, 0
        %s252 = scalar_select %p251, %s20, 0
        %s253 = sadd.s32 %s252, %s250
        %s254 = scalar_lea.vmem %s3, %s253
      $region32: #{decoder_forward.22} parent=15 // pred_fallthru
        _
    $region16: #{decoder_forward.22} parent=5 // pred_fallthru
      _
    %p255 = scmp.le.s32.totalorder 1, %s10
    %p256 = scmp.lt.s32.totalorder %s10, 9
    %p257 = pnand %p255, %p256
    %p258 = pneg %p257
    // Predicated region
    $region33: #{decoder_forward.22} parent=5 // pred_check
      _
    $region34: #{decoder_forward.22} parent=5 // pred_check_branch
      %260 = sbr.rel (%p257) target = $region36
    $region35: #{decoder_forward.22} parent=5 // pred_region
      %s261 = ssub.s32 %s10, 1
      %p262 = scmp.lt.s32.totalorder %s22, 3
      %s263 = scalar_select %p262, %s22, 3
      %p264 = scmp.lt.s32.totalorder %s21, 1
      %s265 = scalar_select %p264, %s21, 1
      %p266 = scmp.lt.s32.totalorder %s23, 0
      %s267 = scalar_select %p266, %s23, 0
      %s268 = sadd.s32 %s267, %s265
      %s269 = smul.addr %s263, 2
      %s270 = sadd.s32 %s268, %s269
      %s271 = smul.addr %s270, 8
      %s272 = scalar_lea.vmem %s0, %s271
      %p273 = pneg %p66
      %p274 = pneg %p63
      %p275 = scmp.lt.s32.totalorder %s22, 3
      %s276 = scalar_select %p275, %s22, 3
      %p277 = scmp.lt.s32.totalorder %s21, 1
      %s278 = scalar_select %p277, %s21, 1
      %p279 = scmp.lt.s32.totalorder %s24, 0
      %s280 = scalar_select %p279, %s24, 0
      %s281 = sadd.s32 %s280, %s278
      %s282 = smul.addr %s276, 2
      %s283 = sadd.s32 %s281, %s282
      %s284 = smul.addr %s283, 8
      %s285 = scalar_lea.vmem %s1, %s284
      %p286 = pneg %p96
      %p287 = pneg %p93
      %p288 = scmp.lt.s32.totalorder %s22, 3
      %s289 = scalar_select %p288, %s22, 3
      %p290 = scmp.lt.s32.totalorder %s21, 1
      %s291 = scalar_select %p290, %s21, 1
      %p292 = scmp.lt.s32.totalorder %s24, 0
      %s293 = scalar_select %p292, %s24, 0
      %s294 = sadd.s32 %s293, %s291
      %s295 = smul.addr %s289, 2
      %s296 = sadd.s32 %s294, %s295
      %s297 = sadd.s32 %s296, 8
      %s298 = smul.addr %s297, 8
      %s299 = scalar_lea.vmem %s2, %s298
      %p300 = pneg %p126
      %p301 = pneg %p123
      %p302 = scmp.lt.s32.totalorder %s21, 1
      %s303 = scalar_select %p302, %s21, 1
      %p304 = scmp.lt.s32.totalorder %s24, 0
      %s305 = scalar_select %p304, %s24, 0
      %s306 = sadd.s32 %s305, %s303
      %s307 = scalar_lea.vmem %s3, %s306
      %p308 = pneg %p154
      %p309 = pneg %p151
      %p310 = pneg %p184
      %p311 = pneg %p181
      %p312 = scmp.lt.s32.totalorder %s22, 3
      %s313 = scalar_select %p312, %s22, 3
      %p314 = scmp.lt.s32.totalorder %s21, 1
      %s315 = scalar_select %p314, %s21, 1
      %p316 = scmp.lt.s32.totalorder %s23, 0
      %s317 = scalar_select %p316, %s23, 0
      %s318 = sadd.s32 %s317, %s315
      %s319 = smul.addr %s313, 2
      %s320 = sadd.s32 %s318, %s319
      %s321 = smul.addr %s320, 8
      %s322 = scalar_lea.vmem %s4, %s321
      %p323 = scmp.lt.s32.totalorder %s22, 3
      %s324 = scalar_select %p323, %s22, 3
      %p325 = scmp.lt.s32.totalorder %s21, 1
      %s326 = scalar_select %p325, %s21, 1
      %p327 = scmp.lt.s32.totalorder %s23, 0
      %s328 = scalar_select %p327, %s23, 0
      %s329 = sadd.s32 %s328, %s326
      %s330 = smul.addr %s324, 2
      %s331 = sadd.s32 %s329, %s330
      %s332 = smul.addr %s331, 8
      %s333 = scalar_lea.vmem %s0, %s332
      %p334 = scmp.lt.s32.totalorder %s22, 3
      %s335 = scalar_select %p334, %s22, 3
      %p336 = scmp.lt.s32.totalorder %s21, 1
      %s337 = scalar_select %p336, %s21, 1
      %p338 = scmp.lt.s32.totalorder %s24, 0
      %s339 = scalar_select %p338, %s24, 0
      %s340 = sadd.s32 %s339, %s337
      %s341 = smul.addr %s335, 2
      %s342 = sadd.s32 %s340, %s341
      %s343 = smul.addr %s342, 8
      %s344 = scalar_lea.vmem %s1, %s343
      %p345 = scmp.lt.s32.totalorder %s22, 3
      %s346 = scalar_select %p345, %s22, 3
      %p347 = scmp.lt.s32.totalorder %s21, 1
      %s348 = scalar_select %p347, %s21, 1
      %p349 = scmp.lt.s32.totalorder %s24, 0
      %s350 = scalar_select %p349, %s24, 0
      %s351 = sadd.s32 %s350, %s348
      %s352 = smul.addr %s346, 2
      %s353 = sadd.s32 %s351, %s352
      %s354 = sadd.s32 %s353, 8
      %s355 = smul.addr %s354, 8
      %s356 = scalar_lea.vmem %s2, %s355
      %p357 = scmp.lt.s32.totalorder %s21, 1
      %s358 = scalar_select %p357, %s21, 1
      %p359 = scmp.lt.s32.totalorder %s24, 0
      %s360 = scalar_select %p359, %s24, 0
      %s361 = sadd.s32 %s360, %s358
      %s362 = scalar_lea.vmem %s3, %s361
      %p363 = scmp.lt.s32.totalorder %s22, 3
      %s364 = scalar_select %p363, %s22, 3
      %p365 = scmp.lt.s32.totalorder %s21, 1
      %s366 = scalar_select %p365, %s21, 1
      %p367 = scmp.lt.s32.totalorder %s23, 0
      %s368 = scalar_select %p367, %s23, 0
      %s369 = sadd.s32 %s368, %s366
      %s370 = smul.addr %s364, 2
      %s371 = sadd.s32 %s369, %s370
      %s372 = smul.addr %s371, 8
      %s373 = scalar_lea.vmem %s4, %s372
      %p374 = scmp.eq.s32.totalorder %s24, 0
      // Predicated region
      $region37: #{decoder_forward.22} parent=35 // pred_check
        %p375 = pneg %p374
      $region38: #{decoder_forward.22} parent=35 // pred_check_branch
        %377 = sbr.rel (%p375) target = $region40
      $region39: #{decoder_forward.22} parent=35 // pred_region
        %vm378 = vcmask 7168
        %379 = vst.msk [vmem:[#allocation2] sm:$0xff] %vm378, -inf
        %380 = vst.msk [vmem:[#allocation3] sm:$0xff] %vm378, 0.0
        %vm381 = vcmask 64512
        %382 = vst.msk [vmem:[#allocation4] sm:$0xff] %vm381, 0.0
      $region40: #{decoder_forward.22} parent=35 // pred_fallthru
        _
      %v383 = vld [vmem:[%s333] sm:$0xff]
      %v384 = vld [vmem:[%s344] sm:$0xff]
      %v385 = vld [vmem:[%s356] sm:$0xff]
      %vm386 = vcmask 64512
      %v388 = vsel %vm386, %v383, 0
      %v391 = vsel %vm386, %v384, 0
      %393 = vmatprep.subr.mxu0 0.0
      %394 = vmatpush1.xpose.msra.mxu0 %v391
      %395 = vmatprep.subr.mxu0 0.0
      %396 = vmatpush1.xpose.msra.mxu0 0.0
      %397 = vmatprep.subr.mxu0 0.0
      %398 = vmatpush1.xpose.msra.mxu0 0.0
      %399 = vmatprep.subr.mxu0 0.0
      %400 = vmatpush1.xpose.msra.mxu0 0.0
      %401 = vmatprep.subr.mxu0 0.0
      %402 = vmatpush1.xpose.msra.mxu0 0.0
      %403 = vmatprep.subr.mxu0 0.0
      %404 = vmatpush1.xpose.msra.mxu0 0.0
      %405 = vmatprep.subr.mxu0 0.0
      %406 = vmatpush1.xpose.msra.mxu0 0.0
      %407 = vmatprep.subr.mxu0 0.0
      %408 = vmatpush1.xpose.msra.mxu0 0.0
      %409 = vmatprep.subr.mxu0 0.0
      %410 = vmatpush1.xpose.msra.mxu0 0.0
      %411 = vmatprep.subr.mxu0 0.0
      %412 = vmatpush1.xpose.msra.mxu0 0.0
      %413 = vmatprep.subr.mxu0 0.0
      %414 = vmatpush1.xpose.msra.mxu0 0.0
      %415 = vmatprep.subr.mxu0 0.0
      %416 = vmatpush1.xpose.msra.mxu0 0.0
      %417 = vmatprep.subr.mxu0 0.0
      %418 = vmatpush1.xpose.msra.mxu0 0.0
      %419 = vmatprep.subr.mxu0 0.0
      %420 = vmatpush1.xpose.msra.mxu0 0.0
      %421 = vmatprep.subr.mxu0 0.0
      %422 = vmatpush1.xpose.msra.mxu0 0.0
      %423 = vmatprep.subr.mxu0 0.0
      %424 = vmatpush1.xpose.msra.mxu0 0.0
      %425 = vmatprep.subr.mxu0 0.0
      %426 = vmatpush1.xpose.msra.mxu0 0.0
      %427 = vmatprep.subr.mxu0 0.0
      %428 = vmatpush1.xpose.msra.mxu0 0.0
      %429 = vmatprep.subr.mxu0 0.0
      %430 = vmatpush1.xpose.msra.mxu0 0.0
      %431 = vmatprep.subr.mxu0 0.0
      %432 = vmatpush1.xpose.msra.mxu0 0.0
      %433 = vmatprep.subr.mxu0 0.0
      %434 = vmatpush1.xpose.msra.mxu0 0.0
      %435 = vmatprep.subr.mxu0 0.0
      %436 = vmatpush1.xpose.msra.mxu0 0.0
      %437 = vmatprep.subr.mxu0 0.0
      %438 = vmatpush1.xpose.msra.mxu0 0.0
      %439 = vmatprep.subr.mxu0 0.0
      %440 = vmatpush1.xpose.msra.mxu0 0.0
      %441 = vmatprep.subr.mxu0 0.0
      %442 = vmatpush1.xpose.msra.mxu0 0.0
      %443 = vmatprep.subr.mxu0 0.0
      %444 = vmatpush1.xpose.msra.mxu0 0.0
      %445 = vmatprep.subr.mxu0 0.0
      %446 = vmatpush1.xpose.msra.mxu0 0.0
      %447 = vmatprep.subr.mxu0 0.0
      %448 = vmatpush1.xpose.msra.mxu0 0.0
      %449 = vmatprep.subr.mxu0 0.0
      %450 = vmatpush1.xpose.msra.mxu0 0.0
      %451 = vmatprep.subr.mxu0 0.0
      %452 = vmatpush1.xpose.msra.mxu0 0.0
      %453 = vmatprep.subr.mxu0 0.0
      %454 = vmatpush1.xpose.msra.mxu0 0.0
      %455 = vmatprep.subr.mxu0 0.0
      %456 = vmatpush1.xpose.msra.mxu0 0.0
      %457 = vmatprep.mubr.f32.mxu0 0.0
      %458 = vmatmul.mubr.f32.gmra.mrb[0].mxu0 %v388
      %v459 = vpop.f32.mrb[0].mxu0
      %v460 = vadd.f32 0.0, %v459
      %v461 = vpop.f32.mrb[0].mxu0
      %462 = vdwg.mxu0
      %v463 = vld [vmem:[%s362] sm:$0x1]
      %vm464 = vcmp.eq.f32.partialorder %v463, 0.0
      %v465 = vsel %vm464, 1, 0
      %v466 = vlaneseq
      %v467 = vshrl.u32 %v466, 7
      %v468 = vsub.s32 0, %v467
      %v469 = vrot.slane %v465, %v468
      %vm470 = vcmp.eq.s32.totalorder %v469, 1
      %v471 = vsel %vm470, -1e+09, %v460
      %v472 = vld [vmem:[#allocation2] sm:$0xff]
      %v473 = vsel %vm386, %v471, -inf
      %474 = vmax.xlane.f32.xlu0 %v473
      %v475 = vpop.xlane.xlu0 %474
      %v476 = vmax.f32 %v472, %v475
      %v477 = vsub.f32 %v472, %v476
      %v478 = vmul.f32 %v477, 1.442695
      %v479 = vpow.pop %v478
      %481 = vset.pattern.permute.xlu0 0
      %482 = vperm.xlu0 %481, %v476
      %v483 = vpop.permute.xlu0 %482
      %v485 = vsub.f32 %v471, %v483
      %v486 = vmul.f32 %v485, 1.442695
      %v487 = vpow.pop %v486
      %v488 = vld [vmem:[#allocation3] sm:$0xff]
      %v489 = vmul.f32 %v479, %v488
      %v490 = vsel %vm386, %v487, 0.0
      %491 = vadd.xlane.f32.xlu0 %v490
      %v492 = vpop.xlane.xlu0 %491
      %v493 = vadd.f32 %v489, %v492
      %vm494 = vcmask 7168
      %495 = vst.msk [vmem:[#allocation3] sm:$0xff] %vm494, %v493
      %v496 = vld [vmem:[#allocation4] sm:$0xff]
      %498 = vset.pattern.permute.xlu0 0
      %499 = vperm.xlu0 %498, %v479
      %v500 = vpop.permute.xlu0 %499
      %v502 = vmul.f32 %v500, %v496
      %v504 = vsel %vm386, %v487, 0
      %506 = vmatprep.subr.mxu0 0.0
      %507 = vmatpush1.msra.mxu0 %v385
      %508 = vmatprep.subr.mxu0 0.0
      %509 = vmatpush1.msra.mxu0 0.0
      %510 = vmatprep.subr.mxu0 0.0
      %511 = vmatpush1.msra.mxu0 0.0
      %512 = vmatprep.subr.mxu0 0.0
      %513 = vmatpush1.msra.mxu0 0.0
      %514 = vmatprep.subr.mxu0 0.0
      %515 = vmatpush1.msra.mxu0 0.0
      %516 = vmatprep.subr.mxu0 0.0
      %517 = vmatpush1.msra.mxu0 0.0
      %518 = vmatprep.subr.mxu0 0.0
      %519 = vmatpush1.msra.mxu0 0.0
      %520 = vmatprep.subr.mxu0 0.0
      %521 = vmatpush1.msra.mxu0 0.0
      %522 = vmatprep.subr.mxu0 0.0
      %523 = vmatpush1.msra.mxu0 0.0
      %524 = vmatprep.subr.mxu0 0.0
      %525 = vmatpush1.msra.mxu0 0.0
      %526 = vmatprep.subr.mxu0 0.0
      %527 = vmatpush1.msra.mxu0 0.0
      %528 = vmatprep.subr.mxu0 0.0
      %529 = vmatpush1.msra.mxu0 0.0
      %530 = vmatprep.subr.mxu0 0.0
      %531 = vmatpush1.msra.mxu0 0.0
      %532 = vmatprep.subr.mxu0 0.0
      %533 = vmatpush1.msra.mxu0 0.0
      %534 = vmatprep.subr.mxu0 0.0
      %535 = vmatpush1.msra.mxu0 0.0
      %536 = vmatprep.subr.mxu0 0.0
      %537 = vmatpush1.msra.mxu0 0.0
      %538 = vmatprep.subr.mxu0 0.0
      %539 = vmatpush1.msra.mxu0 0.0
      %540 = vmatprep.subr.mxu0 0.0
      %541 = vmatpush1.msra.mxu0 0.0
      %542 = vmatprep.subr.mxu0 0.0
      %543 = vmatpush1.msra.mxu0 0.0
      %544 = vmatprep.subr.mxu0 0.0
      %545 = vmatpush1.msra.mxu0 0.0
      %546 = vmatprep.subr.mxu0 0.0
      %547 = vmatpush1.msra.mxu0 0.0
      %548 = vmatprep.subr.mxu0 0.0
      %549 = vmatpush1.msra.mxu0 0.0
      %550 = vmatprep.subr.mxu0 0.0
      %551 = vmatpush1.msra.mxu0 0.0
      %552 = vmatprep.subr.mxu0 0.0
      %553 = vmatpush1.msra.mxu0 0.0
      %554 = vmatprep.subr.mxu0 0.0
      %555 = vmatpush1.msra.mxu0 0.0
      %556 = vmatprep.subr.mxu0 0.0
      %557 = vmatpush1.msra.mxu0 0.0
      %558 = vmatprep.subr.mxu0 0.0
      %559 = vmatpush1.msra.mxu0 0.0
      %560 = vmatprep.subr.mxu0 0.0
      %561 = vmatpush1.msra.mxu0 0.0
      %562 = vmatprep.subr.mxu0 0.0
      %563 = vmatpush1.msra.mxu0 0.0
      %564 = vmatprep.subr.mxu0 0.0
      %565 = vmatpush1.msra.mxu0 0.0
      %566 = vmatprep.subr.mxu0 0.0
      %567 = vmatpush1.msra.mxu0 0.0
      %568 = vmatprep.subr.mxu0 0.0
      %569 = vmatpush1.msra.mxu0 0.0
      %570 = vmatprep.mubr.f32.mxu0 0.0
      %571 = vmatmul.mubr.f32.gmra.mrb[0].mxu0 %v504
      %v572 = vpop.f32.mrb[0].mxu0
      %v573 = vadd.f32 0.0, %v572
      %v574 = vpop.f32.mrb[0].mxu0
      %575 = vdwg.mxu0
      %v576 = vadd.f32 %v502, %v573
      %577 = vst.msk [vmem:[#allocation4] sm:$0xff] %vm386, %v576
      %578 = vst.msk [vmem:[#allocation2] sm:$0xff] %vm494, %v476
      // Predicated region
      $region41: #{decoder_forward.22} parent=35 // pred_check
        %p579 = pneg %p374
      $region42: #{decoder_forward.22} parent=35 // pred_check_branch
        %581 = sbr.rel (%p579) target = $region44
      $region43: #{decoder_forward.22} parent=35 // pred_region
        %v582 = vld [vmem:[#allocation3] sm:$0xff]
        %v583 = vrcp.pop %v582
        %v584 = vmul.f32 1.0, %v583
        %v585 = vld [vmem:[#allocation4] sm:$0xff]
        %587 = vset.pattern.permute.xlu0 0
        %588 = vperm.xlu0 %587, %v584
        %v589 = vpop.permute.xlu0 %588
        %v591 = vmul.f32 %v585, %v589
        %592 = vst.msk [vmem:[%s373] sm:$0xff] %vm386, %v591
      $region44: #{decoder_forward.22} parent=35 // pred_fallthru
        _
      %p593 = scmp.lt.s32.totalorder %s22, 3
      %s594 = scalar_select %p593, %s22, 3
      %p595 = scmp.lt.s32.totalorder %s21, 1
      %s596 = scalar_select %p595, %s21, 1
      %p597 = scmp.lt.s32.totalorder %s23, 0
      %s598 = scalar_select %p597, %s23, 0
      %s599 = sadd.s32 %s598, %s596
      %s600 = smul.addr %s594, 2
      %s601 = sadd.s32 %s599, %s600
      %s602 = smul.addr %s601, 8
      %s603 = scalar_lea.vmem %s4, %s602
      // Predicated region
      $region45: #{decoder_forward.22} parent=35 // pred_check
        %p604 = pneg %p181
      $region46: #{decoder_forward.22} parent=35 // pred_check_branch
        %606 = sbr.rel (%p604) target = $region48
      $region47: #{decoder_forward.22} parent=35 // pred_region
        _
      $region48: #{decoder_forward.22} parent=35 // pred_fallthru
        _
    $region36: #{decoder_forward.22} parent=5 // pred_fallthru
      _
    %p607 = scmp.le.s32.totalorder 2, %s10
    // Predicated region
    $region49: #{decoder_forward.22} parent=5 // pred_check
      %p608 = pneg %p607
    $region50: #{decoder_forward.22} parent=5 // pred_check_branch
      %610 = sbr.rel (%p608) target = $region52
    $region51: #{decoder_forward.22} parent=5 // pred_region
      %s611 = ssub.s32 %s10, 2
      // Predicated region
      $region53: #{decoder_forward.22} parent=51 // pred_check
        %p612 = pneg %p187
      $region54: #{decoder_forward.22} parent=51 // pred_check_branch
        %614 = sbr.rel (%p612) target = $region56
      $region55: #{decoder_forward.22} parent=51 // pred_region
        %p615 = scmp.lt.s32.totalorder %s26, 3
        %s616 = scalar_select %p615, %s26, 3
        %p617 = scmp.lt.s32.totalorder %s25, 1
        %s618 = scalar_select %p617, %s25, 1
        %p619 = scmp.lt.s32.totalorder %s27, 0
        %s620 = scalar_select %p619, %s27, 0
        %s621 = sadd.s32 %s620, %s618
        %s622 = smul.addr %s616, 2
        %s623 = sadd.s32 %s621, %s622
        %s624 = smul.addr %s623, 8
        %s625 = scalar_lea.vmem %s4, %s624
      $region56: #{decoder_forward.22} parent=51 // pred_fallthru
        _
    $region52: #{decoder_forward.22} parent=5 // pred_fallthru
      _
  $region6: #{decoder_forward.22} parent=0 // loop_footer
    %s14 = sadd.s32 1, %s10
  $region7: #{decoder_forward.22} parent=0 // loop_footer_branch
    %9 = sbr.rel target = $region3
  $region8: #{decoder_forward.22} parent=0 // loop_exit
    _

// kernel: decoder_forward.33
$region0: #{decoder_forward.33}
  #allocation0 [shape = 'u32[]', space=smem, size = 0x4, offset = 0x4, fixed_abs, tag = 'smem constant byte address 0x4 - core index']
  #allocation1 [shape = 'u32[144,128]{1,0:T(1,128)}', space=vmem, size = 0x12000, scoped, tag = 'internal scratch']
  %s0 = inlined_call_operand.vmem [shape: f32[16,32], index: 0, kind: input, shape index: {}]
  %s1 = inlined_call_operand.vmem [shape: f32[1,32], index: 1, kind: input, shape index: {}]
  %s2 = inlined_call_operand.vmem [shape: f32[1,32], index: 2, kind: input, shape index: {}]
  %s3 = inlined_call_operand.hbm [shape: f32[16,32], index: 3, kind: output, shape index: {}]
  %s4 = sld [smem:[#allocation0]]
  $region22: #{decoder_forward.33} parent=0
    _
  %s6 = ssub.s32 1, %s4
  %s7 = scalar_select 0, %s6, %s4
  $region1: #{decoder_forward.33} parent=0
    #allocation2 [shape = 'u8[8192]{0}', space=vmem, size = 0x2000, scoped, tag = 'output window, operand 0, single buffered']
    #allocation3 [shape = 's32[1]{0}', space=sflag, size = 0x4, scoped, tag = 'scoped memory for decoder_forward.33']
    %8 = vsyncpa [#allocation3], 0
    // Predicated region
    $region2: #{decoder_forward.33} parent=1 // pred_check
      _
    $region3: #{decoder_forward.33} parent=1 // pred_check_branch
      %10 = sbr.rel (0) target = $region5
    $region4: #{decoder_forward.33} parent=1 // pred_region
      _
    $region5: #{decoder_forward.33} parent=1 // pred_fallthru
      _
    // Predicated region
    $region6: #{decoder_forward.33} parent=1 // pred_check
      _
    $region7: #{decoder_forward.33} parent=1 // pred_check_branch
      %12 = sbr.rel (0) target = $region9
    $region8: #{decoder_forward.33} parent=1 // pred_region
      _
    $region9: #{decoder_forward.33} parent=1 // pred_fallthru
      _
    // Predicated region
    $region10: #{decoder_forward.33} parent=1 // pred_check
      _
    $region11: #{decoder_forward.33} parent=1 // pred_check_branch
      %14 = sbr.rel (0) target = $region13
    $region12: #{decoder_forward.33} parent=1 // pred_region
      _
    $region13: #{decoder_forward.33} parent=1 // pred_fallthru
      _
    %v15 = vld [vmem:[%s0] sm:$0xff]
    %v16 = vld [vmem:[%s0 + $0x8] sm:$0xff]
    %v17 = vld [vmem:[%s1] sm:$0x1]
    %v18 = vld [vmem:[%s2] sm:$0x1]
    %vm19 = vcmask 261120
    %v20 = vsel %vm19, %v15, 0.0
    %21 = vadd.xlane.f32.xlu0 %v20
    %v22 = vpop.xlane.xlu0 %21
    %v23 = vsel %vm19, %v16, 0.0
    %24 = vadd.xlane.f32.xlu0 %v23
    %v25 = vpop.xlane.xlu0 %24
    %v26 = vrcp.pop 32.0
    %v27 = vmul.f32 %v22, %v26
    %v28 = vmul.f32 %v25, %v26
    %v29 = vsub.f32 %v15, %v27
    %v30 = vsub.f32 %v16, %v28
    %v31 = vmul.f32 %v29, %v29
    %v32 = vmul.f32 %v30, %v30
    %v33 = vsel %vm19, %v31, 0.0
    %34 = vadd.xlane.f32.xlu0 %v33
    %v35 = vpop.xlane.xlu0 %34
    %v36 = vsel %vm19, %v32, 0.0
    %37 = vadd.xlane.f32.xlu0 %v36
    %v38 = vpop.xlane.xlu0 %37
    %v39 = vmul.f32 %v35, 0.032258064
    %v40 = vmul.f32 %v38, 0.032258064
    %v41 = vrsqrt.pop %v39
    %v42 = vmul.f32 %v39, %v41
    %vm43 = vcmp.eq.f32.partialorder %v39, inf
    %v44 = vsel %vm43, %v39, %v42
    %vm45 = vcmp.eq.f32.partialorder %v39, 0.0
    %v46 = vand.u32 %v39, 2147483648
    %v47 = vsel %vm45, %v46, %v44
    %v48 = vrsqrt.pop %v40
    %v49 = vmul.f32 %v40, %v48
    %vm50 = vcmp.eq.f32.partialorder %v40, inf
    %v51 = vsel %vm50, %v40, %v49
    %vm52 = vcmp.eq.f32.partialorder %v40, 0.0
    %v53 = vand.u32 %v40, 2147483648
    %v54 = vsel %vm52, %v53, %v51
    %v55 = vadd.f32 %v47, 1e-06
    %v56 = vadd.f32 %v54, 1e-06
    %v57 = vrcp.pop %v55
    %v58 = vmul.f32 1.0, %v57
    %v59 = vrcp.pop %v56
    %v60 = vmul.f32 1.0, %v59
    %v61 = vmul.f32 %v29, %v58
    %v62 = vmul.f32 %v30, %v60
    %v64 = vlaneseq
    %v65 = vshrl.u32 %v64, 7
    %v66 = vsub.s32 0, %v65
    %v67 = vrot.slane %v17, %v66
    %v69 = vmul.f32 %v67, %v61
    %v70 = vmul.f32 %v67, %v62
    %v72 = vlaneseq
    %v73 = vshrl.u32 %v72, 7
    %v74 = vsub.s32 0, %v73
    %v75 = vrot.slane %v18, %v74
    %v77 = vadd.f32 %v69, %v75
    %v78 = vadd.f32 %v70, %v75
    %79 = vst.msk [vmem:[#allocation2] sm:$0xff] %vm19, %v77
    %80 = vst.msk [vmem:[#allocation2 + $0x8] sm:$0xff] %vm19, %v78
    // Predicated region
    $region14: #{decoder_forward.33} parent=1 // pred_check
      _
    $region15: #{decoder_forward.33} parent=1 // pred_check_branch
      %82 = sbr.rel (0) target = $region17
    $region16: #{decoder_forward.33} parent=1 // pred_region
      %s84 = ssub.s32 256, 256
      %85 = vsyncadd [#allocation3], %s84
      %s86 = sshll.u32 [#allocation2], 4
      %s87 = int_to_ptr.vmem [resolvable:$true] %s86
      %92 = dma.vmem_to_hbm [thread:$0]  %s87, 256, %s3, [#allocation3], 128, 128, 8
    $region17: #{decoder_forward.33} parent=1 // pred_fallthru
      _
    // Predicated region
    $region18: #{decoder_forward.33} parent=1 // pred_check
      _
    $region19: #{decoder_forward.33} parent=1 // pred_check_branch
      %94 = sbr.rel (0) target = $region21
    $region20: #{decoder_forward.33} parent=1 // pred_region
      %95 = dma.done [#allocation3], 256
    $region21: #{decoder_forward.33} parent=1 // pred_fallthru
      _
    %96 = vsyncpa [#allocation3], 1

// kernel: decoder_forward.24
$region0: #{decoder_forward.24}
  #allocation0 [shape = 'u32[]', space=smem, size = 0x4, offset = 0x4, fixed_abs, tag = 'smem constant byte address 0x4 - core index']
  #allocation1 [shape = 'u32[144,128]{1,0:T(1,128)}', space=vmem, size = 0x12000, scoped, tag = 'internal scratch']
  #allocation2 [shape = 'f32[16,32]{1,0:T(8,128)}', space=vmem, size = 0x2000, scoped, tag = 'scratch operand']
  #allocation3 [shape = 'f32[16,32]{1,0:T(8,128)}', space=vmem, size = 0x2000, scoped, tag = 'scratch operand']
  %s0 = inlined_call_operand.vmem [shape: f32[16,32], index: 0, kind: input, shape index: {}]
  %s1 = inlined_call_operand.vmem [shape: f32[1,32], index: 1, kind: input, shape index: {}]
  %s2 = inlined_call_operand.vmem [shape: f32[1,32], index: 2, kind: input, shape index: {}]
  %s3 = inlined_call_operand.vmem [shape: f32[32,64], index: 3, kind: input, shape index: {}]
  %s4 = inlined_call_operand.vmem [shape: f32[1,64], index: 4, kind: input, shape index: {}]
  %s5 = inlined_call_operand.vmem [shape: f32[64,32], index: 5, kind: input, shape index: {}]
  %s6 = inlined_call_operand.vmem [shape: f32[1,32], index: 6, kind: input, shape index: {}]
  %s7 = inlined_call_operand.vmem [shape: f32[16,32], index: 7, kind: output, shape index: {}]
  %s8 = sld [smem:[#allocation0]]
  $region46: #{decoder_forward.24} parent=0
    _
  %s10 = ssub.s32 1, %s8
  %s11 = scalar_select 0, %s10, %s8
  // Predicated region
  $region2: #{decoder_forward.24} parent=0 // pred_check
    _
  $region3: #{decoder_forward.24} parent=0 // pred_check_branch
    %13 = sbr.rel (0) target = $region5
  $region4: #{decoder_forward.24} parent=0 // pred_region
    _
  $region5: #{decoder_forward.24} parent=0 // pred_fallthru
    _
  // Predicated region
  $region6: #{decoder_forward.24} parent=0 // pred_check
    _
  $region7: #{decoder_forward.24} parent=0 // pred_check_branch
    %15 = sbr.rel (0) target = $region9
  $region8: #{decoder_forward.24} parent=0 // pred_region
    _
  $region9: #{decoder_forward.24} parent=0 // pred_fallthru
    _
  // Predicated region
  $region10: #{decoder_forward.24} parent=0 // pred_check
    _
  $region11: #{decoder_forward.24} parent=0 // pred_check_branch
    %17 = sbr.rel (0) target = $region13
  $region12: #{decoder_forward.24} parent=0 // pred_region
    _
  $region13: #{decoder_forward.24} parent=0 // pred_fallthru
    _
  // Predicated region
  $region14: #{decoder_forward.24} parent=0 // pred_check
    _
  $region15: #{decoder_forward.24} parent=0 // pred_check_branch
    %19 = sbr.rel (0) target = $region17
  $region16: #{decoder_forward.24} parent=0 // pred_region
    _
  $region17: #{decoder_forward.24} parent=0 // pred_fallthru
    _
  // Predicated region
  $region18: #{decoder_forward.24} parent=0 // pred_check
    _
  $region19: #{decoder_forward.24} parent=0 // pred_check_branch
    %21 = sbr.rel (0) target = $region21
  $region20: #{decoder_forward.24} parent=0 // pred_region
    _
  $region21: #{decoder_forward.24} parent=0 // pred_fallthru
    _
  // Predicated region
  $region22: #{decoder_forward.24} parent=0 // pred_check
    _
  $region23: #{decoder_forward.24} parent=0 // pred_check_branch
    %23 = sbr.rel (0) target = $region25
  $region24: #{decoder_forward.24} parent=0 // pred_region
    _
  $region25: #{decoder_forward.24} parent=0 // pred_fallthru
    _
  // Predicated region
  $region26: #{decoder_forward.24} parent=0 // pred_check
    _
  $region27: #{decoder_forward.24} parent=0 // pred_check_branch
    %25 = sbr.rel (0) target = $region29
  $region28: #{decoder_forward.24} parent=0 // pred_region
    _
  $region29: #{decoder_forward.24} parent=0 // pred_fallthru
    _
  %p26 = scmp.eq.s32.totalorder 0, 0
  // Predicated region
  $region30: #{decoder_forward.24} parent=0 // pred_check
    %p27 = pneg %p26
  $region31: #{decoder_forward.24} parent=0 // pred_check_branch
    %29 = sbr.rel (%p27) target = $region33
  $region32: #{decoder_forward.24} parent=0 // pred_region
    %v30 = vld [vmem:[%s0] sm:$0xff]
    %v31 = vld [vmem:[%s0 + $0x8] sm:$0xff]
    %v32 = vld [vmem:[%s1] sm:$0x1]
    %v33 = vld [vmem:[%s2] sm:$0x1]
    %vm34 = vcmask 261120
    %v35 = vsel %vm34, %v30, 0.0
    %36 = vadd.xlane.f32.xlu0 %v35
    %v37 = vpop.xlane.xlu0 %36
    %v38 = vsel %vm34, %v31, 0.0
    %39 = vadd.xlane.f32.xlu0 %v38
    %v40 = vpop.xlane.xlu0 %39
    %v41 = vrcp.pop 32.0
    %v42 = vmul.f32 %v37, %v41
    %v43 = vmul.f32 %v40, %v41
    %v44 = vsub.f32 %v30, %v42
    %v45 = vsub.f32 %v31, %v43
    %v46 = vmul.f32 %v44, %v44
    %v47 = vmul.f32 %v45, %v45
    %v48 = vsel %vm34, %v46, 0.0
    %49 = vadd.xlane.f32.xlu0 %v48
    %v50 = vpop.xlane.xlu0 %49
    %v51 = vsel %vm34, %v47, 0.0
    %52 = vadd.xlane.f32.xlu0 %v51
    %v53 = vpop.xlane.xlu0 %52
    %v54 = vmul.f32 %v50, 0.032258064
    %v55 = vmul.f32 %v53, 0.032258064
    %v56 = vrsqrt.pop %v54
    %v57 = vmul.f32 %v54, %v56
    %vm58 = vcmp.eq.f32.partialorder %v54, inf
    %v59 = vsel %vm58, %v54, %v57
    %vm60 = vcmp.eq.f32.partialorder %v54, 0.0
    %v61 = vand.u32 %v54, 2147483648
    %v62 = vsel %vm60, %v61, %v59
    %v63 = vrsqrt.pop %v55
    %v64 = vmul.f32 %v55, %v63
    %vm65 = vcmp.eq.f32.partialorder %v55, inf
    %v66 = vsel %vm65, %v55, %v64
    %vm67 = vcmp.eq.f32.partialorder %v55, 0.0
    %v68 = vand.u32 %v55, 2147483648
    %v69 = vsel %vm67, %v68, %v66
    %v70 = vadd.f32 %v62, 1e-06
    %v71 = vadd.f32 %v69, 1e-06
    %v72 = vrcp.pop %v70
    %v73 = vmul.f32 1.0, %v72
    %v74 = vrcp.pop %v71
    %v75 = vmul.f32 1.0, %v74
    %v76 = vmul.f32 %v44, %v73
    %v77 = vmul.f32 %v45, %v75
    %v79 = vlaneseq
    %v80 = vshrl.u32 %v79, 7
    %v81 = vsub.s32 0, %v80
    %v82 = vrot.slane %v32, %v81
    %v84 = vmul.f32 %v82, %v76
    %v85 = vmul.f32 %v82, %v77
    %v87 = vlaneseq
    %v88 = vshrl.u32 %v87, 7
    %v89 = vsub.s32 0, %v88
    %v90 = vrot.slane %v33, %v89
    %v92 = vadd.f32 %v84, %v90
    %v93 = vadd.f32 %v85, %v90
    %94 = vst.msk [vmem:[#allocation2] sm:$0xff] %vm34, %v92
    %95 = vst.msk [vmem:[#allocation2 + $0x8] sm:$0xff] %vm34, %v93
    %96 = vst.msk [vmem:[#allocation3] sm:$0xff] %vm34, 0.0
    %97 = vst.msk [vmem:[#allocation3 + $0x8] sm:$0xff] %vm34, 0.0
  $region33: #{decoder_forward.24} parent=0 // pred_fallthru
    _
  %v98 = vld [vmem:[#allocation2] sm:$0xff]
  %v99 = vld [vmem:[#allocation2 + $0x8] sm:$0xff]
  %v100 = vld [vmem:[%s3] sm:$0xff]
  %v101 = vld [vmem:[%s3 + $0x8] sm:$0xff]
  %v102 = vld [vmem:[%s3 + $0x10] sm:$0xff]
  %v103 = vld [vmem:[%s3 + $0x18] sm:$0xff]
  %v104 = vld [vmem:[%s4] sm:$0x1]
  %v106 = vlaneseq
  %v107 = vshrl.u32 %v106, 7
  %v108 = vsub.s32 0, %v107
  %v109 = vrot.slane %v104, %v108
  %vm111 = vcmask 261120
  %v113 = vsel %vm111, %v98, 0
  %v116 = vsel %vm111, %v99, 0
  %118 = vmatprep.subr.mxu0 0.0
  %119 = vmatpush1.msra.mxu0 %v100
  %120 = vmatprep.subr.mxu0 0.0
  %121 = vmatpush1.msra.mxu0 %v101
  %122 = vmatprep.subr.mxu0 0.0
  %123 = vmatpush1.msra.mxu0 %v102
  %124 = vmatprep.subr.mxu0 0.0
  %125 = vmatpush1.msra.mxu0 %v103
  %126 = vmatprep.subr.mxu0 0.0
  %127 = vmatpush1.msra.mxu0 0.0
  %128 = vmatprep.subr.mxu0 0.0
  %129 = vmatpush1.msra.mxu0 0.0
  %130 = vmatprep.subr.mxu0 0.0
  %131 = vmatpush1.msra.mxu0 0.0
  %132 = vmatprep.subr.mxu0 0.0
  %133 = vmatpush1.msra.mxu0 0.0
  %134 = vmatprep.subr.mxu0 0.0
  %135 = vmatpush1.msra.mxu0 0.0
  %136 = vmatprep.subr.mxu0 0.0
  %137 = vmatpush1.msra.mxu0 0.0
  %138 = vmatprep.subr.mxu0 0.0
  %139 = vmatpush1.msra.mxu0 0.0
  %140 = vmatprep.subr.mxu0 0.0
  %141 = vmatpush1.msra.mxu0 0.0
  %142 = vmatprep.subr.mxu0 0.0
  %143 = vmatpush1.msra.mxu0 0.0
  %144 = vmatprep.subr.mxu0 0.0
  %145 = vmatpush1.msra.mxu0 0.0
  %146 = vmatprep.subr.mxu0 0.0
  %147 = vmatpush1.msra.mxu0 0.0
  %148 = vmatprep.subr.mxu0 0.0
  %149 = vmatpush1.msra.mxu0 0.0
  %150 = vmatprep.subr.mxu0 0.0
  %151 = vmatpush1.msra.mxu0 0.0
  %152 = vmatprep.subr.mxu0 0.0
  %153 = vmatpush1.msra.mxu0 0.0
  %154 = vmatprep.subr.mxu0 0.0
  %155 = vmatpush1.msra.mxu0 0.0
  %156 = vmatprep.subr.mxu0 0.0
  %157 = vmatpush1.msra.mxu0 0.0
  %158 = vmatprep.subr.mxu0 0.0
  %159 = vmatpush1.msra.mxu0 0.0
  %160 = vmatprep.subr.mxu0 0.0
  %161 = vmatpush1.msra.mxu0 0.0
  %162 = vmatprep.subr.mxu0 0.0
  %163 = vmatpush1.msra.mxu0 0.0
  %164 = vmatprep.subr.mxu0 0.0
  %165 = vmatpush1.msra.mxu0 0.0
  %166 = vmatprep.subr.mxu0 0.0
  %167 = vmatpush1.msra.mxu0 0.0
  %168 = vmatprep.subr.mxu0 0.0
  %169 = vmatpush1.msra.mxu0 0.0
  %170 = vmatprep.subr.mxu0 0.0
  %171 = vmatpush1.msra.mxu0 0.0
  %172 = vmatprep.subr.mxu0 0.0
  %173 = vmatpush1.msra.mxu0 0.0
  %174 = vmatprep.subr.mxu0 0.0
  %175 = vmatpush1.msra.mxu0 0.0
  %176 = vmatprep.subr.mxu0 0.0
  %177 = vmatpush1.msra.mxu0 0.0
  %178 = vmatprep.subr.mxu0 0.0
  %179 = vmatpush1.msra.mxu0 0.0
  %180 = vmatprep.subr.mxu0 0.0
  %181 = vmatpush1.msra.mxu0 0.0
  %182 = vmatprep.mubr.f32.mxu0 0.0
  %183 = vmatmul.mubr.f32.gmra.mrb[0].mxu0 %v113
  %v184 = vpop.f32.mrb[0].mxu0
  %v185 = vadd.f32 %v109, %v184
  %v186 = vpop.f32.mrb[0].mxu0
  %187 = vmatprep.mubr.f32.mxu0 0.0
  %188 = vmatmul.mubr.f32.gmra.mrb[0].mxu0 %v116
  %v189 = vpop.f32.mrb[0].mxu0
  %v190 = vadd.f32 %v109, %v189
  %v191 = vpop.f32.mrb[0].mxu0
  %192 = vdwg.mxu0
  %v193 = vmax.f32 %v185, 0.0
  %v194 = vmax.f32 %v190, 0.0
  %v195 = vld [vmem:[#allocation3] sm:$0xff]
  %v196 = vld [vmem:[#allocation3 + $0x8] sm:$0xff]
  %v197 = vld [vmem:[%s5] sm:$0xff]
  %v198 = vld [vmem:[%s5 + $0x8] sm:$0xff]
  %v199 = vld [vmem:[%s5 + $0x10] sm:$0xff]
  %v200 = vld [vmem:[%s5 + $0x18] sm:$0xff]
  %v201 = vld [vmem:[%s5 + $0x20] sm:$0xff]
  %v202 = vld [vmem:[%s5 + $0x28] sm:$0xff]
  %v203 = vld [vmem:[%s5 + $0x30] sm:$0xff]
  %v204 = vld [vmem:[%s5 + $0x38] sm:$0xff]
  %vm205 = vcmask 523264
  %v207 = vsel %vm205, %v193, 0
  %v210 = vsel %vm205, %v194, 0
  %212 = vmatprep.subr.mxu0 0.0
  %213 = vmatpush1.msra.mxu0 %v197
  %214 = vmatprep.subr.mxu0 0.0
  %215 = vmatpush1.msra.mxu0 %v198
  %216 = vmatprep.subr.mxu0 0.0
  %217 = vmatpush1.msra.mxu0 %v199
  %218 = vmatprep.subr.mxu0 0.0
  %219 = vmatpush1.msra.mxu0 %v200
  %220 = vmatprep.subr.mxu0 0.0
  %221 = vmatpush1.msra.mxu0 %v201
  %222 = vmatprep.subr.mxu0 0.0
  %223 = vmatpush1.msra.mxu0 %v202
  %224 = vmatprep.subr.mxu0 0.0
  %225 = vmatpush1.msra.mxu0 %v203
  %226 = vmatprep.subr.mxu0 0.0
  %227 = vmatpush1.msra.mxu0 %v204
  %228 = vmatprep.subr.mxu0 0.0
  %229 = vmatpush1.msra.mxu0 0.0
  %230 = vmatprep.subr.mxu0 0.0
  %231 = vmatpush1.msra.mxu0 0.0
  %232 = vmatprep.subr.mxu0 0.0
  %233 = vmatpush1.msra.mxu0 0.0
  %234 = vmatprep.subr.mxu0 0.0
  %235 = vmatpush1.msra.mxu0 0.0
  %236 = vmatprep.subr.mxu0 0.0
  %237 = vmatpush1.msra.mxu0 0.0
  %238 = vmatprep.subr.mxu0 0.0
  %239 = vmatpush1.msra.mxu0 0.0
  %240 = vmatprep.subr.mxu0 0.0
  %241 = vmatpush1.msra.mxu0 0.0
  %242 = vmatprep.subr.mxu0 0.0
  %243 = vmatpush1.msra.mxu0 0.0
  %244 = vmatprep.subr.mxu0 0.0
  %245 = vmatpush1.msra.mxu0 0.0
  %246 = vmatprep.subr.mxu0 0.0
  %247 = vmatpush1.msra.mxu0 0.0
  %248 = vmatprep.subr.mxu0 0.0
  %249 = vmatpush1.msra.mxu0 0.0
  %250 = vmatprep.subr.mxu0 0.0
  %251 = vmatpush1.msra.mxu0 0.0
  %252 = vmatprep.subr.mxu0 0.0
  %253 = vmatpush1.msra.mxu0 0.0
  %254 = vmatprep.subr.mxu0 0.0
  %255 = vmatpush1.msra.mxu0 0.0
  %256 = vmatprep.subr.mxu0 0.0
  %257 = vmatpush1.msra.mxu0 0.0
  %258 = vmatprep.subr.mxu0 0.0
  %259 = vmatpush1.msra.mxu0 0.0
  %260 = vmatprep.subr.mxu0 0.0
  %261 = vmatpush1.msra.mxu0 0.0
  %262 = vmatprep.subr.mxu0 0.0
  %263 = vmatpush1.msra.mxu0 0.0
  %264 = vmatprep.subr.mxu0 0.0
  %265 = vmatpush1.msra.mxu0 0.0
  %266 = vmatprep.subr.mxu0 0.0
  %267 = vmatpush1.msra.mxu0 0.0
  %268 = vmatprep.subr.mxu0 0.0
  %269 = vmatpush1.msra.mxu0 0.0
  %270 = vmatprep.subr.mxu0 0.0
  %271 = vmatpush1.msra.mxu0 0.0
  %272 = vmatprep.subr.mxu0 0.0
  %273 = vmatpush1.msra.mxu0 0.0
  %274 = vmatprep.subr.mxu0 0.0
  %275 = vmatpush1.msra.mxu0 0.0
  %276 = vmatprep.mubr.f32.mxu0 0.0
  %277 = vmatmul.mubr.f32.gmra.mrb[0].mxu0 %v207
  %v278 = vpop.f32.mrb[0].mxu0
  %v279 = vadd.f32 0.0, %v278
  %v280 = vpop.f32.mrb[0].mxu0
  %281 = vmatprep.mubr.f32.mxu0 0.0
  %282 = vmatmul.mubr.f32.gmra.mrb[0].mxu0 %v210
  %v283 = vpop.f32.mrb[0].mxu0
  %v284 = vadd.f32 0.0, %v283
  %v285 = vpop.f32.mrb[0].mxu0
  %286 = vdwg.mxu0
  %v287 = vadd.f32 %v195, %v279
  %v288 = vadd.f32 %v196, %v284
  %289 = vst.msk [vmem:[#allocation3] sm:$0xff] %vm111, %v287
  %290 = vst.msk [vmem:[#allocation3 + $0x8] sm:$0xff] %vm111, %v288
  // Predicated region
  $region34: #{decoder_forward.24} parent=0 // pred_check
    %p291 = pneg %p26
  $region35: #{decoder_forward.24} parent=0 // pred_check_branch
    %293 = sbr.rel (%p291) target = $region37
  $region36: #{decoder_forward.24} parent=0 // pred_region
    %v294 = vld [vmem:[#allocation3] sm:$0xff]
    %v295 = vld [vmem:[#allocation3 + $0x8] sm:$0xff]
    %v296 = vld [vmem:[%s6] sm:$0x1]
    %v298 = vlaneseq
    %v299 = vshrl.u32 %v298, 7
    %v300 = vsub.s32 0, %v299
    %v301 = vrot.slane %v296, %v300
    %v303 = vadd.f32 %v294, %v301
    %v304 = vadd.f32 %v295, %v301
    %v305 = vld [vmem:[%s0] sm:$0xff]
    %v306 = vld [vmem:[%s0 + $0x8] sm:$0xff]
    %v307 = vadd.f32 %v303, %v305
    %v308 = vadd.f32 %v304, %v306
    %309 = vst.msk [vmem:[%s7] sm:$0xff] %vm111, %v307
    %310 = vst.msk [vmem:[%s7 + $0x8] sm:$0xff] %vm111, %v308
  $region37: #{decoder_forward.24} parent=0 // pred_fallthru
    _
  // Predicated region
  $region38: #{decoder_forward.24} parent=0 // pred_check
    _
  $region39: #{decoder_forward.24} parent=0 // pred_check_branch
    %312 = sbr.rel (0) target = $region41
  $region40: #{decoder_forward.24} parent=0 // pred_region
    _
  $region41: #{decoder_forward.24} parent=0 // pred_fallthru
    _
  // Predicated region
  $region42: #{decoder_forward.24} parent=0 // pred_check
    _
  $region43: #{decoder_forward.24} parent=0 // pred_check_branch
    %314 = sbr.rel (0) target = $region45
  $region44: #{decoder_forward.24} parent=0 // pred_region
    _
  $region45: #{decoder_forward.24} parent=0 // pred_fallthru
    _

</llo_original>
